<compile_context>
chip_gen: v7x
topology: tpu7x:2x2x1
jax: 0.10.0
libtpu: 0.0.40
codegen_flags: <defaults>
</compile_context>

<pallas_src>
import functools
import math

import jax
import jax.numpy as jnp
from jax import lax
from jax.experimental import pallas as pl
from jax.experimental.pallas import tpu as pltpu


# ----------------------------------------------------------------------------
# Patch embedding: Conv2d(in_chans, d_model, k=patch, stride=patch) + bias,
# expressed as one (B*2*Np, C*p*p) @ (C*p*p, d_model) matmul (rgb & t fused).
# ----------------------------------------------------------------------------
def _patch_embed_kernel(p_ref, w_ref, b_ref, o_ref):
    o_ref[...] = (jnp.dot(p_ref[...], w_ref[...],
                          preferred_element_type=jnp.float32)
                  + b_ref[...]).astype(o_ref.dtype)


def patch_embed_tokens(rgb, t, w_flat, bias, patch):
    """PatchEmbed on rgb and t; returns fused tokens (B, 2*Np, E) with rgb
    tokens first (== torch.cat((rgb_token, t_token), 1))."""
    B, C, H, W = rgb.shape
    Hp, Wp = H // patch, W // patch
    Np = Hp * Wp
    K = C * patch * patch
    E = w_flat.shape[1]
    M = B * 2 * Np

    # Tokens laid out (b, source, i, j) so the kernel output reshapes directly
    # to (B, 2*Np, E) -- no input concat / output split+concat HBM passes.
    x2 = jnp.stack([rgb, t], axis=1)                               # (B, 2, C, H, W)
    p = x2.reshape(B, 2, C, Hp, patch, Wp, patch)
    p = jnp.transpose(p, (0, 1, 3, 5, 2, 4, 6)).reshape(M, K)
    p = p.astype(jnp.bfloat16)                                     # bf16 MXU operand

    tm = M if M <= 512 else 256
    out = pl.pallas_call(
        _patch_embed_kernel,
        out_shape=jax.ShapeDtypeStruct((M, E), rgb.dtype),
        grid=(pl.cdiv(M, tm),),
        in_specs=[
            pl.BlockSpec((tm, K), lambda i: (i, 0)),
            pl.BlockSpec((K, E), lambda i: (0, 0)),
            pl.BlockSpec((1, E), lambda i: (0, 0)),
        ],
        out_specs=pl.BlockSpec((tm, E), lambda i: (i, 0)),
        compiler_params=pltpu.CompilerParams(
            dimension_semantics=("parallel",)),
    )(p, w_flat, bias)
    return out.reshape(B, 2 * Np, E)


# ----------------------------------------------------------------------------
# Mamba stack: grid = (batch_blocks, layer).  Residual stream lives in VMEM
# across the layer axis; per-layer weights (stacked on a leading layer axis)
# are pipelined by BlockSpec and loaded once per batch block.
# ----------------------------------------------------------------------------
_SCAN_CHUNK = 8   # timesteps per scan chunk (sublane-aligned y stores)


def _silu(v):
    return v / (1.0 + jnp.exp(-v))


def _softplus(v):
    return jnp.maximum(v, 0.0) + jnp.log(1.0 + jnp.exp(-jnp.abs(v)))


def _mamba_stack_kernel(x_ref, rmsw_ref, win_ref, convw_ref, convb_ref,
                        wx_ref, bdt_ref, at_ref, dpar_ref, wout_ref,
                        o_ref,
                        resid_sc, delta_sc, dx_sc, bc_sc, y_sc,
                        *, seq_len):
    l = pl.program_id(1)
    n_layers = pl.num_programs(1)

    M, D = x_ref.shape                    # M = Bb * seq_len (flattened tokens)
    ED = convb_ref.shape[-1]
    N = at_ref.shape[0]
    Kc = convw_ref.shape[0]
    L = seq_len
    Bb = M // L
    CH = _SCAN_CHUNK

    # --- residual stream, resident in VMEM across the layer axis
    @pl.when(l == 0)
    def _():
        resid_sc[...] = x_ref[...].astype(jnp.float32)

    x = resid_sc[...]                                              # (M, D) f32

    # --- RMSNorm (eps = 1e-5, learned weight), kept in f32
    ms = jnp.mean(x * x, axis=-1, keepdims=True)
    xn = x * lax.rsqrt(ms + 1e-5) * rmsw_ref[...]

    # --- fused in_proj (bias-free Linear), bf16 MXU, f32 accum.  cols = [x | z]
    xz = jnp.dot(xn.astype(jnp.bfloat16), win_ref[...],
                 preferred_element_type=jnp.float32)               # (M, 2*ED)
    xb = xz[:, :ED]
    z = xz[:, ED:]

    # --- depthwise causal conv1d along the sequence (each sequence is L rows
    #     of the flattened M rows) via shifted copies + causal masks.
    row = lax.broadcasted_iota(jnp.int32, (M, 1), 0)
    pos = row                                                      # pos = row % L
    for b in range(1, Bb):
        pos = pos - jnp.where(row >= b * L, L, 0)
    convw = convw_ref[...]                                         # (Kc, ED) f32
    acc = xb * convw[Kc - 1:Kc, :]                                 # shift-0 tap
    for k in range(Kc - 1):                                        # static unroll
        s = Kc - 1 - k                                             # shift of tap k
        shifted = jnp.concatenate(
            [jnp.zeros((s, ED), jnp.float32), xb[:M - s, :]], axis=0)
        acc = acc + jnp.where(pos >= s, shifted, 0.0) * convw[k:k + 1, :]
    xc = _silu(acc + convb_ref[...])                               # (M, ED) f32

    # --- fused x_proj (+ folded dt_proj): columns = [delta_pre(ED) | B(N) | C(N)]
    proj = jnp.dot(xc.astype(jnp.bfloat16), wx_ref[...],
                   preferred_element_type=jnp.float32)             # (M, ED + 2N)
    delta = _softplus(proj[:, :ED] + bdt_ref[...])                 # (M, ED) f32

    delta_sc[...] = delta
    dx_sc[...] = delta * xc
    bc_sc[...] = proj[:, ED:ED + 2 * N]                            # [B | C]

    A_T = at_ref[...]                                              # (N, ED) = -exp(A_log)

    # --- chunked selective scan: CH timesteps per chunk; dA/dBx built per
    #     chunk in registers; one aligned (CH, ED) y store per chunk.
    def make_chunk_body(base):
        def chunk_body(c, h):
            r0 = pl.multiple_of(base + c * CH, CH)
            d_c = delta_sc[pl.ds(r0, CH), :]                       # (CH, ED)
            dx_c = dx_sc[pl.ds(r0, CH), :]                         # (CH, ED)
            bc_c = bc_sc[pl.ds(r0, CH), :]                         # (CH, 2N)
            b_c = bc_c[:, :N]
            c_c = bc_c[:, N:2 * N]
            dA_c = jnp.exp(d_c[:, None, :] * A_T[None, :, :])      # (CH, N, ED)
            dBx_c = dx_c[:, None, :] * b_c[:, :, None]             # (CH, N, ED)
            hs = []
            for k in range(CH):                                    # static unroll
                h = dA_c[k] * h + dBx_c[k]
                hs.append(h[None])
            h_stack = jnp.concatenate(hs, axis=0)                  # (CH, N, ED)
            y_tile = jnp.sum(h_stack * c_c[:, :, None], axis=1)    # (CH, ED)
            y_sc[pl.ds(r0, CH), :] = y_tile
            return h
        return chunk_body

    for b in range(Bb):                                            # static over sequences
        lax.fori_loop(0, L // CH, make_chunk_body(b * L),
                      jnp.zeros((N, ED), jnp.float32))

    y = y_sc[...] + dpar_ref[...] * xc                             # (M, ED)

    out = jnp.dot((y * _silu(z)).astype(jnp.bfloat16), wout_ref[...],
                  preferred_element_type=jnp.float32)              # (M, D)
    resid_sc[...] = resid_sc[...] + out

    @pl.when(l == n_layers - 1)
    def _():
        o_ref[...] = resid_sc[...].astype(o_ref.dtype)


def mamba_stack(x, params, batch_block=None):
    B, L, D = x.shape
    n_layer = params['w_in'].shape[0]
    ED = params['conv_b'].shape[-1]
    Nst = params['A_T'].shape[1]
    Kc = params['conv_w'].shape[1]

    assert L % _SCAN_CHUNK == 0, "token count must be a multiple of the scan chunk"
    # TODO(synk): support a ragged tail chunk for L not divisible by 8.

    if batch_block is None:
        batch_block = B
        while batch_block > 1 and (B % batch_block != 0
                                   or batch_block * L > 4096):
            batch_block -= 1
    Bb = batch_block
    assert B % Bb == 0
    M = Bb * L

    def wspec(shape):
        nd = len(shape)
        return pl.BlockSpec((None,) + tuple(shape),
                            lambda i, l: (l,) + (0,) * nd)

    kern = functools.partial(_mamba_stack_kernel, seq_len=L)
    out = pl.pallas_call(
        kern,
        out_shape=jax.ShapeDtypeStruct((B * L, D), x.dtype),
        grid=(B // Bb, n_layer),
        in_specs=[
            pl.BlockSpec((M, D), lambda i, l: (i, 0)),             # tokens
            wspec((1, D)),                                         # rms weight
            wspec((D, 2 * ED)),                                    # in_proj [x|z]
            wspec((Kc, ED)),                                       # conv w
            wspec((1, ED)),                                        # conv b
            wspec((ED, ED + 2 * Nst)),                             # x_proj [dt|B|C]
            wspec((1, ED)),                                        # dt bias
            wspec((Nst, ED)),                                      # A_T = -exp(A_log)
            wspec((1, ED)),                                        # D
            wspec((ED, D)),                                        # out_proj
        ],
        out_specs=pl.BlockSpec((M, D), lambda i, l: (i, 0)),
        scratch_shapes=[
            pltpu.VMEM((M, D), jnp.float32),                       # residual stream
            pltpu.VMEM((M, ED), jnp.float32),                      # delta
            pltpu.VMEM((M, ED), jnp.float32),                      # delta * x_conv
            pltpu.VMEM((M, 2 * Nst), jnp.float32),                 # [B | C]
            pltpu.VMEM((M, ED), jnp.float32),                      # y (scan output)
        ],
        compiler_params=pltpu.CompilerParams(
            dimension_semantics=("parallel", "arbitrary"),
            vmem_limit_bytes=64 * 1024 * 1024),
    )(x.reshape(B * L, D), params['rms_w'], params['w_in'],
      params['conv_w'], params['conv_b'], params['w_x'], params['b_dt'],
      params['A_T'], params['D_par'], params['w_out'])
    return out.reshape(B, L, D)


# ----------------------------------------------------------------------------
# Parameter construction (deterministic, synthetic; weights stacked per layer)
# ----------------------------------------------------------------------------
def init_params(key, ch, patch, d_model, n_layer, d_state, d_conv=4, expand=2):
    ED = expand * d_model
    R = math.ceil(d_model / 16)                 # dt_rank = ceil(d_model / 16)
    K = ch * patch * patch

    def nrm(k, shape, scale=0.02):
        return (scale * jax.random.normal(k, shape)).astype(jnp.float32)

    keys = jax.random.split(key, 3)
    lk = jax.random.split(keys[2], 8)

    # Mamba A init: A[e, n] = n+1 ; stored pre-negated/exponentiated, transposed.
    A_T = -(jnp.arange(1, d_state + 1, dtype=jnp.float32)[None, :, None]
            * jnp.ones((n_layer, 1, ED), jnp.float32))              # (nl, N, ED)

    # Fold dt_proj weight into x_proj: columns = [delta_pre(ED) | B(N) | C(N)].
    w_x_bcdt = nrm(lk[3], (n_layer, ED, 2 * d_state + R))
    w_dt = nrm(lk[4], (n_layer, R, ED))
    w_dt_folded = jnp.einsum('ler,lrd->led', w_x_bcdt[:, :, 2 * d_state:], w_dt)
    w_x_full = jnp.concatenate([w_dt_folded, w_x_bcdt[:, :, :2 * d_state]],
                               axis=-1)                              # (nl, ED, ED+2N)

    return {
        'pe_w': nrm(keys[0], (K, d_model)).astype(jnp.bfloat16),
        'pe_b': nrm(keys[1], (1, d_model)),
        'rms_w': jnp.ones((n_layer, 1, d_model), jnp.float32),
        'w_in': nrm(lk[0], (n_layer, d_model, 2 * ED)).astype(jnp.bfloat16),
        'conv_w': nrm(lk[1], (n_layer, d_conv, ED), 0.1),
        'conv_b': nrm(lk[2], (n_layer, 1, ED), 0.1),
        'w_x': w_x_full.astype(jnp.bfloat16),
        'b_dt': nrm(lk[5], (n_layer, 1, ED), 0.1) + 0.5,
        'A_T': A_T,
        'D_par': jnp.ones((n_layer, 1, ED), jnp.float32),
        'w_out': nrm(lk[6], (n_layer, ED, d_model)).astype(jnp.bfloat16),
    }


# ----------------------------------------------------------------------------
# fuse_block_Mamba.forward
# ----------------------------------------------------------------------------
def fuse_block_mamba_forward(params, rgb, t, patch):
    B, C, H, W = rgb.shape
    assert H == W, f'Input feature size H:{H}!=W:{W}!'
    fuse = patch_embed_tokens(rgb, t, params['pe_w'], params['pe_b'], patch)
    x = mamba_stack(fuse, params)                                  # (B, 2*Np, D)
    d_model = x.shape[-1]
    # The reference reshape is only semantically valid when this holds.
    assert d_model == C * patch * patch, (
        "final reshape requires d_model == in_chans * patch_size**2")
    # Matches torch: unsqueeze(3) -> transpose(0,3) -> reshape(B*2, C, H, W)
    fo = x[:, :, :, None]                                          # (B, 2N, D, 1)
    fo = jnp.swapaxes(fo, 0, 3)                                    # (1, 2N, D, B)
    fo = fo.reshape(B * 2, C, H, W)
    return fo[:B], fo[B:]


if __name__ == "__main__":
    B, C, H, W = 2, 4, 16, 16
    patch = 4
    # The final reshape in the reference forward requires d_model == C * patch**2.
    d_model = C * patch * patch        # 64
    n_layer = 2
    d_state = 16

    key = jax.random.PRNGKey(0)
    kp, kr, kt = jax.random.split(key, 3)
    params = init_params(kp, C, patch, d_model, n_layer, d_state)
    rgb = jax.random.normal(kr, (B, C, H, W), jnp.float32)
    t = jax.random.normal(kt, (B, C, H, W), jnp.float32)

    fwd = jax.jit(functools.partial(fuse_block_mamba_forward, patch=patch))
    out_rgb, out_t = fwd(params, rgb, t)
    jax.block_until_ready((out_rgb, out_t))
    assert out_rgb.shape == (B, C, H, W) and out_t.shape == (B, C, H, W)
    assert bool(jnp.all(jnp.isfinite(out_rgb))) and bool(jnp.all(jnp.isfinite(out_t)))
    print("KERNEL_OK")
</pallas_src>

<mosaic_0001>
module attributes {stable_mosaic.version = 11 : i64} {
  func.func @_patch_embed_kernel(%arg0: i32, %arg1: memref<64x64xbf16, #tpu.memory_space<vmem>>, %arg2: memref<64x64xbf16, #tpu.memory_space<vmem>>, %arg3: memref<1x64xf32, #tpu.memory_space<vmem>>, %arg4: memref<64x64xf32, #tpu.memory_space<vmem>>) attributes {dimension_semantics = [#tpu.dimension_semantics<parallel>], iteration_bounds = array<i64: 1>, scalar_prefetch = 0 : i64, scratch_operands = 0 : i64, tpu.core_type = #tpu.core_type<tc>, window_params = [{transform_indices = @transform_0, window_bounds = array<i64: 64, 64>}, {pipeline_mode = #tpu.pipeline_mode<synchronous>, transform_indices = @transform_1, window_bounds = array<i64: 64, 64>}, {pipeline_mode = #tpu.pipeline_mode<synchronous>, transform_indices = @transform_2, window_bounds = array<i64: 1, 64>}, {transform_indices = @transform_3, window_bounds = array<i64: 64, 64>}]} {
    %c0 = arith.constant 0 : index
    %c0_0 = arith.constant 0 : index
    %0 = vector.load %arg1[%c0, %c0_0] : memref<64x64xbf16, #tpu.memory_space<vmem>>, vector<64x64xbf16>
    %c0_1 = arith.constant 0 : index
    %c0_2 = arith.constant 0 : index
    %1 = vector.load %arg2[%c0_1, %c0_2] : memref<64x64xbf16, #tpu.memory_space<vmem>>, vector<64x64xbf16>
    %cst = arith.constant dense<0.000000e+00> : vector<64x64xf32>
    %2 = tpu.matmul %0, %1, %cst {dimension_numbers = #tpu.dot_dimension_numbers<[1], [0], [0], [1], [0, 0, 1, 1], [], []>} : vector<64x64xbf16>, vector<64x64xbf16>, vector<64x64xf32> -> vector<64x64xf32>
    %c0_3 = arith.constant 0 : index
    %c0_4 = arith.constant 0 : index
    %3 = vector.load %arg3[%c0_3, %c0_4] : memref<1x64xf32, #tpu.memory_space<vmem>>, vector<1x64xf32>
    %4 = vector.broadcast %3 : vector<1x64xf32> to vector<64x64xf32>
    %5 = arith.addf %2, %4 : vector<64x64xf32>
    %c0_5 = arith.constant 0 : index
    %c0_6 = arith.constant 0 : index
    %6 = vector.load %arg4[%c0_5, %c0_6] : memref<64x64xf32, #tpu.memory_space<vmem>>, vector<64x64xf32>
    tpu.vector_store %arg4[%c0_5, %c0_6], %5 {strides = array<i32>} : memref<64x64xf32, #tpu.memory_space<vmem>>, vector<64x64xf32>,
    return
  }
  func.func @transform_0(%arg0: i32) -> (i32, i32) {
    %c0_i32 = arith.constant 0 : i32
    %c0_i32_0 = arith.constant 0 : i32
    return %arg0, %c0_i32 : i32, i32
  }
  func.func @transform_1(%arg0: i32) -> (i32, i32) {
    %c0_i32 = arith.constant 0 : i32
    %c0_i32_0 = arith.constant 0 : i32
    %c0_i32_1 = arith.constant 0 : i32
    return %c0_i32, %c0_i32_0 : i32, i32
  }
  func.func @transform_2(%arg0: i32) -> (i32, i32) {
    %c0_i32 = arith.constant 0 : i32
    %c0_i32_0 = arith.constant 0 : i32
    %c0_i32_1 = arith.constant 0 : i32
    return %c0_i32, %c0_i32_0 : i32, i32
  }
  func.func @transform_3(%arg0: i32) -> (i32, i32) {
    %c0_i32 = arith.constant 0 : i32
    %c0_i32_0 = arith.constant 0 : i32
    return %arg0, %c0_i32 : i32, i32
  }
}

module attributes {stable_mosaic.version = 11 : i64} {
  func.func @_mamba_stack_kernel(%arg0: i32, %arg1: i32, %arg2: memref<64x64xf32, #tpu.memory_space<vmem>>, %arg3: memref<1x1x64xf32, #tpu.memory_space<vmem>>, %arg4: memref<1x64x256xbf16, #tpu.memory_space<vmem>>, %arg5: memref<1x4x128xf32, #tpu.memory_space<vmem>>, %arg6: memref<1x1x128xf32, #tpu.memory_space<vmem>>, %arg7: memref<1x128x160xbf16, #tpu.memory_space<vmem>>, %arg8: memref<1x1x128xf32, #tpu.memory_space<vmem>>, %arg9: memref<1x16x128xf32, #tpu.memory_space<vmem>>, %arg10: memref<1x1x128xf32, #tpu.memory_space<vmem>>, %arg11: memref<1x128x64xbf16, #tpu.memory_space<vmem>>, %arg12: memref<64x64xf32, #tpu.memory_space<vmem>>, %arg13: memref<64x64xf32, #tpu.memory_space<vmem>>, %arg14: memref<64x128xf32, #tpu.memory_space<vmem>>, %arg15: memref<64x128xf32, #tpu.memory_space<vmem>>, %arg16: memref<64x32xf32, #tpu.memory_space<vmem>>, %arg17: memref<64x128xf32, #tpu.memory_space<vmem>>) attributes {dimension_semantics = [#tpu.dimension_semantics<parallel>, #tpu.dimension_semantics<arbitrary>], iteration_bounds = array<i64: 1, 2>, scalar_prefetch = 0 : i64, scratch_operands = 5 : i64, tpu.core_type = #tpu.core_type<tc>, window_params = [{transform_indices = @transform_0, window_bounds = array<i64: 64, 64>}, {transform_indices = @transform_1, window_bounds = array<i64: 1, 1, 64>}, {transform_indices = @transform_2, window_bounds = array<i64: 1, 64, 256>}, {transform_indices = @transform_3, window_bounds = array<i64: 1, 4, 128>}, {transform_indices = @transform_4, window_bounds = array<i64: 1, 1, 128>}, {transform_indices = @transform_5, window_bounds = array<i64: 1, 128, 160>}, {transform_indices = @transform_6, window_bounds = array<i64: 1, 1, 128>}, {transform_indices = @transform_7, window_bounds = array<i64: 1, 16, 128>}, {transform_indices = @transform_8, window_bounds = array<i64: 1, 1, 128>}, {transform_indices = @transform_9, window_bounds = array<i64: 1, 128, 64>}, {transform_indices = @transform_10, window_bounds = array<i64: 64, 64>}]} {
    %c0_i32 = arith.constant 0 : i32
    %0 = arith.cmpi eq, %arg1, %c0_i32 : i32
    %1 = arith.extui %0 : i1 to i32
    %c0_i32_0 = arith.constant 0 : i32
    %2 = arith.cmpi ne, %1, %c0_i32_0 : i32
    scf.if %2 {
      %c0_72 = arith.constant 0 : index
      %c0_73 = arith.constant 0 : index
      %140 = vector.load %arg2[%c0_72, %c0_73] : memref<64x64xf32, #tpu.memory_space<vmem>>, vector<64x64xf32>
      %c0_74 = arith.constant 0 : index
      %c0_75 = arith.constant 0 : index
      %141 = vector.load %arg13[%c0_74, %c0_75] : memref<64x64xf32, #tpu.memory_space<vmem>>, vector<64x64xf32>
      tpu.vector_store %arg13[%c0_74, %c0_75], %140 {strides = array<i32>} : memref<64x64xf32, #tpu.memory_space<vmem>>, vector<64x64xf32>,
    } else {
    }
    %c0 = arith.constant 0 : index
    %c0_1 = arith.constant 0 : index
    %3 = vector.load %arg13[%c0, %c0_1] : memref<64x64xf32, #tpu.memory_space<vmem>>, vector<64x64xf32>
    %4 = arith.mulf %3, %3 : vector<64x64xf32>
    %cst = arith.constant dense<0.000000e+00> : vector<64xf32>
    %5 = vector.multi_reduction <add>, %4, %cst [1] : vector<64x64xf32> to vector<64xf32>
    %6 = vector.shape_cast %5 : vector<64xf32> to vector<64x1xf32>
    %cst_2 = arith.constant 6.400000e+01 : f32
    %7 = vector.broadcast %cst_2 : f32 to vector<64x1xf32>
    %8 = arith.divf %6, %7 : vector<64x1xf32>
    %cst_3 = arith.constant 9.99999974E-6 : f32
    %9 = vector.broadcast %cst_3 : f32 to vector<64x1xf32>
    %10 = arith.addf %8, %9 : vector<64x1xf32>
    %11 = math.rsqrt %10 : vector<64x1xf32>
    %12 = vector.broadcast %11 : vector<64x1xf32> to vector<64x64xf32>
    %13 = arith.mulf %3, %12 : vector<64x64xf32>
    %c0_4 = arith.constant 0 : index
    %c0_5 = arith.constant 0 : index
    %c0_6 = arith.constant 0 : index
    %14 = vector.load %arg3[%c0_4, %c0_5, %c0_6] : memref<1x1x64xf32, #tpu.memory_space<vmem>>, vector<1x1x64xf32>
    %15 = vector.shape_cast %14 : vector<1x1x64xf32> to vector<1x64xf32>
    %16 = vector.broadcast %15 : vector<1x64xf32> to vector<64x64xf32>
    %17 = arith.mulf %13, %16 : vector<64x64xf32>
    %18 = arith.truncf %17 : vector<64x64xf32> to vector<64x64xbf16>
    %c0_7 = arith.constant 0 : index
    %c0_8 = arith.constant 0 : index
    %c0_9 = arith.constant 0 : index
    %19 = vector.load %arg4[%c0_7, %c0_8, %c0_9] : memref<1x64x256xbf16, #tpu.memory_space<vmem>>, vector<1x64x256xbf16>
    %20 = vector.shape_cast %19 : vector<1x64x256xbf16> to vector<64x256xbf16>
    %cst_10 = arith.constant dense<0.000000e+00> : vector<64x256xf32>
    %21 = tpu.matmul %18, %20, %cst_10 {dimension_numbers = #tpu.dot_dimension_numbers<[1], [0], [0], [1], [0, 0, 1, 1], [], []>} : vector<64x64xbf16>, vector<64x256xbf16>, vector<64x256xf32> -> vector<64x256xf32>
    %22 = vector.extract_strided_slice %21 {offsets = [0, 0], sizes = [64, 128], strides = [1, 1]} : vector<64x256xf32> to vector<64x128xf32>
    %23 = vector.extract_strided_slice %21 {offsets = [0, 128], sizes = [64, 128], strides = [1, 1]} : vector<64x256xf32> to vector<64x128xf32>
    %24 = tpu.iota {dimensions = array<i32: 0>} : vector<64x1xi32>
    %c32_i32 = arith.constant 32 : i32
    %25 = vector.broadcast %c32_i32 : i32 to vector<64x1xi32>
    %26 = arith.cmpi sge, %24, %25 : vector<64x1xi32>
    %c32_i32_11 = arith.constant 32 : i32
    %c0_i32_12 = arith.constant 0 : i32
    %27 = vector.broadcast %c32_i32_11 : i32 to vector<64x1xi32>
    %28 = vector.broadcast %c0_i32_12 : i32 to vector<64x1xi32>
    %29 = arith.select %26, %27, %28 : vector<64x1xi1>, vector<64x1xi32>
    %30 = arith.subi %24, %29 : vector<64x1xi32>
    %c0_13 = arith.constant 0 : index
    %c0_14 = arith.constant 0 : index
    %c0_15 = arith.constant 0 : index
    %31 = vector.load %arg5[%c0_13, %c0_14, %c0_15] : memref<1x4x128xf32, #tpu.memory_space<vmem>>, vector<1x4x128xf32>
    %32 = vector.shape_cast %31 : vector<1x4x128xf32> to vector<4x128xf32>
    %33 = vector.extract_strided_slice %32 {offsets = [3, 0], sizes = [1, 128], strides = [1, 1]} : vector<4x128xf32> to vector<1x128xf32>
    %34 = vector.broadcast %33 : vector<1x128xf32> to vector<64x128xf32>
    %35 = arith.mulf %22, %34 : vector<64x128xf32>
    %cst_16 = arith.constant 0.000000e+00 : f32
    %36 = vector.broadcast %cst_16 : f32 to vector<3x128xf32>
    %37 = vector.extract_strided_slice %22 {offsets = [0, 0], sizes = [61, 128], strides = [1, 1]} : vector<64x128xf32> to vector<61x128xf32>
    %38 = tpu.concatenate %36, %37 in 0 : vector<3x128xf32>, vector<61x128xf32> -> vector<64x128xf32>
    %c3_i32 = arith.constant 3 : i32
    %39 = vector.broadcast %c3_i32 : i32 to vector<64x1xi32>
    %40 = arith.cmpi sge, %30, %39 : vector<64x1xi32>
    %cst_17 = arith.constant 0.000000e+00 : f32
    %41 = vector.shape_cast %40 : vector<64x1xi1> to vector<64x1xi1>
    %42 = vector.broadcast %41 : vector<64x1xi1> to vector<64x128xi1>
    %43 = vector.broadcast %cst_17 : f32 to vector<64x128xf32>
    %44 = arith.select %42, %38, %43 : vector<64x128xi1>, vector<64x128xf32>
    %45 = vector.extract_strided_slice %32 {offsets = [0, 0], sizes = [1, 128], strides = [1, 1]} : vector<4x128xf32> to vector<1x128xf32>
    %46 = vector.broadcast %45 : vector<1x128xf32> to vector<64x128xf32>
    %47 = arith.mulf %44, %46 : vector<64x128xf32>
    %48 = arith.addf %35, %47 : vector<64x128xf32>
    %cst_18 = arith.constant 0.000000e+00 : f32
    %49 = vector.broadcast %cst_18 : f32 to vector<2x128xf32>
    %50 = vector.extract_strided_slice %22 {offsets = [0, 0], sizes = [62, 128], strides = [1, 1]} : vector<64x128xf32> to vector<62x128xf32>
    %51 = tpu.concatenate %49, %50 in 0 : vector<2x128xf32>, vector<62x128xf32> -> vector<64x128xf32>
    %c2_i32 = arith.constant 2 : i32
    %52 = vector.broadcast %c2_i32 : i32 to vector<64x1xi32>
    %53 = arith.cmpi sge, %30, %52 : vector<64x1xi32>
    %cst_19 = arith.constant 0.000000e+00 : f32
    %54 = vector.shape_cast %53 : vector<64x1xi1> to vector<64x1xi1>
    %55 = vector.broadcast %54 : vector<64x1xi1> to vector<64x128xi1>
    %56 = vector.broadcast %cst_19 : f32 to vector<64x128xf32>
    %57 = arith.select %55, %51, %56 : vector<64x128xi1>, vector<64x128xf32>
    %58 = vector.extract_strided_slice %32 {offsets = [1, 0], sizes = [1, 128], strides = [1, 1]} : vector<4x128xf32> to vector<1x128xf32>
    %59 = vector.broadcast %58 : vector<1x128xf32> to vector<64x128xf32>
    %60 = arith.mulf %57, %59 : vector<64x128xf32>
    %61 = arith.addf %48, %60 : vector<64x128xf32>
    %cst_20 = arith.constant 0.000000e+00 : f32
    %62 = vector.broadcast %cst_20 : f32 to vector<1x128xf32>
    %63 = vector.extract_strided_slice %22 {offsets = [0, 0], sizes = [63, 128], strides = [1, 1]} : vector<64x128xf32> to vector<63x128xf32>
    %64 = tpu.concatenate %62, %63 in 0 : vector<1x128xf32>, vector<63x128xf32> -> vector<64x128xf32>
    %c1_i32 = arith.constant 1 : i32
    %65 = vector.broadcast %c1_i32 : i32 to vector<64x1xi32>
    %66 = arith.cmpi sge, %30, %65 : vector<64x1xi32>
    %cst_21 = arith.constant 0.000000e+00 : f32
    %67 = vector.shape_cast %66 : vector<64x1xi1> to vector<64x1xi1>
    %68 = vector.broadcast %67 : vector<64x1xi1> to vector<64x128xi1>
    %69 = vector.broadcast %cst_21 : f32 to vector<64x128xf32>
    %70 = arith.select %68, %64, %69 : vector<64x128xi1>, vector<64x128xf32>
    %71 = vector.extract_strided_slice %32 {offsets = [2, 0], sizes = [1, 128], strides = [1, 1]} : vector<4x128xf32> to vector<1x128xf32>
    %72 = vector.broadcast %71 : vector<1x128xf32> to vector<64x128xf32>
    %73 = arith.mulf %70, %72 : vector<64x128xf32>
    %74 = arith.addf %61, %73 : vector<64x128xf32>
    %c0_22 = arith.constant 0 : index
    %c0_23 = arith.constant 0 : index
    %c0_24 = arith.constant 0 : index
    %75 = vector.load %arg6[%c0_22, %c0_23, %c0_24] : memref<1x1x128xf32, #tpu.memory_space<vmem>>, vector<1x1x128xf32>
    %76 = vector.shape_cast %75 : vector<1x1x128xf32> to vector<1x128xf32>
    %77 = vector.broadcast %76 : vector<1x128xf32> to vector<64x128xf32>
    %78 = arith.addf %74, %77 : vector<64x128xf32>
    %cst_25 = arith.constant 0.000000e+00 : f32
    %79 = vector.broadcast %cst_25 : f32 to vector<64x128xf32>
    %80 = arith.subf %79, %78 : vector<64x128xf32>
    %81 = math.exp %80 : vector<64x128xf32>
    %cst_26 = arith.constant 1.000000e+00 : f32
    %82 = vector.broadcast %cst_26 : f32 to vector<64x128xf32>
    %83 = arith.addf %82, %81 : vector<64x128xf32>
    %84 = arith.divf %78, %83 : vector<64x128xf32>
    %85 = arith.truncf %84 : vector<64x128xf32> to vector<64x128xbf16>
    %c0_27 = arith.constant 0 : index
    %c0_28 = arith.constant 0 : index
    %c0_29 = arith.constant 0 : index
    %86 = vector.load %arg7[%c0_27, %c0_28, %c0_29] : memref<1x128x160xbf16, #tpu.memory_space<vmem>>, vector<1x128x160xbf16>
    %87 = vector.shape_cast %86 : vector<1x128x160xbf16> to vector<128x160xbf16>
    %cst_30 = arith.constant dense<0.000000e+00> : vector<64x160xf32>
    %88 = tpu.matmul %85, %87, %cst_30 {dimension_numbers = #tpu.dot_dimension_numbers<[1], [0], [0], [1], [0, 0, 1, 1], [], []>} : vector<64x128xbf16>, vector<128x160xbf16>, vector<64x160xf32> -> vector<64x160xf32>
    %89 = vector.extract_strided_slice %88 {offsets = [0, 0], sizes = [64, 128], strides = [1, 1]} : vector<64x160xf32> to vector<64x128xf32>
    %c0_31 = arith.constant 0 : index
    %c0_32 = arith.constant 0 : index
    %c0_33 = arith.constant 0 : index
    %90 = vector.load %arg8[%c0_31, %c0_32, %c0_33] : memref<1x1x128xf32, #tpu.memory_space<vmem>>, vector<1x1x128xf32>
    %91 = vector.shape_cast %90 : vector<1x1x128xf32> to vector<1x128xf32>
    %92 = vector.broadcast %91 : vector<1x128xf32> to vector<64x128xf32>
    %93 = arith.addf %89, %92 : vector<64x128xf32>
    %cst_34 = arith.constant 0.000000e+00 : f32
    %94 = vector.broadcast %cst_34 : f32 to vector<64x128xf32>
    %95 = arith.maximumf %93, %94 : vector<64x128xf32>
    %96 = math.absf %93 : vector<64x128xf32>
    %cst_35 = arith.constant 0.000000e+00 : f32
    %97 = vector.broadcast %cst_35 : f32 to vector<64x128xf32>
    %98 = arith.subf %97, %96 : vector<64x128xf32>
    %99 = math.exp %98 : vector<64x128xf32>
    %cst_36 = arith.constant 1.000000e+00 : f32
    %100 = vector.broadcast %cst_36 : f32 to vector<64x128xf32>
    %101 = arith.addf %100, %99 : vector<64x128xf32>
    %102 = math.log %101 : vector<64x128xf32>
    %103 = arith.addf %95, %102 : vector<64x128xf32>
    %c0_37 = arith.constant 0 : index
    %c0_38 = arith.constant 0 : index
    %104 = vector.load %arg14[%c0_37, %c0_38] : memref<64x128xf32, #tpu.memory_space<vmem>>, vector<64x128xf32>
    tpu.vector_store %arg14[%c0_37, %c0_38], %103 {strides = array<i32>} : memref<64x128xf32, #tpu.memory_space<vmem>>, vector<64x128xf32>,
    %105 = arith.mulf %103, %84 : vector<64x128xf32>
    %c0_39 = arith.constant 0 : index
    %c0_40 = arith.constant 0 : index
    %106 = vector.load %arg15[%c0_39, %c0_40] : memref<64x128xf32, #tpu.memory_space<vmem>>, vector<64x128xf32>
    tpu.vector_store %arg15[%c0_39, %c0_40], %105 {strides = array<i32>} : memref<64x128xf32, #tpu.memory_space<vmem>>, vector<64x128xf32>,
    %107 = vector.extract_strided_slice %88 {offsets = [0, 128], sizes = [64, 32], strides = [1, 1]} : vector<64x160xf32> to vector<64x32xf32>
    %c0_41 = arith.constant 0 : index
    %c0_42 = arith.constant 0 : index
    %108 = vector.load %arg16[%c0_41, %c0_42] : memref<64x32xf32, #tpu.memory_space<vmem>>, vector<64x32xf32>
    tpu.vector_store %arg16[%c0_41, %c0_42], %107 {strides = array<i32>} : memref<64x32xf32, #tpu.memory_space<vmem>>, vector<64x32xf32>,
    %c0_43 = arith.constant 0 : index
    %c0_44 = arith.constant 0 : index
    %c0_45 = arith.constant 0 : index
    %109 = vector.load %arg9[%c0_43, %c0_44, %c0_45] : memref<1x16x128xf32, #tpu.memory_space<vmem>>, vector<1x16x128xf32>
    %110 = vector.shape_cast %109 : vector<1x16x128xf32> to vector<16x128xf32>
    %cst_46 = arith.constant 0.000000e+00 : f32
    %111 = vector.broadcast %cst_46 : f32 to vector<16x128xf32>
    %c0_i32_47 = arith.constant 0 : i32
    %c4_i32 = arith.constant 4 : i32
    %112 = arith.addi %c0_i32_47, %c4_i32 : i32
    %c1_i32_48 = arith.constant 1 : i32
    %113 = scf.for %arg18 = %c0_i32_47 to %112 step %c1_i32_48 iter_args(%arg19 = %111) -> (vector<16x128xf32>)  : i32 {
      %c8_i32 = arith.constant 8 : i32
      %140 = arith.muli %arg18, %c8_i32 : i32
      %c0_i32_72 = arith.constant 0 : i32
      %141 = arith.addi %c0_i32_72, %140 : i32
      %142 = tpu.assume_multiple %141, 8 : i32
      %143 = arith.index_cast %142 : i32 to index
      %c0_73 = arith.constant 0 : index
      %144 = vector.load %arg14[%143, %c0_73] : memref<64x128xf32, #tpu.memory_space<vmem>>, vector<8x128xf32>
      %145 = arith.index_cast %142 : i32 to index
      %c0_74 = arith.constant 0 : index
      %146 = vector.load %arg15[%145, %c0_74] : memref<64x128xf32, #tpu.memory_space<vmem>>, vector<8x128xf32>
      %147 = arith.index_cast %142 : i32 to index
      %c0_75 = arith.constant 0 : index
      %148 = vector.load %arg16[%147, %c0_75] : memref<64x32xf32, #tpu.memory_space<vmem>>, vector<8x32xf32>
      %149 = vector.extract_strided_slice %148 {offsets = [0, 0], sizes = [8, 16], strides = [1, 1]} : vector<8x32xf32> to vector<8x16xf32>
      %150 = vector.extract_strided_slice %148 {offsets = [0, 16], sizes = [8, 16], strides = [1, 1]} : vector<8x32xf32> to vector<8x16xf32>
      %151 = vector.shape_cast %144 : vector<8x128xf32> to vector<8x1x128xf32>
      %152 = vector.shape_cast %110 : vector<16x128xf32> to vector<1x16x128xf32>
      %153 = vector.broadcast %151 : vector<8x1x128xf32> to vector<8x16x128xf32>
      %154 = vector.broadcast %152 : vector<1x16x128xf32> to vector<8x16x128xf32>
      %155 = arith.mulf %153, %154 : vector<8x16x128xf32>
      %156 = math.exp %155 : vector<8x16x128xf32>
      %157 = vector.shape_cast %146 : vector<8x128xf32> to vector<8x1x128xf32>
      %158 = vector.shape_cast %149 : vector<8x16xf32> to vector<8x16x1xf32>
      %159 = vector.broadcast %157 : vector<8x1x128xf32> to vector<8x16x128xf32>
      %160 = vector.broadcast %158 : vector<8x16x1xf32> to vector<8x16x128xf32>
      %161 = arith.mulf %159, %160 : vector<8x16x128xf32>
      %162 = vector.extract_strided_slice %156 {offsets = [0, 0, 0], sizes = [1, 16, 128], strides = [1, 1, 1]} : vector<8x16x128xf32> to vector<1x16x128xf32>
      %163 = vector.shape_cast %162 : vector<1x16x128xf32> to vector<16x128xf32>
      %164 = arith.mulf %163, %arg19 : vector<16x128xf32>
      %165 = vector.extract_strided_slice %161 {offsets = [0, 0, 0], sizes = [1, 16, 128], strides = [1, 1, 1]} : vector<8x16x128xf32> to vector<1x16x128xf32>
      %166 = vector.shape_cast %165 : vector<1x16x128xf32> to vector<16x128xf32>
      %167 = arith.addf %164, %166 : vector<16x128xf32>
      %168 = vector.shape_cast %167 : vector<16x128xf32> to vector<1x16x128xf32>
      %169 = vector.extract_strided_slice %156 {offsets = [1, 0, 0], sizes = [1, 16, 128], strides = [1, 1, 1]} : vector<8x16x128xf32> to vector<1x16x128xf32>
      %170 = vector.shape_cast %169 : vector<1x16x128xf32> to vector<16x128xf32>
      %171 = arith.mulf %170, %167 : vector<16x128xf32>
      %172 = vector.extract_strided_slice %161 {offsets = [1, 0, 0], sizes = [1, 16, 128], strides = [1, 1, 1]} : vector<8x16x128xf32> to vector<1x16x128xf32>
      %173 = vector.shape_cast %172 : vector<1x16x128xf32> to vector<16x128xf32>
      %174 = arith.addf %171, %173 : vector<16x128xf32>
      %175 = vector.shape_cast %174 : vector<16x128xf32> to vector<1x16x128xf32>
      %176 = vector.extract_strided_slice %156 {offsets = [2, 0, 0], sizes = [1, 16, 128], strides = [1, 1, 1]} : vector<8x16x128xf32> to vector<1x16x128xf32>
      %177 = vector.shape_cast %176 : vector<1x16x128xf32> to vector<16x128xf32>
      %178 = arith.mulf %177, %174 : vector<16x128xf32>
      %179 = vector.extract_strided_slice %161 {offsets = [2, 0, 0], sizes = [1, 16, 128], strides = [1, 1, 1]} : vector<8x16x128xf32> to vector<1x16x128xf32>
      %180 = vector.shape_cast %179 : vector<1x16x128xf32> to vector<16x128xf32>
      %181 = arith.addf %178, %180 : vector<16x128xf32>
      %182 = vector.shape_cast %181 : vector<16x128xf32> to vector<1x16x128xf32>
      %183 = vector.extract_strided_slice %156 {offsets = [3, 0, 0], sizes = [1, 16, 128], strides = [1, 1, 1]} : vector<8x16x128xf32> to vector<1x16x128xf32>
      %184 = vector.shape_cast %183 : vector<1x16x128xf32> to vector<16x128xf32>
      %185 = arith.mulf %184, %181 : vector<16x128xf32>
      %186 = vector.extract_strided_slice %161 {offsets = [3, 0, 0], sizes = [1, 16, 128], strides = [1, 1, 1]} : vector<8x16x128xf32> to vector<1x16x128xf32>
      %187 = vector.shape_cast %186 : vector<1x16x128xf32> to vector<16x128xf32>
      %188 = arith.addf %185, %187 : vector<16x128xf32>
      %189 = vector.shape_cast %188 : vector<16x128xf32> to vector<1x16x128xf32>
      %190 = vector.extract_strided_slice %156 {offsets = [4, 0, 0], sizes = [1, 16, 128], strides = [1, 1, 1]} : vector<8x16x128xf32> to vector<1x16x128xf32>
      %191 = vector.shape_cast %190 : vector<1x16x128xf32> to vector<16x128xf32>
      %192 = arith.mulf %191, %188 : vector<16x128xf32>
      %193 = vector.extract_strided_slice %161 {offsets = [4, 0, 0], sizes = [1, 16, 128], strides = [1, 1, 1]} : vector<8x16x128xf32> to vector<1x16x128xf32>
      %194 = vector.shape_cast %193 : vector<1x16x128xf32> to vector<16x128xf32>
      %195 = arith.addf %192, %194 : vector<16x128xf32>
      %196 = vector.shape_cast %195 : vector<16x128xf32> to vector<1x16x128xf32>
      %197 = vector.extract_strided_slice %156 {offsets = [5, 0, 0], sizes = [1, 16, 128], strides = [1, 1, 1]} : vector<8x16x128xf32> to vector<1x16x128xf32>
      %198 = vector.shape_cast %197 : vector<1x16x128xf32> to vector<16x128xf32>
      %199 = arith.mulf %198, %195 : vector<16x128xf32>
      %200 = vector.extract_strided_slice %161 {offsets = [5, 0, 0], sizes = [1, 16, 128], strides = [1, 1, 1]} : vector<8x16x128xf32> to vector<1x16x128xf32>
      %201 = vector.shape_cast %200 : vector<1x16x128xf32> to vector<16x128xf32>
      %202 = arith.addf %199, %201 : vector<16x128xf32>
      %203 = vector.shape_cast %202 : vector<16x128xf32> to vector<1x16x128xf32>
      %204 = vector.extract_strided_slice %156 {offsets = [6, 0, 0], sizes = [1, 16, 128], strides = [1, 1, 1]} : vector<8x16x128xf32> to vector<1x16x128xf32>
      %205 = vector.shape_cast %204 : vector<1x16x128xf32> to vector<16x128xf32>
      %206 = arith.mulf %205, %202 : vector<16x128xf32>
      %207 = vector.extract_strided_slice %161 {offsets = [6, 0, 0], sizes = [1, 16, 128], strides = [1, 1, 1]} : vector<8x16x128xf32> to vector<1x16x128xf32>
      %208 = vector.shape_cast %207 : vector<1x16x128xf32> to vector<16x128xf32>
      %209 = arith.addf %206, %208 : vector<16x128xf32>
      %210 = vector.shape_cast %209 : vector<16x128xf32> to vector<1x16x128xf32>
      %211 = vector.extract_strided_slice %156 {offsets = [7, 0, 0], sizes = [1, 16, 128], strides = [1, 1, 1]} : vector<8x16x128xf32> to vector<1x16x128xf32>
      %212 = vector.shape_cast %211 : vector<1x16x128xf32> to vector<16x128xf32>
      %213 = arith.mulf %212, %209 : vector<16x128xf32>
      %214 = vector.extract_strided_slice %161 {offsets = [7, 0, 0], sizes = [1, 16, 128], strides = [1, 1, 1]} : vector<8x16x128xf32> to vector<1x16x128xf32>
      %215 = vector.shape_cast %214 : vector<1x16x128xf32> to vector<16x128xf32>
      %216 = arith.addf %213, %215 : vector<16x128xf32>
      %217 = vector.shape_cast %216 : vector<16x128xf32> to vector<1x16x128xf32>
      %218 = tpu.concatenate %168, %175, %182, %189, %196, %203, %210, %217 in 0 : vector<1x16x128xf32>, vector<1x16x128xf32>, vector<1x16x128xf32>, vector<1x16x128xf32>, vector<1x16x128xf32>, vector<1x16x128xf32>, vector<1x16x128xf32>, vector<1x16x128xf32> -> vector<8x16x128xf32>
      %219 = vector.shape_cast %150 : vector<8x16xf32> to vector<8x16x1xf32>
      %220 = vector.broadcast %219 : vector<8x16x1xf32> to vector<8x16x128xf32>
      %221 = arith.mulf %218, %220 : vector<8x16x128xf32>
      %cst_76 = arith.constant dense<0.000000e+00> : vector<8x128xf32>
      %222 = vector.multi_reduction <add>, %221, %cst_76 [1] : vector<8x16x128xf32> to vector<8x128xf32>
      %223 = arith.index_cast %142 : i32 to index
      %c0_77 = arith.constant 0 : index
      %224 = vector.load %arg17[%223, %c0_77] : memref<64x128xf32, #tpu.memory_space<vmem>>, vector<8x128xf32>
      tpu.vector_store %arg17[%223, %c0_77], %222 {strides = array<i32>} : memref<64x128xf32, #tpu.memory_space<vmem>>, vector<8x128xf32>,
      scf.yield %216 : vector<16x128xf32>
    }
    %c4_i32_49 = arith.constant 4 : i32
    %cst_50 = arith.constant 0.000000e+00 : f32
    %114 = vector.broadcast %cst_50 : f32 to vector<16x128xf32>
    %c0_i32_51 = arith.constant 0 : i32
    %c4_i32_52 = arith.constant 4 : i32
    %115 = arith.addi %c0_i32_51, %c4_i32_52 : i32
    %c1_i32_53 = arith.constant 1 : i32
    %116 = scf.for %arg18 = %c0_i32_51 to %115 step %c1_i32_53 iter_args(%arg19 = %114) -> (vector<16x128xf32>)  : i32 {
      %c8_i32 = arith.constant 8 : i32
      %140 = arith.muli %arg18, %c8_i32 : i32
      %c32_i32_72 = arith.constant 32 : i32
      %141 = arith.addi %c32_i32_72, %140 : i32
      %142 = tpu.assume_multiple %141, 8 : i32
      %143 = arith.index_cast %142 : i32 to index
      %c0_73 = arith.constant 0 : index
      %144 = vector.load %arg14[%143, %c0_73] : memref<64x128xf32, #tpu.memory_space<vmem>>, vector<8x128xf32>
      %145 = arith.index_cast %142 : i32 to index
      %c0_74 = arith.constant 0 : index
      %146 = vector.load %arg15[%145, %c0_74] : memref<64x128xf32, #tpu.memory_space<vmem>>, vector<8x128xf32>
      %147 = arith.index_cast %142 : i32 to index
      %c0_75 = arith.constant 0 : index
      %148 = vector.load %arg16[%147, %c0_75] : memref<64x32xf32, #tpu.memory_space<vmem>>, vector<8x32xf32>
      %149 = vector.extract_strided_slice %148 {offsets = [0, 0], sizes = [8, 16], strides = [1, 1]} : vector<8x32xf32> to vector<8x16xf32>
      %150 = vector.extract_strided_slice %148 {offsets = [0, 16], sizes = [8, 16], strides = [1, 1]} : vector<8x32xf32> to vector<8x16xf32>
      %151 = vector.shape_cast %144 : vector<8x128xf32> to vector<8x1x128xf32>
      %152 = vector.shape_cast %110 : vector<16x128xf32> to vector<1x16x128xf32>
      %153 = vector.broadcast %151 : vector<8x1x128xf32> to vector<8x16x128xf32>
      %154 = vector.broadcast %152 : vector<1x16x128xf32> to vector<8x16x128xf32>
      %155 = arith.mulf %153, %154 : vector<8x16x128xf32>
      %156 = math.exp %155 : vector<8x16x128xf32>
      %157 = vector.shape_cast %146 : vector<8x128xf32> to vector<8x1x128xf32>
      %158 = vector.shape_cast %149 : vector<8x16xf32> to vector<8x16x1xf32>
      %159 = vector.broadcast %157 : vector<8x1x128xf32> to vector<8x16x128xf32>
      %160 = vector.broadcast %158 : vector<8x16x1xf32> to vector<8x16x128xf32>
      %161 = arith.mulf %159, %160 : vector<8x16x128xf32>
      %162 = vector.extract_strided_slice %156 {offsets = [0, 0, 0], sizes = [1, 16, 128], strides = [1, 1, 1]} : vector<8x16x128xf32> to vector<1x16x128xf32>
      %163 = vector.shape_cast %162 : vector<1x16x128xf32> to vector<16x128xf32>
      %164 = arith.mulf %163, %arg19 : vector<16x128xf32>
      %165 = vector.extract_strided_slice %161 {offsets = [0, 0, 0], sizes = [1, 16, 128], strides = [1, 1, 1]} : vector<8x16x128xf32> to vector<1x16x128xf32>
      %166 = vector.shape_cast %165 : vector<1x16x128xf32> to vector<16x128xf32>
      %167 = arith.addf %164, %166 : vector<16x128xf32>
      %168 = vector.shape_cast %167 : vector<16x128xf32> to vector<1x16x128xf32>
      %169 = vector.extract_strided_slice %156 {offsets = [1, 0, 0], sizes = [1, 16, 128], strides = [1, 1, 1]} : vector<8x16x128xf32> to vector<1x16x128xf32>
      %170 = vector.shape_cast %169 : vector<1x16x128xf32> to vector<16x128xf32>
      %171 = arith.mulf %170, %167 : vector<16x128xf32>
      %172 = vector.extract_strided_slice %161 {offsets = [1, 0, 0], sizes = [1, 16, 128], strides = [1, 1, 1]} : vector<8x16x128xf32> to vector<1x16x128xf32>
      %173 = vector.shape_cast %172 : vector<1x16x128xf32> to vector<16x128xf32>
      %174 = arith.addf %171, %173 : vector<16x128xf32>
      %175 = vector.shape_cast %174 : vector<16x128xf32> to vector<1x16x128xf32>
      %176 = vector.extract_strided_slice %156 {offsets = [2, 0, 0], sizes = [1, 16, 128], strides = [1, 1, 1]} : vector<8x16x128xf32> to vector<1x16x128xf32>
      %177 = vector.shape_cast %176 : vector<1x16x128xf32> to vector<16x128xf32>
      %178 = arith.mulf %177, %174 : vector<16x128xf32>
      %179 = vector.extract_strided_slice %161 {offsets = [2, 0, 0], sizes = [1, 16, 128], strides = [1, 1, 1]} : vector<8x16x128xf32> to vector<1x16x128xf32>
      %180 = vector.shape_cast %179 : vector<1x16x128xf32> to vector<16x128xf32>
      %181 = arith.addf %178, %180 : vector<16x128xf32>
      %182 = vector.shape_cast %181 : vector<16x128xf32> to vector<1x16x128xf32>
      %183 = vector.extract_strided_slice %156 {offsets = [3, 0, 0], sizes = [1, 16, 128], strides = [1, 1, 1]} : vector<8x16x128xf32> to vector<1x16x128xf32>
      %184 = vector.shape_cast %183 : vector<1x16x128xf32> to vector<16x128xf32>
      %185 = arith.mulf %184, %181 : vector<16x128xf32>
      %186 = vector.extract_strided_slice %161 {offsets = [3, 0, 0], sizes = [1, 16, 128], strides = [1, 1, 1]} : vector<8x16x128xf32> to vector<1x16x128xf32>
      %187 = vector.shape_cast %186 : vector<1x16x128xf32> to vector<16x128xf32>
      %188 = arith.addf %185, %187 : vector<16x128xf32>
      %189 = vector.shape_cast %188 : vector<16x128xf32> to vector<1x16x128xf32>
      %190 = vector.extract_strided_slice %156 {offsets = [4, 0, 0], sizes = [1, 16, 128], strides = [1, 1, 1]} : vector<8x16x128xf32> to vector<1x16x128xf32>
      %191 = vector.shape_cast %190 : vector<1x16x128xf32> to vector<16x128xf32>
      %192 = arith.mulf %191, %188 : vector<16x128xf32>
      %193 = vector.extract_strided_slice %161 {offsets = [4, 0, 0], sizes = [1, 16, 128], strides = [1, 1, 1]} : vector<8x16x128xf32> to vector<1x16x128xf32>
      %194 = vector.shape_cast %193 : vector<1x16x128xf32> to vector<16x128xf32>
      %195 = arith.addf %192, %194 : vector<16x128xf32>
      %196 = vector.shape_cast %195 : vector<16x128xf32> to vector<1x16x128xf32>
      %197 = vector.extract_strided_slice %156 {offsets = [5, 0, 0], sizes = [1, 16, 128], strides = [1, 1, 1]} : vector<8x16x128xf32> to vector<1x16x128xf32>
      %198 = vector.shape_cast %197 : vector<1x16x128xf32> to vector<16x128xf32>
      %199 = arith.mulf %198, %195 : vector<16x128xf32>
      %200 = vector.extract_strided_slice %161 {offsets = [5, 0, 0], sizes = [1, 16, 128], strides = [1, 1, 1]} : vector<8x16x128xf32> to vector<1x16x128xf32>
      %201 = vector.shape_cast %200 : vector<1x16x128xf32> to vector<16x128xf32>
      %202 = arith.addf %199, %201 : vector<16x128xf32>
      %203 = vector.shape_cast %202 : vector<16x128xf32> to vector<1x16x128xf32>
      %204 = vector.extract_strided_slice %156 {offsets = [6, 0, 0], sizes = [1, 16, 128], strides = [1, 1, 1]} : vector<8x16x128xf32> to vector<1x16x128xf32>
      %205 = vector.shape_cast %204 : vector<1x16x128xf32> to vector<16x128xf32>
      %206 = arith.mulf %205, %202 : vector<16x128xf32>
      %207 = vector.extract_strided_slice %161 {offsets = [6, 0, 0], sizes = [1, 16, 128], strides = [1, 1, 1]} : vector<8x16x128xf32> to vector<1x16x128xf32>
      %208 = vector.shape_cast %207 : vector<1x16x128xf32> to vector<16x128xf32>
      %209 = arith.addf %206, %208 : vector<16x128xf32>
      %210 = vector.shape_cast %209 : vector<16x128xf32> to vector<1x16x128xf32>
      %211 = vector.extract_strided_slice %156 {offsets = [7, 0, 0], sizes = [1, 16, 128], strides = [1, 1, 1]} : vector<8x16x128xf32> to vector<1x16x128xf32>
      %212 = vector.shape_cast %211 : vector<1x16x128xf32> to vector<16x128xf32>
      %213 = arith.mulf %212, %209 : vector<16x128xf32>
      %214 = vector.extract_strided_slice %161 {offsets = [7, 0, 0], sizes = [1, 16, 128], strides = [1, 1, 1]} : vector<8x16x128xf32> to vector<1x16x128xf32>
      %215 = vector.shape_cast %214 : vector<1x16x128xf32> to vector<16x128xf32>
      %216 = arith.addf %213, %215 : vector<16x128xf32>
      %217 = vector.shape_cast %216 : vector<16x128xf32> to vector<1x16x128xf32>
      %218 = tpu.concatenate %168, %175, %182, %189, %196, %203, %210, %217 in 0 : vector<1x16x128xf32>, vector<1x16x128xf32>, vector<1x16x128xf32>, vector<1x16x128xf32>, vector<1x16x128xf32>, vector<1x16x128xf32>, vector<1x16x128xf32>, vector<1x16x128xf32> -> vector<8x16x128xf32>
      %219 = vector.shape_cast %150 : vector<8x16xf32> to vector<8x16x1xf32>
      %220 = vector.broadcast %219 : vector<8x16x1xf32> to vector<8x16x128xf32>
      %221 = arith.mulf %218, %220 : vector<8x16x128xf32>
      %cst_76 = arith.constant dense<0.000000e+00> : vector<8x128xf32>
      %222 = vector.multi_reduction <add>, %221, %cst_76 [1] : vector<8x16x128xf32> to vector<8x128xf32>
      %223 = arith.index_cast %142 : i32 to index
      %c0_77 = arith.constant 0 : index
      %224 = vector.load %arg17[%223, %c0_77] : memref<64x128xf32, #tpu.memory_space<vmem>>, vector<8x128xf32>
      tpu.vector_store %arg17[%223, %c0_77], %222 {strides = array<i32>} : memref<64x128xf32, #tpu.memory_space<vmem>>, vector<8x128xf32>,
      scf.yield %216 : vector<16x128xf32>
    }
    %c4_i32_54 = arith.constant 4 : i32
    %c0_55 = arith.constant 0 : index
    %c0_56 = arith.constant 0 : index
    %117 = vector.load %arg17[%c0_55, %c0_56] : memref<64x128xf32, #tpu.memory_space<vmem>>, vector<64x128xf32>
    %c0_57 = arith.constant 0 : index
    %c0_58 = arith.constant 0 : index
    %c0_59 = arith.constant 0 : index
    %118 = vector.load %arg10[%c0_57, %c0_58, %c0_59] : memref<1x1x128xf32, #tpu.memory_space<vmem>>, vector<1x1x128xf32>
    %119 = vector.shape_cast %118 : vector<1x1x128xf32> to vector<1x128xf32>
    %120 = vector.broadcast %119 : vector<1x128xf32> to vector<64x128xf32>
    %121 = arith.mulf %120, %84 : vector<64x128xf32>
    %122 = arith.addf %117, %121 : vector<64x128xf32>
    %cst_60 = arith.constant 0.000000e+00 : f32
    %123 = vector.broadcast %cst_60 : f32 to vector<64x128xf32>
    %124 = arith.subf %123, %23 : vector<64x128xf32>
    %125 = math.exp %124 : vector<64x128xf32>
    %cst_61 = arith.constant 1.000000e+00 : f32
    %126 = vector.broadcast %cst_61 : f32 to vector<64x128xf32>
    %127 = arith.addf %126, %125 : vector<64x128xf32>
    %128 = arith.divf %23, %127 : vector<64x128xf32>
    %129 = arith.mulf %122, %128 : vector<64x128xf32>
    %130 = arith.truncf %129 : vector<64x128xf32> to vector<64x128xbf16>
    %c0_62 = arith.constant 0 : index
    %c0_63 = arith.constant 0 : index
    %c0_64 = arith.constant 0 : index
    %131 = vector.load %arg11[%c0_62, %c0_63, %c0_64] : memref<1x128x64xbf16, #tpu.memory_space<vmem>>, vector<1x128x64xbf16>
    %132 = vector.shape_cast %131 : vector<1x128x64xbf16> to vector<128x64xbf16>
    %cst_65 = arith.constant dense<0.000000e+00> : vector<64x64xf32>
    %133 = tpu.matmul %130, %132, %cst_65 {dimension_numbers = #tpu.dot_dimension_numbers<[1], [0], [0], [1], [0, 0, 1, 1], [], []>} : vector<64x128xbf16>, vector<128x64xbf16>, vector<64x64xf32> -> vector<64x64xf32>
    %c0_66 = arith.constant 0 : index
    %c0_67 = arith.constant 0 : index
    %134 = vector.load %arg13[%c0_66, %c0_67] : memref<64x64xf32, #tpu.memory_space<vmem>>, vector<64x64xf32>
    %135 = arith.addf %134, %133 : vector<64x64xf32>
    %c0_68 = arith.constant 0 : index
    %c0_69 = arith.constant 0 : index
    %136 = vector.load %arg13[%c0_68, %c0_69] : memref<64x64xf32, #tpu.memory_space<vmem>>, vector<64x64xf32>
    tpu.vector_store %arg13[%c0_68, %c0_69], %135 {strides = array<i32>} : memref<64x64xf32, #tpu.memory_space<vmem>>, vector<64x64xf32>,
    %c1_i32_70 = arith.constant 1 : i32
    %137 = arith.cmpi eq, %arg1, %c1_i32_70 : i32
    %138 = arith.extui %137 : i1 to i32
    %c0_i32_71 = arith.constant 0 : i32
    %139 = arith.cmpi ne, %138, %c0_i32_71 : i32
    scf.if %139 {
      %c0_72 = arith.constant 0 : index
      %c0_73 = arith.constant 0 : index
      %140 = vector.load %arg13[%c0_72, %c0_73] : memref<64x64xf32, #tpu.memory_space<vmem>>, vector<64x64xf32>
      %c0_74 = arith.constant 0 : index
      %c0_75 = arith.constant 0 : index
      %141 = vector.load %arg12[%c0_74, %c0_75] : memref<64x64xf32, #tpu.memory_space<vmem>>, vector<64x64xf32>
      tpu.vector_store %arg12[%c0_74, %c0_75], %140 {strides = array<i32>} : memref<64x64xf32, #tpu.memory_space<vmem>>, vector<64x64xf32>,
    } else {
    }
    return
  }
  func.func @transform_0(%arg0: i32, %arg1: i32) -> (i32, i32) {
    %c0_i32 = arith.constant 0 : i32
    %c0_i32_0 = arith.constant 0 : i32
    return %arg0, %c0_i32 : i32, i32
  }
  func.func @transform_1(%arg0: i32, %arg1: i32) -> (i32, i32, i32) {
    %c0_i32 = arith.constant 0 : i32
    %c0_i32_0 = arith.constant 0 : i32
    %c0_i32_1 = arith.constant 0 : i32
    return %arg1, %c0_i32, %c0_i32_0 : i32, i32, i32
  }
  func.func @transform_2(%arg0: i32, %arg1: i32) -> (i32, i32, i32) {
    %c0_i32 = arith.constant 0 : i32
    %c0_i32_0 = arith.constant 0 : i32
    %c0_i32_1 = arith.constant 0 : i32
    return %arg1, %c0_i32, %c0_i32_0 : i32, i32, i32
  }
  func.func @transform_3(%arg0: i32, %arg1: i32) -> (i32, i32, i32) {
    %c0_i32 = arith.constant 0 : i32
    %c0_i32_0 = arith.constant 0 : i32
    %c0_i32_1 = arith.constant 0 : i32
    return %arg1, %c0_i32, %c0_i32_0 : i32, i32, i32
  }
  func.func @transform_4(%arg0: i32, %arg1: i32) -> (i32, i32, i32) {
    %c0_i32 = arith.constant 0 : i32
    %c0_i32_0 = arith.constant 0 : i32
    %c0_i32_1 = arith.constant 0 : i32
    return %arg1, %c0_i32, %c0_i32_0 : i32, i32, i32
  }
  func.func @transform_5(%arg0: i32, %arg1: i32) -> (i32, i32, i32) {
    %c0_i32 = arith.constant 0 : i32
    %c0_i32_0 = arith.constant 0 : i32
    %c0_i32_1 = arith.constant 0 : i32
    return %arg1, %c0_i32, %c0_i32_0 : i32, i32, i32
  }
  func.func @transform_6(%arg0: i32, %arg1: i32) -> (i32, i32, i32) {
    %c0_i32 = arith.constant 0 : i32
    %c0_i32_0 = arith.constant 0 : i32
    %c0_i32_1 = arith.constant 0 : i32
    return %arg1, %c0_i32, %c0_i32_0 : i32, i32, i32
  }
  func.func @transform_7(%arg0: i32, %arg1: i32) -> (i32, i32, i32) {
    %c0_i32 = arith.constant 0 : i32
    %c0_i32_0 = arith.constant 0 : i32
    %c0_i32_1 = arith.constant 0 : i32
    return %arg1, %c0_i32, %c0_i32_0 : i32, i32, i32
  }
  func.func @transform_8(%arg0: i32, %arg1: i32) -> (i32, i32, i32) {
    %c0_i32 = arith.constant 0 : i32
    %c0_i32_0 = arith.constant 0 : i32
    %c0_i32_1 = arith.constant 0 : i32
    return %arg1, %c0_i32, %c0_i32_0 : i32, i32, i32
  }
  func.func @transform_9(%arg0: i32, %arg1: i32) -> (i32, i32, i32) {
    %c0_i32 = arith.constant 0 : i32
    %c0_i32_0 = arith.constant 0 : i32
    %c0_i32_1 = arith.constant 0 : i32
    return %arg1, %c0_i32, %c0_i32_0 : i32, i32, i32
  }
  func.func @transform_10(%arg0: i32, %arg1: i32) -> (i32, i32) {
    %c0_i32 = arith.constant 0 : i32
    %c0_i32_0 = arith.constant 0 : i32
    return %arg0, %c0_i32 : i32, i32
  }
}

</mosaic_0001>

<llo_original>
// kernel: fuse_block_mamba_forward.2
$region0: #{fuse_block_mamba_forward.2}
  #allocation0 [shape = 'u32[]', space=smem, size = 0x4, offset = 0x4, fixed_abs, tag = 'smem constant byte address 0x4 - core index']
  #allocation1 [shape = 'u32[144,128]{1,0:T(1,128)}', space=vmem, size = 0x12000, scoped, tag = 'internal scratch']
  %s0 = inlined_call_operand.vmem [shape: bf16[64,64], index: 0, kind: input, shape index: {}]
  %s1 = inlined_call_operand.vmem [shape: bf16[64,64], index: 1, kind: input, shape index: {}]
  %s2 = inlined_call_operand.vmem [shape: f32[1,64], index: 2, kind: input, shape index: {}]
  %s3 = inlined_call_operand.hbm [shape: f32[64,64], index: 3, kind: output, shape index: {}]
  %s4 = sld [smem:[#allocation0]]
  $region22: #{fuse_block_mamba_forward.2} parent=0
    _
  %s6 = ssub.s32 1, %s4
  %s7 = scalar_select 0, %s6, %s4
  $region1: #{fuse_block_mamba_forward.2} parent=0
    #allocation2 [shape = 'u8[32768]{0}', space=vmem, size = 0x8000, scoped, tag = 'output window, operand 0, single buffered']
    #allocation3 [shape = 's32[1]{0}', space=sflag, size = 0x4, scoped, tag = 'scoped memory for fuse_block_mamba_forward.2']
    %8 = vsyncpa [#allocation3], 0
    // Predicated region
    $region2: #{fuse_block_mamba_forward.2} parent=1 // pred_check
      _
    $region3: #{fuse_block_mamba_forward.2} parent=1 // pred_check_branch
      %10 = sbr.rel (0) target = $region5
    $region4: #{fuse_block_mamba_forward.2} parent=1 // pred_region
      _
    $region5: #{fuse_block_mamba_forward.2} parent=1 // pred_fallthru
      _
    // Predicated region
    $region6: #{fuse_block_mamba_forward.2} parent=1 // pred_check
      _
    $region7: #{fuse_block_mamba_forward.2} parent=1 // pred_check_branch
      %12 = sbr.rel (0) target = $region9
    $region8: #{fuse_block_mamba_forward.2} parent=1 // pred_region
      _
    $region9: #{fuse_block_mamba_forward.2} parent=1 // pred_fallthru
      _
    // Predicated region
    $region10: #{fuse_block_mamba_forward.2} parent=1 // pred_check
      _
    $region11: #{fuse_block_mamba_forward.2} parent=1 // pred_check_branch
      %14 = sbr.rel (0) target = $region13
    $region12: #{fuse_block_mamba_forward.2} parent=1 // pred_region
      _
    $region13: #{fuse_block_mamba_forward.2} parent=1 // pred_fallthru
      _
    %v16 = vld [vmem:[%s0] sm:$0xf]
    %v17 = vld [vmem:[%s0 + $0x4] sm:$0xf]
    %v18 = vld [vmem:[%s0 + $0x8] sm:$0xf]
    %v19 = vld [vmem:[%s0 + $0xc] sm:$0xf]
    %v20 = vld [vmem:[%s0 + $0x10] sm:$0xf]
    %v21 = vld [vmem:[%s0 + $0x14] sm:$0xf]
    %v22 = vld [vmem:[%s0 + $0x18] sm:$0xf]
    %v23 = vld [vmem:[%s0 + $0x1c] sm:$0xf]
    %v24 = vld [vmem:[%s1] sm:$0xf]
    %v25 = vld [vmem:[%s1 + $0x4] sm:$0xf]
    %v26 = vld [vmem:[%s1 + $0x8] sm:$0xf]
    %v27 = vld [vmem:[%s1 + $0xc] sm:$0xf]
    %v28 = vld [vmem:[%s1 + $0x10] sm:$0xf]
    %v29 = vld [vmem:[%s1 + $0x14] sm:$0xf]
    %v30 = vld [vmem:[%s1 + $0x18] sm:$0xf]
    %v31 = vld [vmem:[%s1 + $0x1c] sm:$0xf]
    %v32 = vld [vmem:[%s2] sm:$0x1]
    %v34 = vlaneseq
    %v35 = vshrl.u32 %v34, 7
    %v36 = vsub.s32 0, %v35
    %v37 = vrot.slane %v32, %v36
    %v47 = vunpack.c.l.b16 %v16
    %v48 = vunpack.c.l.b16 %v17
    %v49 = vunpack.c.l.b16 %v18
    %v50 = vunpack.c.l.b16 %v19
    %v51 = vunpack.c.l.b16 %v20
    %v52 = vunpack.c.l.b16 %v21
    %v53 = vunpack.c.l.b16 %v22
    %v54 = vunpack.c.l.b16 %v23
    %v55 = vpack.c.b16 %v48, %v47
    %v56 = vpack.c.b16 %v50, %v49
    %v57 = vpack.c.b16 %v52, %v51
    %v58 = vpack.c.b16 %v54, %v53
    %v67 = vunpack.c.l.b16 %v24
    %v68 = vunpack.c.l.b16 %v25
    %v69 = vunpack.c.l.b16 %v26
    %v70 = vunpack.c.l.b16 %v27
    %v71 = vunpack.c.l.b16 %v28
    %v72 = vunpack.c.l.b16 %v29
    %v73 = vunpack.c.l.b16 %v30
    %v74 = vunpack.c.l.b16 %v31
    %v75 = vpack.c.b16 %v68, %v67
    %v76 = vpack.c.b16 %v70, %v69
    %v77 = vpack.c.b16 %v72, %v71
    %v78 = vpack.c.b16 %v74, %v73
    %vm83 = vcmask 523264
    %v85 = vsel %vm83, %v55, 0
    %v88 = vsel %vm83, %v56, 0
    %v91 = vsel %vm83, %v57, 0
    %v94 = vsel %vm83, %v58, 0
    %96 = vmatprep.subr.bf16.mxu0 0
    %97 = vmatpush1.bf16.msra.mxu0 %v75
    %98 = vmatprep.subr.bf16.mxu0 0
    %99 = vmatpush1.bf16.msra.mxu0 %v76
    %100 = vmatprep.subr.bf16.mxu0 0
    %101 = vmatpush1.bf16.msra.mxu0 %v77
    %102 = vmatprep.subr.bf16.mxu0 0
    %103 = vmatpush1.bf16.msra.mxu0 %v78
    %104 = vmatprep.subr.bf16.mxu0 0
    %105 = vmatpush1.bf16.msra.mxu0 0
    %106 = vmatprep.subr.bf16.mxu0 0
    %107 = vmatpush1.bf16.msra.mxu0 0
    %108 = vmatprep.subr.bf16.mxu0 0
    %109 = vmatpush1.bf16.msra.mxu0 0
    %110 = vmatprep.subr.bf16.mxu0 0
    %111 = vmatpush1.bf16.msra.mxu0 0
    %112 = vmatprep.subr.bf16.mxu0 0
    %113 = vmatpush1.bf16.msra.mxu0 0
    %114 = vmatprep.subr.bf16.mxu0 0
    %115 = vmatpush1.bf16.msra.mxu0 0
    %116 = vmatprep.subr.bf16.mxu0 0
    %117 = vmatpush1.bf16.msra.mxu0 0
    %118 = vmatprep.subr.bf16.mxu0 0
    %119 = vmatpush1.bf16.msra.mxu0 0
    %120 = vmatprep.subr.bf16.mxu0 0
    %121 = vmatpush1.bf16.msra.mxu0 0
    %122 = vmatprep.subr.bf16.mxu0 0
    %123 = vmatpush1.bf16.msra.mxu0 0
    %124 = vmatprep.subr.bf16.mxu0 0
    %125 = vmatpush1.bf16.msra.mxu0 0
    %126 = vmatprep.subr.bf16.mxu0 0
    %127 = vmatpush1.bf16.msra.mxu0 0
    %128 = vmatprep.mubr.bf16.mxu0 0
    %129 = vmatmul.mubr.bf16.gmra.mrb[0].mxu0 %v85
    %v130 = vpop.f32.mrb[0].mxu0
    %v131 = vadd.f32 %v37, %v130
    %v132 = vpop.f32.mrb[0].mxu0
    %v133 = vpop.f32.mrb[0].mxu0
    %v134 = vadd.f32 %v37, %v133
    %v135 = vpop.f32.mrb[0].mxu0
    %136 = vmatprep.mubr.bf16.mxu0 0
    %137 = vmatmul.mubr.bf16.gmra.mrb[0].mxu0 %v88
    %v138 = vpop.f32.mrb[0].mxu0
    %v139 = vadd.f32 %v37, %v138
    %v140 = vpop.f32.mrb[0].mxu0
    %v141 = vpop.f32.mrb[0].mxu0
    %v142 = vadd.f32 %v37, %v141
    %v143 = vpop.f32.mrb[0].mxu0
    %144 = vmatprep.mubr.bf16.mxu0 0
    %145 = vmatmul.mubr.bf16.gmra.mrb[0].mxu0 %v91
    %v146 = vpop.f32.mrb[0].mxu0
    %v147 = vadd.f32 %v37, %v146
    %v148 = vpop.f32.mrb[0].mxu0
    %v149 = vpop.f32.mrb[0].mxu0
    %v150 = vadd.f32 %v37, %v149
    %v151 = vpop.f32.mrb[0].mxu0
    %152 = vmatprep.mubr.bf16.mxu0 0
    %153 = vmatmul.mubr.bf16.gmra.mrb[0].mxu0 %v94
    %v154 = vpop.f32.mrb[0].mxu0
    %v155 = vadd.f32 %v37, %v154
    %v156 = vpop.f32.mrb[0].mxu0
    %v157 = vpop.f32.mrb[0].mxu0
    %v158 = vadd.f32 %v37, %v157
    %v159 = vpop.f32.mrb[0].mxu0
    %160 = vdwg.mxu0
    %161 = vst.msk [vmem:[#allocation2] sm:$0xff] %vm83, %v131
    %162 = vst.msk [vmem:[#allocation2 + $0x8] sm:$0xff] %vm83, %v134
    %163 = vst.msk [vmem:[#allocation2 + $0x10] sm:$0xff] %vm83, %v139
    %164 = vst.msk [vmem:[#allocation2 + $0x18] sm:$0xff] %vm83, %v142
    %165 = vst.msk [vmem:[#allocation2 + $0x20] sm:$0xff] %vm83, %v147
    %166 = vst.msk [vmem:[#allocation2 + $0x28] sm:$0xff] %vm83, %v150
    %167 = vst.msk [vmem:[#allocation2 + $0x30] sm:$0xff] %vm83, %v155
    %168 = vst.msk [vmem:[#allocation2 + $0x38] sm:$0xff] %vm83, %v158
    // Predicated region
    $region14: #{fuse_block_mamba_forward.2} parent=1 // pred_check
      _
    $region15: #{fuse_block_mamba_forward.2} parent=1 // pred_check_branch
      %170 = sbr.rel (0) target = $region17
    $region16: #{fuse_block_mamba_forward.2} parent=1 // pred_region
      %s172 = ssub.s32 1024, 1024
      %173 = vsyncadd [#allocation3], %s172
      %s174 = sshll.u32 [#allocation2], 4
      %s175 = int_to_ptr.vmem [resolvable:$true] %s174
      %180 = dma.vmem_to_hbm [thread:$0]  %s175, 1024, %s3, [#allocation3], 128, 128, 8
    $region17: #{fuse_block_mamba_forward.2} parent=1 // pred_fallthru
      _
    // Predicated region
    $region18: #{fuse_block_mamba_forward.2} parent=1 // pred_check
      _
    $region19: #{fuse_block_mamba_forward.2} parent=1 // pred_check_branch
      %182 = sbr.rel (0) target = $region21
    $region20: #{fuse_block_mamba_forward.2} parent=1 // pred_region
      %183 = dma.done [#allocation3], 1024
    $region21: #{fuse_block_mamba_forward.2} parent=1 // pred_fallthru
      _
    %184 = vsyncpa [#allocation3], 1

// kernel: fuse_block_mamba_forward.3
$region0: #{fuse_block_mamba_forward.3}
  #allocation0 [shape = 'u32[]', space=smem, size = 0x4, offset = 0x4, fixed_abs, tag = 'smem constant byte address 0x4 - core index']
  #allocation1 [shape = 'u32[144,128]{1,0:T(1,128)}', space=vmem, size = 0x12000, scoped, tag = 'internal scratch']
  #allocation2 [shape = 'f32[64,64]{1,0:T(8,128)}', space=vmem, size = 0x8000, scoped, tag = 'scratch operand']
  #allocation3 [shape = 'f32[64,128]{1,0:T(8,128)}', space=vmem, size = 0x8000, scoped, tag = 'scratch operand']
  #allocation4 [shape = 'f32[64,128]{1,0:T(8,128)}', space=vmem, size = 0x8000, scoped, tag = 'scratch operand']
  #allocation5 [shape = 'f32[64,32]{1,0:T(8,128)}', space=vmem, size = 0x8000, scoped, tag = 'scratch operand']
  #allocation6 [shape = 'f32[64,128]{1,0:T(8,128)}', space=vmem, size = 0x8000, scoped, tag = 'scratch operand']
  %s0 = inlined_call_operand.hbm [shape: f32[64,64], index: 0, kind: input, shape index: {}]
  %s1 = inlined_call_operand.hbm [shape: f32[2,1,64], index: 1, kind: input, shape index: {}]
  %s2 = inlined_call_operand.hbm [shape: bf16[2,64,256], index: 2, kind: input, shape index: {}]
  %s3 = inlined_call_operand.hbm [shape: f32[2,4,128], index: 3, kind: input, shape index: {}]
  %s4 = inlined_call_operand.hbm [shape: f32[2,1,128], index: 4, kind: input, shape index: {}]
  %s5 = inlined_call_operand.hbm [shape: bf16[2,128,160], index: 5, kind: input, shape index: {}]
  %s6 = inlined_call_operand.hbm [shape: f32[2,1,128], index: 6, kind: input, shape index: {}]
  %s7 = inlined_call_operand.hbm [shape: f32[2,16,128], index: 7, kind: input, shape index: {}]
  %s8 = inlined_call_operand.hbm [shape: f32[2,1,128], index: 8, kind: input, shape index: {}]
  %s9 = inlined_call_operand.hbm [shape: bf16[2,128,64], index: 9, kind: input, shape index: {}]
  %s10 = inlined_call_operand.hbm [shape: f32[64,64], index: 10, kind: output, shape index: {}]
  %s11 = sld [smem:[#allocation0]]
  $region135: #{fuse_block_mamba_forward.3} parent=0
    _
  %s13 = ssub.s32 1, %s11
  %s14 = scalar_select 0, %s13, %s11
  $region1: #{fuse_block_mamba_forward.3} parent=0
    #allocation7 [shape = 'u8[32768]{0}', space=vmem, size = 0x8000, scoped, tag = 'input window, operand 0, single buffered']
    #allocation8 [shape = 's32[2]{0}', space=sflag, size = 0x8, scoped, tag = 'scoped memory for fuse_block_mamba_forward.3']
    #allocation9 [shape = 's32[2]{0}', space=sflag, size = 0x8, scoped, tag = 'scoped memory for fuse_block_mamba_forward.3']
    #allocation10 [shape = 'u8[1024]{0}', space=vmem, size = 0x400, scoped, tag = 'input window, operand 1']
    #allocation11 [shape = 's32[2]{0}', space=sflag, size = 0x8, scoped, tag = 'scoped memory for fuse_block_mamba_forward.3']
    #allocation12 [shape = 'u8[65536]{0}', space=vmem, size = 0x10000, scoped, tag = 'input window, operand 2']
    #allocation13 [shape = 'u8[4096]{0}', space=vmem, size = 0x1000, scoped, tag = 'input window, operand 3']
    #allocation14 [shape = 's32[2]{0}', space=sflag, size = 0x8, scoped, tag = 'scoped memory for fuse_block_mamba_forward.3']
    #allocation15 [shape = 'u8[1024]{0}', space=vmem, size = 0x400, scoped, tag = 'input window, operand 4']
    #allocation16 [shape = 'u8[131072]{0}', space=vmem, size = 0x20000, scoped, tag = 'input window, operand 5']
    #allocation17 [shape = 's32[2]{0}', space=sflag, size = 0x8, scoped, tag = 'scoped memory for fuse_block_mamba_forward.3']
    #allocation18 [shape = 'u8[1024]{0}', space=vmem, size = 0x400, scoped, tag = 'input window, operand 6']
    #allocation19 [shape = 'u8[16384]{0}', space=vmem, size = 0x4000, scoped, tag = 'input window, operand 7']
    #allocation20 [shape = 's32[2]{0}', space=sflag, size = 0x8, scoped, tag = 'scoped memory for fuse_block_mamba_forward.3']
    #allocation21 [shape = 'u8[1024]{0}', space=vmem, size = 0x400, scoped, tag = 'input window, operand 8']
    #allocation22 [shape = 'u8[65536]{0}', space=vmem, size = 0x10000, scoped, tag = 'input window, operand 9']
    #allocation23 [shape = 's32[2]{0}', space=sflag, size = 0x8, scoped, tag = 'scoped memory for fuse_block_mamba_forward.3']
    #allocation24 [shape = 'u8[32768]{0}', space=vmem, size = 0x8000, scoped, tag = 'output window, operand 0, single buffered']
    %15 = vsyncpa [#allocation8], 0
    %16 = vsyncpa [#allocation11], 0
    %s17 = scalar_lea.sflag [#allocation11], 1
    %18 = vsyncpa %s17, 0
    %19 = vsyncpa [#allocation14], 0
    %s20 = scalar_lea.sflag [#allocation14], 1
    %21 = vsyncpa %s20, 0
    %22 = vsyncpa [#allocation17], 0
    %s23 = scalar_lea.sflag [#allocation17], 1
    %24 = vsyncpa %s23, 0
    %25 = vsyncpa [#allocation20], 0
    %s26 = scalar_lea.sflag [#allocation20], 1
    %27 = vsyncpa %s26, 0
    %28 = vsyncpa [#allocation23], 0
    %s29 = scalar_lea.sflag [#allocation23], 1
    %30 = vsyncpa %s29, 0
    %31 = vsyncpa [#allocation9], 0
    loop: start=0, step=1, limit=4
    $region2: #{fuse_block_mamba_forward.3} parent=1 // loop_pre_header
      _
    $region3: #{fuse_block_mamba_forward.3} parent=1 // loop_header
      %s33 = sphi 0, %s37
      %p34 = scmp.ge.s32.totalorder %s33, 4
      %s40 = sphi 0, %s52
      %s41 = sphi 0, %s48
      %s42 = sphi 0, %s40
      %s43 = sphi 0, %s41
      %s44 = sphi 0, %s42
      %s45 = sphi 0, %s43
      %s55 = sphi 0, %s57
      %s58 = sphi 0, %s55
      %s59 = sphi 0, %s58
      %s75 = sphi 0, %s59
      %s81 = sphi 0, %s83
      %s84 = sphi 0, %s81
      %s85 = sphi 0, %s84
      %s101 = sphi 0, %s85
      %s107 = sphi 0, %s109
      %s110 = sphi 0, %s107
      %s111 = sphi 0, %s110
      %s127 = sphi 0, %s111
      %s133 = sphi 0, %s135
      %s136 = sphi 0, %s133
      %s137 = sphi 0, %s136
      %s153 = sphi 0, %s137
      %s159 = sphi 0, %s161
      %s162 = sphi 0, %s159
      %s163 = sphi 0, %s162
      %s179 = sphi 0, %s163
      %s185 = sphi 0, %s187
      %s188 = sphi 0, %s185
      %s189 = sphi 0, %s188
      %s205 = sphi 0, %s189
      %s211 = sphi 0, %s213
      %s214 = sphi 0, %s211
      %s215 = sphi 0, %s214
      %s231 = sphi 0, %s215
      %s237 = sphi 0, %s239
      %s240 = sphi 0, %s237
      %s241 = sphi 0, %s240
      %s257 = sphi 0, %s241
      %s263 = sphi 0, %s265
      %s266 = sphi 0, %s263
      %s267 = sphi 0, %s266
      %s283 = sphi 0, %s267
      %s289 = sphi 0, %s291
      %s292 = sphi 0, %s289
      %s293 = sphi 0, %s292
      %s309 = sphi 0, %s293
      %s315 = sphi 0, %s317
      %s318 = sphi 0, %s315
      %s319 = sphi 0, %s318
      %s335 = sphi 0, %s319
    $region4: #{fuse_block_mamba_forward.3} parent=1 // loop_header_branch
      %36 = sbr.rel (%p34) target = $region8
    $region5: #{fuse_block_mamba_forward.3} parent=1 // loop_body
      %s38 = ssub.s32 %s33, 1
      %s39 = ssub.s32 %s33, 2
      %s46 = sadd.s32 1, %s41
      %p47 = scmp.ge.s32.totalorder %s46, 2
      %s48 = scalar_select %p47, 0, %s46
      %s49 = sadd.s32 1, %s40
      %s50 = scalar_select %p47, %s49, %s40
      %p51 = scmp.ge.s32.totalorder %s50, 1
      %s52 = scalar_select %p51, 0, %s50
      %s53 = ssub.s32 %s40, %s52
      %p54 = scmp.eq.s32.totalorder %s53, 0
      %s56 = sadd.s32 %s55, 1
      %s57 = scalar_select %p54, %s55, %s56
      %p60 = pneg %p54
      %p61 = scmp.eq.s32.totalorder %s33, 1
      %p62 = por %p60, %p61
      %p63 = scmp.ne.s32.totalorder %s55, %s58
      %p64 = scmp.eq.s32.totalorder %s33, 0
      %p65 = por %p63, %p64
      %p66 = scmp.ne.s32.totalorder %s55, %s58
      %p67 = scmp.eq.s32.totalorder %s38, 1
      %p68 = por %p66, %p67
      %p69 = scmp.ne.s32.totalorder %s58, %s59
      %p70 = scmp.eq.s32.totalorder %s38, 0
      %p71 = por %p69, %p70
      %p72 = scmp.ne.s32.totalorder %s58, %s59
      %p73 = scmp.eq.s32.totalorder %s39, 1
      %p74 = por %p72, %p73
      %p76 = scmp.ne.s32.totalorder %s59, %s75
      %p77 = scmp.eq.s32.totalorder %s39, 0
      %p78 = por %p76, %p77
      %s79 = ssub.s32 %s41, %s48
      %p80 = scmp.eq.s32.totalorder %s79, 0
      %s82 = sadd.s32 %s81, 1
      %s83 = scalar_select %p80, %s81, %s82
      %p86 = pneg %p80
      %p87 = scmp.eq.s32.totalorder %s33, 1
      %p88 = por %p86, %p87
      %p89 = scmp.ne.s32.totalorder %s81, %s84
      %p90 = scmp.eq.s32.totalorder %s33, 0
      %p91 = por %p89, %p90
      %p92 = scmp.ne.s32.totalorder %s81, %s84
      %p93 = scmp.eq.s32.totalorder %s38, 1
      %p94 = por %p92, %p93
      %p95 = scmp.ne.s32.totalorder %s84, %s85
      %p96 = scmp.eq.s32.totalorder %s38, 0
      %p97 = por %p95, %p96
      %p98 = scmp.ne.s32.totalorder %s84, %s85
      %p99 = scmp.eq.s32.totalorder %s39, 1
      %p100 = por %p98, %p99
      %p102 = scmp.ne.s32.totalorder %s85, %s101
      %p103 = scmp.eq.s32.totalorder %s39, 0
      %p104 = por %p102, %p103
      %s105 = ssub.s32 %s41, %s48
      %p106 = scmp.eq.s32.totalorder %s105, 0
      %s108 = sadd.s32 %s107, 1
      %s109 = scalar_select %p106, %s107, %s108
      %p112 = pneg %p106
      %p113 = scmp.eq.s32.totalorder %s33, 1
      %p114 = por %p112, %p113
      %p115 = scmp.ne.s32.totalorder %s107, %s110
      %p116 = scmp.eq.s32.totalorder %s33, 0
      %p117 = por %p115, %p116
      %p118 = scmp.ne.s32.totalorder %s107, %s110
      %p119 = scmp.eq.s32.totalorder %s38, 1
      %p120 = por %p118, %p119
      %p121 = scmp.ne.s32.totalorder %s110, %s111
      %p122 = scmp.eq.s32.totalorder %s38, 0
      %p123 = por %p121, %p122
      %p124 = scmp.ne.s32.totalorder %s110, %s111
      %p125 = scmp.eq.s32.totalorder %s39, 1
      %p126 = por %p124, %p125
      %p128 = scmp.ne.s32.totalorder %s111, %s127
      %p129 = scmp.eq.s32.totalorder %s39, 0
      %p130 = por %p128, %p129
      %s131 = ssub.s32 %s41, %s48
      %p132 = scmp.eq.s32.totalorder %s131, 0
      %s134 = sadd.s32 %s133, 1
      %s135 = scalar_select %p132, %s133, %s134
      %p138 = pneg %p132
      %p139 = scmp.eq.s32.totalorder %s33, 1
      %p140 = por %p138, %p139
      %p141 = scmp.ne.s32.totalorder %s133, %s136
      %p142 = scmp.eq.s32.totalorder %s33, 0
      %p143 = por %p141, %p142
      %p144 = scmp.ne.s32.totalorder %s133, %s136
      %p145 = scmp.eq.s32.totalorder %s38, 1
      %p146 = por %p144, %p145
      %p147 = scmp.ne.s32.totalorder %s136, %s137
      %p148 = scmp.eq.s32.totalorder %s38, 0
      %p149 = por %p147, %p148
      %p150 = scmp.ne.s32.totalorder %s136, %s137
      %p151 = scmp.eq.s32.totalorder %s39, 1
      %p152 = por %p150, %p151
      %p154 = scmp.ne.s32.totalorder %s137, %s153
      %p155 = scmp.eq.s32.totalorder %s39, 0
      %p156 = por %p154, %p155
      %s157 = ssub.s32 %s41, %s48
      %p158 = scmp.eq.s32.totalorder %s157, 0
      %s160 = sadd.s32 %s159, 1
      %s161 = scalar_select %p158, %s159, %s160
      %p164 = pneg %p158
      %p165 = scmp.eq.s32.totalorder %s33, 1
      %p166 = por %p164, %p165
      %p167 = scmp.ne.s32.totalorder %s159, %s162
      %p168 = scmp.eq.s32.totalorder %s33, 0
      %p169 = por %p167, %p168
      %p170 = scmp.ne.s32.totalorder %s159, %s162
      %p171 = scmp.eq.s32.totalorder %s38, 1
      %p172 = por %p170, %p171
      %p173 = scmp.ne.s32.totalorder %s162, %s163
      %p174 = scmp.eq.s32.totalorder %s38, 0
      %p175 = por %p173, %p174
      %p176 = scmp.ne.s32.totalorder %s162, %s163
      %p177 = scmp.eq.s32.totalorder %s39, 1
      %p178 = por %p176, %p177
      %p180 = scmp.ne.s32.totalorder %s163, %s179
      %p181 = scmp.eq.s32.totalorder %s39, 0
      %p182 = por %p180, %p181
      %s183 = ssub.s32 %s41, %s48
      %p184 = scmp.eq.s32.totalorder %s183, 0
      %s186 = sadd.s32 %s185, 1
      %s187 = scalar_select %p184, %s185, %s186
      %p190 = pneg %p184
      %p191 = scmp.eq.s32.totalorder %s33, 1
      %p192 = por %p190, %p191
      %p193 = scmp.ne.s32.totalorder %s185, %s188
      %p194 = scmp.eq.s32.totalorder %s33, 0
      %p195 = por %p193, %p194
      %p196 = scmp.ne.s32.totalorder %s185, %s188
      %p197 = scmp.eq.s32.totalorder %s38, 1
      %p198 = por %p196, %p197
      %p199 = scmp.ne.s32.totalorder %s188, %s189
      %p200 = scmp.eq.s32.totalorder %s38, 0
      %p201 = por %p199, %p200
      %p202 = scmp.ne.s32.totalorder %s188, %s189
      %p203 = scmp.eq.s32.totalorder %s39, 1
      %p204 = por %p202, %p203
      %p206 = scmp.ne.s32.totalorder %s189, %s205
      %p207 = scmp.eq.s32.totalorder %s39, 0
      %p208 = por %p206, %p207
      %s209 = ssub.s32 %s41, %s48
      %p210 = scmp.eq.s32.totalorder %s209, 0
      %s212 = sadd.s32 %s211, 1
      %s213 = scalar_select %p210, %s211, %s212
      %p216 = pneg %p210
      %p217 = scmp.eq.s32.totalorder %s33, 1
      %p218 = por %p216, %p217
      %p219 = scmp.ne.s32.totalorder %s211, %s214
      %p220 = scmp.eq.s32.totalorder %s33, 0
      %p221 = por %p219, %p220
      %p222 = scmp.ne.s32.totalorder %s211, %s214
      %p223 = scmp.eq.s32.totalorder %s38, 1
      %p224 = por %p222, %p223
      %p225 = scmp.ne.s32.totalorder %s214, %s215
      %p226 = scmp.eq.s32.totalorder %s38, 0
      %p227 = por %p225, %p226
      %p228 = scmp.ne.s32.totalorder %s214, %s215
      %p229 = scmp.eq.s32.totalorder %s39, 1
      %p230 = por %p228, %p229
      %p232 = scmp.ne.s32.totalorder %s215, %s231
      %p233 = scmp.eq.s32.totalorder %s39, 0
      %p234 = por %p232, %p233
      %s235 = ssub.s32 %s41, %s48
      %p236 = scmp.eq.s32.totalorder %s235, 0
      %s238 = sadd.s32 %s237, 1
      %s239 = scalar_select %p236, %s237, %s238
      %p242 = pneg %p236
      %p243 = scmp.eq.s32.totalorder %s33, 1
      %p244 = por %p242, %p243
      %p245 = scmp.ne.s32.totalorder %s237, %s240
      %p246 = scmp.eq.s32.totalorder %s33, 0
      %p247 = por %p245, %p246
      %p248 = scmp.ne.s32.totalorder %s237, %s240
      %p249 = scmp.eq.s32.totalorder %s38, 1
      %p250 = por %p248, %p249
      %p251 = scmp.ne.s32.totalorder %s240, %s241
      %p252 = scmp.eq.s32.totalorder %s38, 0
      %p253 = por %p251, %p252
      %p254 = scmp.ne.s32.totalorder %s240, %s241
      %p255 = scmp.eq.s32.totalorder %s39, 1
      %p256 = por %p254, %p255
      %p258 = scmp.ne.s32.totalorder %s241, %s257
      %p259 = scmp.eq.s32.totalorder %s39, 0
      %p260 = por %p258, %p259
      %s261 = ssub.s32 %s41, %s48
      %p262 = scmp.eq.s32.totalorder %s261, 0
      %s264 = sadd.s32 %s263, 1
      %s265 = scalar_select %p262, %s263, %s264
      %p268 = pneg %p262
      %p269 = scmp.eq.s32.totalorder %s33, 1
      %p270 = por %p268, %p269
      %p271 = scmp.ne.s32.totalorder %s263, %s266
      %p272 = scmp.eq.s32.totalorder %s33, 0
      %p273 = por %p271, %p272
      %p274 = scmp.ne.s32.totalorder %s263, %s266
      %p275 = scmp.eq.s32.totalorder %s38, 1
      %p276 = por %p274, %p275
      %p277 = scmp.ne.s32.totalorder %s266, %s267
      %p278 = scmp.eq.s32.totalorder %s38, 0
      %p279 = por %p277, %p278
      %p280 = scmp.ne.s32.totalorder %s266, %s267
      %p281 = scmp.eq.s32.totalorder %s39, 1
      %p282 = por %p280, %p281
      %p284 = scmp.ne.s32.totalorder %s267, %s283
      %p285 = scmp.eq.s32.totalorder %s39, 0
      %p286 = por %p284, %p285
      %s287 = ssub.s32 %s41, %s48
      %p288 = scmp.eq.s32.totalorder %s287, 0
      %s290 = sadd.s32 %s289, 1
      %s291 = scalar_select %p288, %s289, %s290
      %p294 = pneg %p288
      %p295 = scmp.eq.s32.totalorder %s33, 1
      %p296 = por %p294, %p295
      %p297 = scmp.ne.s32.totalorder %s289, %s292
      %p298 = scmp.eq.s32.totalorder %s33, 0
      %p299 = por %p297, %p298
      %p300 = scmp.ne.s32.totalorder %s289, %s292
      %p301 = scmp.eq.s32.totalorder %s38, 1
      %p302 = por %p300, %p301
      %p303 = scmp.ne.s32.totalorder %s292, %s293
      %p304 = scmp.eq.s32.totalorder %s38, 0
      %p305 = por %p303, %p304
      %p306 = scmp.ne.s32.totalorder %s292, %s293
      %p307 = scmp.eq.s32.totalorder %s39, 1
      %p308 = por %p306, %p307
      %p310 = scmp.ne.s32.totalorder %s293, %s309
      %p311 = scmp.eq.s32.totalorder %s39, 0
      %p312 = por %p310, %p311
      %s313 = ssub.s32 %s40, %s52
      %p314 = scmp.eq.s32.totalorder %s313, 0
      %s316 = sadd.s32 %s315, 1
      %s317 = scalar_select %p314, %s315, %s316
      %p320 = pneg %p314
      %p321 = scmp.eq.s32.totalorder %s33, 1
      %p322 = por %p320, %p321
      %p323 = scmp.ne.s32.totalorder %s315, %s318
      %p324 = scmp.eq.s32.totalorder %s33, 0
      %p325 = por %p323, %p324
      %p326 = scmp.ne.s32.totalorder %s315, %s318
      %p327 = scmp.eq.s32.totalorder %s38, 1
      %p328 = por %p326, %p327
      %p329 = scmp.ne.s32.totalorder %s318, %s319
      %p330 = scmp.eq.s32.totalorder %s38, 0
      %p331 = por %p329, %p330
      %p332 = scmp.ne.s32.totalorder %s318, %s319
      %p333 = scmp.eq.s32.totalorder %s39, 1
      %p334 = por %p332, %p333
      %p336 = scmp.ne.s32.totalorder %s319, %s335
      %p337 = scmp.eq.s32.totalorder %s39, 0
      %p338 = por %p336, %p337
      %p339 = scmp.le.s32.totalorder 1, %s33
      %p340 = scmp.lt.s32.totalorder %s33, 3
      %p341 = pnand %p339, %p340
      %p342 = pneg %p341
      // Predicated region
      $region9: #{fuse_block_mamba_forward.3} parent=5 // pred_check
        _
      $region10: #{fuse_block_mamba_forward.3} parent=5 // pred_check_branch
        %344 = sbr.rel (%p341) target = $region12
      $region11: #{fuse_block_mamba_forward.3} parent=5 // pred_region
        %s345 = ssub.s32 %s33, 1
        // Predicated region
        $region13: #{fuse_block_mamba_forward.3} parent=11 // pred_check
          %p346 = pneg %p71
        $region14: #{fuse_block_mamba_forward.3} parent=11 // pred_check_branch
          %348 = sbr.rel (%p346) target = $region16
        $region15: #{fuse_block_mamba_forward.3} parent=11 // pred_region
          %s349 = smul.u32 8, %s42
          %s351 = ssub.s32 1024, 1024
          %352 = vsyncadd [#allocation8], %s351
          %s353 = smul.addr %s349, 128
          %s354 = scalar_lea.hbm %s0, %s353
          %s355 = sshll.u32 [#allocation7], 4
          %s356 = int_to_ptr.vmem [resolvable:$true] %s355
          %361 = dma.hbm_to_vmem [thread:$0]  %s354, 1024, %s356, [#allocation8], 128, 128, 8
        $region16: #{fuse_block_mamba_forward.3} parent=11 // pred_fallthru
          _
      $region12: #{fuse_block_mamba_forward.3} parent=5 // pred_fallthru
        _
      %p362 = scmp.lt.s32.totalorder %s33, 2
      // Predicated region
      $region17: #{fuse_block_mamba_forward.3} parent=5 // pred_check
        %p363 = pneg %p362
      $region18: #{fuse_block_mamba_forward.3} parent=5 // pred_check_branch
        %365 = sbr.rel (%p363) target = $region20
      $region19: #{fuse_block_mamba_forward.3} parent=5 // pred_region
        // Predicated region
        $region21: #{fuse_block_mamba_forward.3} parent=19 // pred_check
          %p366 = pneg %p91
        $region22: #{fuse_block_mamba_forward.3} parent=19 // pred_check_branch
          %368 = sbr.rel (%p366) target = $region24
        $region23: #{fuse_block_mamba_forward.3} parent=19 // pred_region
          %s369 = sand.u32 %s33, 1
          %s370 = scalar_lea.sflag [#allocation11], %s369
          %s371 = sand.u32 %s81, 1
          %s372 = scalar_lea.vmem [#allocation10], %s371
          %s374 = ssub.s32 16, 16
          %375 = vsyncadd %s370, %s374
          %s376 = smul.addr %s41, 16
          %s377 = scalar_lea.hbm %s1, %s376
          %s379 = sshll.u32 %s372, 4
          %s380 = int_to_ptr.vmem [resolvable:$true] %s379
          %382 = dma.hbm_to_vmem [thread:$0]  %s377, 16, %s380, %s370
        $region24: #{fuse_block_mamba_forward.3} parent=19 // pred_fallthru
          _
        // Predicated region
        $region25: #{fuse_block_mamba_forward.3} parent=19 // pred_check
          %p383 = pneg %p117
        $region26: #{fuse_block_mamba_forward.3} parent=19 // pred_check_branch
          %385 = sbr.rel (%p383) target = $region28
        $region27: #{fuse_block_mamba_forward.3} parent=19 // pred_region
          %s386 = sand.u32 %s33, 1
          %s387 = scalar_lea.sflag [#allocation11], %s386
          %s388 = sand.u32 %s107, 1
          %s389 = smul.addr %s388, 64
          %s390 = scalar_lea.vmem [#allocation12], %s389
          %s392 = ssub.s32 1024, 1024
          %393 = vsyncadd %s387, %s392
          %s394 = smul.addr %s41, 16
          %s395 = smul.addr %s394, 64
          %s396 = scalar_lea.hbm %s2, %s395
          %s397 = sshll.u32 %s390, 4
          %s398 = int_to_ptr.vmem [resolvable:$true] %s397
          %403 = dma.hbm_to_vmem [thread:$0]  %s396, 1024, %s398, %s387, 128, 128, 8
        $region28: #{fuse_block_mamba_forward.3} parent=19 // pred_fallthru
          _
        // Predicated region
        $region29: #{fuse_block_mamba_forward.3} parent=19 // pred_check
          %p404 = pneg %p143
        $region30: #{fuse_block_mamba_forward.3} parent=19 // pred_check_branch
          %406 = sbr.rel (%p404) target = $region32
        $region31: #{fuse_block_mamba_forward.3} parent=19 // pred_region
          %s407 = sand.u32 %s33, 1
          %s408 = scalar_lea.sflag [#allocation14], %s407
          %s409 = sand.u32 %s133, 1
          %s410 = smul.addr %s409, 4
          %s411 = scalar_lea.vmem [#allocation13], %s410
          %s413 = ssub.s32 64, 64
          %414 = vsyncadd %s408, %s413
          %s415 = smul.addr %s41, 64
          %s416 = scalar_lea.hbm %s3, %s415
          %s418 = sshll.u32 %s411, 4
          %s419 = int_to_ptr.vmem [resolvable:$true] %s418
          %421 = dma.hbm_to_vmem [thread:$0]  %s416, 64, %s419, %s408
        $region32: #{fuse_block_mamba_forward.3} parent=19 // pred_fallthru
          _
        // Predicated region
        $region33: #{fuse_block_mamba_forward.3} parent=19 // pred_check
          %p422 = pneg %p169
        $region34: #{fuse_block_mamba_forward.3} parent=19 // pred_check_branch
          %424 = sbr.rel (%p422) target = $region36
        $region35: #{fuse_block_mamba_forward.3} parent=19 // pred_region
          %s425 = sand.u32 %s33, 1
          %s426 = scalar_lea.sflag [#allocation14], %s425
          %s427 = sand.u32 %s159, 1
          %s428 = scalar_lea.vmem [#allocation15], %s427
          %s430 = ssub.s32 16, 16
          %431 = vsyncadd %s426, %s430
          %s432 = smul.addr %s41, 16
          %s433 = scalar_lea.hbm %s4, %s432
          %s435 = sshll.u32 %s428, 4
          %s436 = int_to_ptr.vmem [resolvable:$true] %s435
          %438 = dma.hbm_to_vmem [thread:$0]  %s433, 16, %s436, %s426
        $region36: #{fuse_block_mamba_forward.3} parent=19 // pred_fallthru
          _
        // Predicated region
        $region37: #{fuse_block_mamba_forward.3} parent=19 // pred_check
          %p439 = pneg %p195
        $region38: #{fuse_block_mamba_forward.3} parent=19 // pred_check_branch
          %441 = sbr.rel (%p439) target = $region40
        $region39: #{fuse_block_mamba_forward.3} parent=19 // pred_region
          %s442 = sand.u32 %s33, 1
          %s443 = scalar_lea.sflag [#allocation17], %s442
          %s444 = sand.u32 %s185, 1
          %s445 = smul.addr %s444, 128
          %s446 = scalar_lea.vmem [#allocation16], %s445
          %s448 = ssub.s32 2048, 2048
          %449 = vsyncadd %s443, %s448
          %s450 = smul.addr %s41, 32
          %s451 = smul.addr %s450, 64
          %s452 = scalar_lea.hbm %s5, %s451
          %s453 = sshll.u32 %s446, 4
          %s454 = int_to_ptr.vmem [resolvable:$true] %s453
          %459 = dma.hbm_to_vmem [thread:$0]  %s452, 2048, %s454, %s443, 128, 128, 8
        $region40: #{fuse_block_mamba_forward.3} parent=19 // pred_fallthru
          _
        // Predicated region
        $region41: #{fuse_block_mamba_forward.3} parent=19 // pred_check
          %p460 = pneg %p221
        $region42: #{fuse_block_mamba_forward.3} parent=19 // pred_check_branch
          %462 = sbr.rel (%p460) target = $region44
        $region43: #{fuse_block_mamba_forward.3} parent=19 // pred_region
          %s463 = sand.u32 %s33, 1
          %s464 = scalar_lea.sflag [#allocation17], %s463
          %s465 = sand.u32 %s211, 1
          %s466 = scalar_lea.vmem [#allocation18], %s465
          %s468 = ssub.s32 16, 16
          %469 = vsyncadd %s464, %s468
          %s470 = smul.addr %s41, 16
          %s471 = scalar_lea.hbm %s6, %s470
          %s473 = sshll.u32 %s466, 4
          %s474 = int_to_ptr.vmem [resolvable:$true] %s473
          %476 = dma.hbm_to_vmem [thread:$0]  %s471, 16, %s474, %s464
        $region44: #{fuse_block_mamba_forward.3} parent=19 // pred_fallthru
          _
        // Predicated region
        $region45: #{fuse_block_mamba_forward.3} parent=19 // pred_check
          %p477 = pneg %p247
        $region46: #{fuse_block_mamba_forward.3} parent=19 // pred_check_branch
          %479 = sbr.rel (%p477) target = $region48
        $region47: #{fuse_block_mamba_forward.3} parent=19 // pred_region
          %s480 = sand.u32 %s33, 1
          %s481 = scalar_lea.sflag [#allocation20], %s480
          %s482 = sand.u32 %s237, 1
          %s483 = smul.addr %s482, 16
          %s484 = scalar_lea.vmem [#allocation19], %s483
          %s486 = ssub.s32 256, 256
          %487 = vsyncadd %s481, %s486
          %s488 = smul.addr %s41, 2
          %s489 = smul.addr %s488, 128
          %s490 = scalar_lea.hbm %s7, %s489
          %s491 = sshll.u32 %s484, 4
          %s492 = int_to_ptr.vmem [resolvable:$true] %s491
          %497 = dma.hbm_to_vmem [thread:$0]  %s490, 256, %s492, %s481, 128, 128, 8
        $region48: #{fuse_block_mamba_forward.3} parent=19 // pred_fallthru
          _
        // Predicated region
        $region49: #{fuse_block_mamba_forward.3} parent=19 // pred_check
          %p498 = pneg %p273
        $region50: #{fuse_block_mamba_forward.3} parent=19 // pred_check_branch
          %500 = sbr.rel (%p498) target = $region52
        $region51: #{fuse_block_mamba_forward.3} parent=19 // pred_region
          %s501 = sand.u32 %s33, 1
          %s502 = scalar_lea.sflag [#allocation20], %s501
          %s503 = sand.u32 %s263, 1
          %s504 = scalar_lea.vmem [#allocation21], %s503
          %s506 = ssub.s32 16, 16
          %507 = vsyncadd %s502, %s506
          %s508 = smul.addr %s41, 16
          %s509 = scalar_lea.hbm %s8, %s508
          %s511 = sshll.u32 %s504, 4
          %s512 = int_to_ptr.vmem [resolvable:$true] %s511
          %514 = dma.hbm_to_vmem [thread:$0]  %s509, 16, %s512, %s502
        $region52: #{fuse_block_mamba_forward.3} parent=19 // pred_fallthru
          _
        // Predicated region
        $region53: #{fuse_block_mamba_forward.3} parent=19 // pred_check
          %p515 = pneg %p299
        $region54: #{fuse_block_mamba_forward.3} parent=19 // pred_check_branch
          %517 = sbr.rel (%p515) target = $region56
        $region55: #{fuse_block_mamba_forward.3} parent=19 // pred_region
          %s518 = sand.u32 %s289, 1
          %s519 = scalar_lea.sflag [#allocation23], %s518
          %s520 = sand.u32 %s289, 1
          %s521 = smul.addr %s520, 64
          %s522 = scalar_lea.vmem [#allocation22], %s521
          %s524 = ssub.s32 1024, 1024
          %525 = vsyncadd %s519, %s524
          %s526 = smul.addr %s41, 16
          %s527 = smul.addr %s526, 64
          %s528 = scalar_lea.hbm %s9, %s527
          %s529 = sshll.u32 %s522, 4
          %s530 = int_to_ptr.vmem [resolvable:$true] %s529
          %535 = dma.hbm_to_vmem [thread:$0]  %s528, 1024, %s530, %s519, 64, 64, 4
        $region56: #{fuse_block_mamba_forward.3} parent=19 // pred_fallthru
          _
      $region20: #{fuse_block_mamba_forward.3} parent=5 // pred_fallthru
        _
      %p536 = scmp.le.s32.totalorder 1, %s33
      %p537 = scmp.lt.s32.totalorder %s33, 3
      %p538 = pnand %p536, %p537
      %p539 = pneg %p538
      // Predicated region
      $region57: #{fuse_block_mamba_forward.3} parent=5 // pred_check
        _
      $region58: #{fuse_block_mamba_forward.3} parent=5 // pred_check_branch
        %541 = sbr.rel (%p538) target = $region60
      $region59: #{fuse_block_mamba_forward.3} parent=5 // pred_region
        %s542 = ssub.s32 %s33, 1
        // Predicated region
        $region61: #{fuse_block_mamba_forward.3} parent=59 // pred_check
          %p543 = pneg %p71
        $region62: #{fuse_block_mamba_forward.3} parent=59 // pred_check_branch
          %545 = sbr.rel (%p543) target = $region64
        $region63: #{fuse_block_mamba_forward.3} parent=59 // pred_region
          %546 = dma.done [#allocation8], 1024
        $region64: #{fuse_block_mamba_forward.3} parent=59 // pred_fallthru
          _
        %s547 = sand.u32 %s38, 1
        %s548 = scalar_lea.sflag [#allocation11], %s547
        %s549 = sand.u32 %s84, 1
        %s550 = scalar_lea.vmem [#allocation10], %s549
        // Predicated region
        $region65: #{fuse_block_mamba_forward.3} parent=59 // pred_check
          %p551 = pneg %p97
        $region66: #{fuse_block_mamba_forward.3} parent=59 // pred_check_branch
          %553 = sbr.rel (%p551) target = $region68
        $region67: #{fuse_block_mamba_forward.3} parent=59 // pred_region
          %554 = dma.done %s548, 16
        $region68: #{fuse_block_mamba_forward.3} parent=59 // pred_fallthru
          _
        %s555 = sand.u32 %s38, 1
        %s556 = scalar_lea.sflag [#allocation11], %s555
        %s557 = sand.u32 %s110, 1
        %s558 = smul.addr %s557, 64
        %s559 = scalar_lea.vmem [#allocation12], %s558
        // Predicated region
        $region69: #{fuse_block_mamba_forward.3} parent=59 // pred_check
          %p560 = pneg %p123
        $region70: #{fuse_block_mamba_forward.3} parent=59 // pred_check_branch
          %562 = sbr.rel (%p560) target = $region72
        $region71: #{fuse_block_mamba_forward.3} parent=59 // pred_region
          %563 = dma.done %s556, 1024
        $region72: #{fuse_block_mamba_forward.3} parent=59 // pred_fallthru
          _
        %s564 = sand.u32 %s38, 1
        %s565 = scalar_lea.sflag [#allocation14], %s564
        %s566 = sand.u32 %s136, 1
        %s567 = smul.addr %s566, 4
        %s568 = scalar_lea.vmem [#allocation13], %s567
        // Predicated region
        $region73: #{fuse_block_mamba_forward.3} parent=59 // pred_check
          %p569 = pneg %p149
        $region74: #{fuse_block_mamba_forward.3} parent=59 // pred_check_branch
          %571 = sbr.rel (%p569) target = $region76
        $region75: #{fuse_block_mamba_forward.3} parent=59 // pred_region
          %572 = dma.done %s565, 64
        $region76: #{fuse_block_mamba_forward.3} parent=59 // pred_fallthru
          _
        %s573 = sand.u32 %s38, 1
        %s574 = scalar_lea.sflag [#allocation14], %s573
        %s575 = sand.u32 %s162, 1
        %s576 = scalar_lea.vmem [#allocation15], %s575
        // Predicated region
        $region77: #{fuse_block_mamba_forward.3} parent=59 // pred_check
          %p577 = pneg %p175
        $region78: #{fuse_block_mamba_forward.3} parent=59 // pred_check_branch
          %579 = sbr.rel (%p577) target = $region80
        $region79: #{fuse_block_mamba_forward.3} parent=59 // pred_region
          %580 = dma.done %s574, 16
        $region80: #{fuse_block_mamba_forward.3} parent=59 // pred_fallthru
          _
        %s581 = sand.u32 %s38, 1
        %s582 = scalar_lea.sflag [#allocation17], %s581
        %s583 = sand.u32 %s188, 1
        %s584 = smul.addr %s583, 128
        %s585 = scalar_lea.vmem [#allocation16], %s584
        // Predicated region
        $region81: #{fuse_block_mamba_forward.3} parent=59 // pred_check
          %p586 = pneg %p201
        $region82: #{fuse_block_mamba_forward.3} parent=59 // pred_check_branch
          %588 = sbr.rel (%p586) target = $region84
        $region83: #{fuse_block_mamba_forward.3} parent=59 // pred_region
          %589 = dma.done %s582, 2048
        $region84: #{fuse_block_mamba_forward.3} parent=59 // pred_fallthru
          _
        %s590 = sand.u32 %s38, 1
        %s591 = scalar_lea.sflag [#allocation17], %s590
        %s592 = sand.u32 %s214, 1
        %s593 = scalar_lea.vmem [#allocation18], %s592
        // Predicated region
        $region85: #{fuse_block_mamba_forward.3} parent=59 // pred_check
          %p594 = pneg %p227
        $region86: #{fuse_block_mamba_forward.3} parent=59 // pred_check_branch
          %596 = sbr.rel (%p594) target = $region88
        $region87: #{fuse_block_mamba_forward.3} parent=59 // pred_region
          %597 = dma.done %s591, 16
        $region88: #{fuse_block_mamba_forward.3} parent=59 // pred_fallthru
          _
        %s598 = sand.u32 %s38, 1
        %s599 = scalar_lea.sflag [#allocation20], %s598
        %s600 = sand.u32 %s240, 1
        %s601 = smul.addr %s600, 16
        %s602 = scalar_lea.vmem [#allocation19], %s601
        // Predicated region
        $region89: #{fuse_block_mamba_forward.3} parent=59 // pred_check
          %p603 = pneg %p253
        $region90: #{fuse_block_mamba_forward.3} parent=59 // pred_check_branch
          %605 = sbr.rel (%p603) target = $region92
        $region91: #{fuse_block_mamba_forward.3} parent=59 // pred_region
          %606 = dma.done %s599, 256
        $region92: #{fuse_block_mamba_forward.3} parent=59 // pred_fallthru
          _
        %s607 = sand.u32 %s38, 1
        %s608 = scalar_lea.sflag [#allocation20], %s607
        %s609 = sand.u32 %s266, 1
        %s610 = scalar_lea.vmem [#allocation21], %s609
        // Predicated region
        $region93: #{fuse_block_mamba_forward.3} parent=59 // pred_check
          %p611 = pneg %p279
        $region94: #{fuse_block_mamba_forward.3} parent=59 // pred_check_branch
          %613 = sbr.rel (%p611) target = $region96
        $region95: #{fuse_block_mamba_forward.3} parent=59 // pred_region
          %614 = dma.done %s608, 16
        $region96: #{fuse_block_mamba_forward.3} parent=59 // pred_fallthru
          _
        %s615 = sand.u32 %s292, 1
        %s616 = scalar_lea.sflag [#allocation23], %s615
        %s617 = sand.u32 %s292, 1
        %s618 = smul.addr %s617, 64
        %s619 = scalar_lea.vmem [#allocation22], %s618
        // Predicated region
        $region97: #{fuse_block_mamba_forward.3} parent=59 // pred_check
          %p620 = pneg %p305
        $region98: #{fuse_block_mamba_forward.3} parent=59 // pred_check_branch
          %622 = sbr.rel (%p620) target = $region100
        $region99: #{fuse_block_mamba_forward.3} parent=59 // pred_region
          %623 = dma.done %s616, 1024
        $region100: #{fuse_block_mamba_forward.3} parent=59 // pred_fallthru
          _
        %p624 = pneg %p71
        %p625 = pneg %p68
        %s626 = sand.u32 %s38, 1
        %s627 = scalar_lea.sflag [#allocation11], %s626
        %s628 = sand.u32 %s84, 1
        %s629 = scalar_lea.vmem [#allocation10], %s628
        %p630 = pneg %p97
        %p631 = pneg %p94
        %s632 = sand.u32 %s38, 1
        %s633 = scalar_lea.sflag [#allocation11], %s632
        %s634 = sand.u32 %s110, 1
        %s635 = smul.addr %s634, 64
        %s636 = scalar_lea.vmem [#allocation12], %s635
        %p637 = pneg %p123
        %p638 = pneg %p120
        %s639 = sand.u32 %s38, 1
        %s640 = scalar_lea.sflag [#allocation14], %s639
        %s641 = sand.u32 %s136, 1
        %s642 = smul.addr %s641, 4
        %s643 = scalar_lea.vmem [#allocation13], %s642
        %p644 = pneg %p149
        %p645 = pneg %p146
        %s646 = sand.u32 %s38, 1
        %s647 = scalar_lea.sflag [#allocation14], %s646
        %s648 = sand.u32 %s162, 1
        %s649 = scalar_lea.vmem [#allocation15], %s648
        %p650 = pneg %p175
        %p651 = pneg %p172
        %s652 = sand.u32 %s38, 1
        %s653 = scalar_lea.sflag [#allocation17], %s652
        %s654 = sand.u32 %s188, 1
        %s655 = smul.addr %s654, 128
        %s656 = scalar_lea.vmem [#allocation16], %s655
        %p657 = pneg %p201
        %p658 = pneg %p198
        %s659 = sand.u32 %s38, 1
        %s660 = scalar_lea.sflag [#allocation17], %s659
        %s661 = sand.u32 %s214, 1
        %s662 = scalar_lea.vmem [#allocation18], %s661
        %p663 = pneg %p227
        %p664 = pneg %p224
        %s665 = sand.u32 %s38, 1
        %s666 = scalar_lea.sflag [#allocation20], %s665
        %s667 = sand.u32 %s240, 1
        %s668 = smul.addr %s667, 16
        %s669 = scalar_lea.vmem [#allocation19], %s668
        %p670 = pneg %p253
        %p671 = pneg %p250
        %s672 = sand.u32 %s38, 1
        %s673 = scalar_lea.sflag [#allocation20], %s672
        %s674 = sand.u32 %s266, 1
        %s675 = scalar_lea.vmem [#allocation21], %s674
        %p676 = pneg %p279
        %p677 = pneg %p276
        %s678 = sand.u32 %s292, 1
        %s679 = scalar_lea.sflag [#allocation23], %s678
        %s680 = sand.u32 %s292, 1
        %s681 = smul.addr %s680, 64
        %s682 = scalar_lea.vmem [#allocation22], %s681
        %p683 = pneg %p305
        %p684 = pneg %p302
        %p685 = pneg %p331
        %p686 = pneg %p328
        %s687 = smul.u32 8, %s42
        %s688 = smul.u32 8, %s42
        %p690 = scmp.eq.s32.totalorder %s43, 0
        // Predicated region
        $region101: #{fuse_block_mamba_forward.3} parent=59 // pred_check
          %p691 = pneg %p690
        $region102: #{fuse_block_mamba_forward.3} parent=59 // pred_check_branch
          %693 = sbr.rel (%p691) target = $region104
        $region103: #{fuse_block_mamba_forward.3} parent=59 // pred_region
          %v694 = vld [vmem:[#allocation7] sm:$0xff]
          %v695 = vld [vmem:[#allocation7 + $0x8] sm:$0xff]
          %v696 = vld [vmem:[#allocation7 + $0x10] sm:$0xff]
          %v697 = vld [vmem:[#allocation7 + $0x18] sm:$0xff]
          %v698 = vld [vmem:[#allocation7 + $0x20] sm:$0xff]
          %v699 = vld [vmem:[#allocation7 + $0x28] sm:$0xff]
          %v700 = vld [vmem:[#allocation7 + $0x30] sm:$0xff]
          %v701 = vld [vmem:[#allocation7 + $0x38] sm:$0xff]
          %vm702 = vcmask 523264
          %703 = vst.msk [vmem:[#allocation2] sm:$0xff] %vm702, %v694
          %704 = vst.msk [vmem:[#allocation2 + $0x8] sm:$0xff] %vm702, %v695
          %705 = vst.msk [vmem:[#allocation2 + $0x10] sm:$0xff] %vm702, %v696
          %706 = vst.msk [vmem:[#allocation2 + $0x18] sm:$0xff] %vm702, %v697
          %707 = vst.msk [vmem:[#allocation2 + $0x20] sm:$0xff] %vm702, %v698
          %708 = vst.msk [vmem:[#allocation2 + $0x28] sm:$0xff] %vm702, %v699
          %709 = vst.msk [vmem:[#allocation2 + $0x30] sm:$0xff] %vm702, %v700
          %710 = vst.msk [vmem:[#allocation2 + $0x38] sm:$0xff] %vm702, %v701
        $region104: #{fuse_block_mamba_forward.3} parent=59 // pred_fallthru
          _
        %v711 = vld [vmem:[#allocation2] sm:$0xff]
        %v712 = vld [vmem:[#allocation2 + $0x8] sm:$0xff]
        %v713 = vld [vmem:[#allocation2 + $0x10] sm:$0xff]
        %v714 = vld [vmem:[#allocation2 + $0x18] sm:$0xff]
        %v715 = vld [vmem:[#allocation2 + $0x20] sm:$0xff]
        %v716 = vld [vmem:[#allocation2 + $0x28] sm:$0xff]
        %v717 = vld [vmem:[#allocation2 + $0x30] sm:$0xff]
        %v718 = vld [vmem:[#allocation2 + $0x38] sm:$0xff]
        %v719 = vmul.f32 %v711, %v711
        %v720 = vmul.f32 %v712, %v712
        %v721 = vmul.f32 %v713, %v713
        %v722 = vmul.f32 %v714, %v714
        %v723 = vmul.f32 %v715, %v715
        %v724 = vmul.f32 %v716, %v716
        %v725 = vmul.f32 %v717, %v717
        %v726 = vmul.f32 %v718, %v718
        %vm727 = vcmask 523264
        %v728 = vsel %vm727, %v719, 0.0
        %729 = vadd.xlane.f32.xlu0 %v728
        %v730 = vpop.xlane.xlu0 %729
        %v731 = vsel %vm727, %v720, 0.0
        %732 = vadd.xlane.f32.xlu0 %v731
        %v733 = vpop.xlane.xlu0 %732
        %v734 = vsel %vm727, %v721, 0.0
        %735 = vadd.xlane.f32.xlu0 %v734
        %v736 = vpop.xlane.xlu0 %735
        %v737 = vsel %vm727, %v722, 0.0
        %738 = vadd.xlane.f32.xlu0 %v737
        %v739 = vpop.xlane.xlu0 %738
        %v740 = vsel %vm727, %v723, 0.0
        %741 = vadd.xlane.f32.xlu0 %v740
        %v742 = vpop.xlane.xlu0 %741
        %v743 = vsel %vm727, %v724, 0.0
        %744 = vadd.xlane.f32.xlu0 %v743
        %v745 = vpop.xlane.xlu0 %744
        %v746 = vsel %vm727, %v725, 0.0
        %747 = vadd.xlane.f32.xlu0 %v746
        %v748 = vpop.xlane.xlu0 %747
        %v749 = vsel %vm727, %v726, 0.0
        %750 = vadd.xlane.f32.xlu0 %v749
        %v751 = vpop.xlane.xlu0 %750
        %v752 = vrcp.pop 64.0
        %v753 = vmul.f32 %v730, %v752
        %v754 = vmul.f32 %v733, %v752
        %v755 = vmul.f32 %v736, %v752
        %v756 = vmul.f32 %v739, %v752
        %v757 = vmul.f32 %v742, %v752
        %v758 = vmul.f32 %v745, %v752
        %v759 = vmul.f32 %v748, %v752
        %v760 = vmul.f32 %v751, %v752
        %v761 = vadd.f32 %v753, 1e-05
        %v762 = vadd.f32 %v754, 1e-05
        %v763 = vadd.f32 %v755, 1e-05
        %v764 = vadd.f32 %v756, 1e-05
        %v765 = vadd.f32 %v757, 1e-05
        %v766 = vadd.f32 %v758, 1e-05
        %v767 = vadd.f32 %v759, 1e-05
        %v768 = vadd.f32 %v760, 1e-05
        %v769 = vrsqrt.pop %v761
        %v770 = vrsqrt.pop %v762
        %v771 = vrsqrt.pop %v763
        %v772 = vrsqrt.pop %v764
        %v773 = vrsqrt.pop %v765
        %v774 = vrsqrt.pop %v766
        %v775 = vrsqrt.pop %v767
        %v776 = vrsqrt.pop %v768
        %v777 = vmul.f32 %v711, %v769
        %v778 = vmul.f32 %v712, %v770
        %v779 = vmul.f32 %v713, %v771
        %v780 = vmul.f32 %v714, %v772
        %v781 = vmul.f32 %v715, %v773
        %v782 = vmul.f32 %v716, %v774
        %v783 = vmul.f32 %v717, %v775
        %v784 = vmul.f32 %v718, %v776
        %v785 = vld [vmem:[%s550] sm:$0x1]
        %v787 = vlaneseq
        %v788 = vshrl.u32 %v787, 7
        %v789 = vsub.s32 0, %v788
        %v790 = vrot.slane %v785, %v789
        %v792 = vmul.f32 %v777, %v790
        %v793 = vmul.f32 %v778, %v790
        %v794 = vmul.f32 %v779, %v790
        %v795 = vmul.f32 %v780, %v790
        %v796 = vmul.f32 %v781, %v790
        %v797 = vmul.f32 %v782, %v790
        %v798 = vmul.f32 %v783, %v790
        %v799 = vmul.f32 %v784, %v790
        %v800 = vpack.c.bf16 %v793, %v792
        %v801 = vpack.c.bf16 %v795, %v794
        %v802 = vpack.c.bf16 %v797, %v796
        %v803 = vpack.c.bf16 %v799, %v798
        %v804 = vld [vmem:[%s559] sm:$0xff]
        %v805 = vld [vmem:[%s559 + $0x8] sm:$0xff]
        %v806 = vld [vmem:[%s559 + $0x10] sm:$0xff]
        %v807 = vld [vmem:[%s559 + $0x18] sm:$0xff]
        %v808 = vld [vmem:[%s559 + $0x20] sm:$0xff]
        %v809 = vld [vmem:[%s559 + $0x28] sm:$0xff]
        %v810 = vld [vmem:[%s559 + $0x30] sm:$0xff]
        %v811 = vld [vmem:[%s559 + $0x38] sm:$0xff]
        %v820 = vunpack.c.l.b16 %v804
        %v821 = vunpack.c.h.b16 %v804
        %v822 = vunpack.c.l.b16 %v805
        %v823 = vunpack.c.h.b16 %v805
        %v824 = vunpack.c.l.b16 %v806
        %v825 = vunpack.c.h.b16 %v806
        %v826 = vunpack.c.l.b16 %v807
        %v827 = vunpack.c.h.b16 %v807
        %v828 = vunpack.c.l.b16 %v808
        %v829 = vunpack.c.h.b16 %v808
        %v830 = vunpack.c.l.b16 %v809
        %v831 = vunpack.c.h.b16 %v809
        %v832 = vunpack.c.l.b16 %v810
        %v833 = vunpack.c.h.b16 %v810
        %v834 = vunpack.c.l.b16 %v811
        %v835 = vunpack.c.h.b16 %v811
        %v836 = vpack.c.b16 %v822, %v820
        %v837 = vpack.c.b16 %v823, %v821
        %v838 = vpack.c.b16 %v826, %v824
        %v839 = vpack.c.b16 %v827, %v825
        %v840 = vpack.c.b16 %v830, %v828
        %v841 = vpack.c.b16 %v831, %v829
        %v842 = vpack.c.b16 %v834, %v832
        %v843 = vpack.c.b16 %v835, %v833
        %v853 = vsel %vm727, %v800, 0
        %v856 = vsel %vm727, %v801, 0
        %v859 = vsel %vm727, %v802, 0
        %v862 = vsel %vm727, %v803, 0
        %864 = vmatprep.subr.bf16.mxu0 %v837
        %865 = vmatpush1.bf16.msra.mxu0 %v836
        %866 = vmatprep.subr.bf16.mxu0 %v839
        %867 = vmatpush1.bf16.msra.mxu0 %v838
        %868 = vmatprep.subr.bf16.mxu0 %v841
        %869 = vmatpush1.bf16.msra.mxu0 %v840
        %870 = vmatprep.subr.bf16.mxu0 %v843
        %871 = vmatpush1.bf16.msra.mxu0 %v842
        %872 = vmatprep.subr.bf16.mxu0 0
        %873 = vmatpush1.bf16.msra.mxu0 0
        %874 = vmatprep.subr.bf16.mxu0 0
        %875 = vmatpush1.bf16.msra.mxu0 0
        %876 = vmatprep.subr.bf16.mxu0 0
        %877 = vmatpush1.bf16.msra.mxu0 0
        %878 = vmatprep.subr.bf16.mxu0 0
        %879 = vmatpush1.bf16.msra.mxu0 0
        %880 = vmatprep.subr.bf16.mxu0 0
        %881 = vmatpush1.bf16.msra.mxu0 0
        %882 = vmatprep.subr.bf16.mxu0 0
        %883 = vmatpush1.bf16.msra.mxu0 0
        %884 = vmatprep.subr.bf16.mxu0 0
        %885 = vmatpush1.bf16.msra.mxu0 0
        %886 = vmatprep.subr.bf16.mxu0 0
        %887 = vmatpush1.bf16.msra.mxu0 0
        %888 = vmatprep.subr.bf16.mxu0 0
        %889 = vmatpush1.bf16.msra.mxu0 0
        %890 = vmatprep.subr.bf16.mxu0 0
        %891 = vmatpush1.bf16.msra.mxu0 0
        %892 = vmatprep.subr.bf16.mxu0 0
        %893 = vmatpush1.bf16.msra.mxu0 0
        %894 = vmatprep.subr.bf16.mxu0 0
        %895 = vmatpush1.bf16.msra.mxu0 0
        %896 = vmatprep.mubr.bf16.mxu0 0
        %897 = vmatmul.mubr.bf16.gmra.mrb[0].mxu0 %v853
        %v898 = vpop.f32.mrb[0].mxu0
        %v899 = vadd.f32 0.0, %v898
        %v900 = vpop.f32.mrb[0].mxu0
        %v901 = vadd.f32 0.0, %v900
        %v902 = vpop.f32.mrb[0].mxu0
        %v903 = vadd.f32 0.0, %v902
        %v904 = vpop.f32.mrb[0].mxu0
        %v905 = vadd.f32 0.0, %v904
        %906 = vmatprep.mubr.bf16.mxu0 0
        %907 = vmatmul.mubr.bf16.gmra.mrb[0].mxu0 %v856
        %v908 = vpop.f32.mrb[0].mxu0
        %v909 = vadd.f32 0.0, %v908
        %v910 = vpop.f32.mrb[0].mxu0
        %v911 = vadd.f32 0.0, %v910
        %v912 = vpop.f32.mrb[0].mxu0
        %v913 = vadd.f32 0.0, %v912
        %v914 = vpop.f32.mrb[0].mxu0
        %v915 = vadd.f32 0.0, %v914
        %916 = vmatprep.mubr.bf16.mxu0 0
        %917 = vmatmul.mubr.bf16.gmra.mrb[0].mxu0 %v859
        %v918 = vpop.f32.mrb[0].mxu0
        %v919 = vadd.f32 0.0, %v918
        %v920 = vpop.f32.mrb[0].mxu0
        %v921 = vadd.f32 0.0, %v920
        %v922 = vpop.f32.mrb[0].mxu0
        %v923 = vadd.f32 0.0, %v922
        %v924 = vpop.f32.mrb[0].mxu0
        %v925 = vadd.f32 0.0, %v924
        %926 = vmatprep.mubr.bf16.mxu0 0
        %927 = vmatmul.mubr.bf16.gmra.mrb[0].mxu0 %v862
        %v928 = vpop.f32.mrb[0].mxu0
        %v929 = vadd.f32 0.0, %v928
        %v930 = vpop.f32.mrb[0].mxu0
        %v931 = vadd.f32 0.0, %v930
        %v932 = vpop.f32.mrb[0].mxu0
        %v933 = vadd.f32 0.0, %v932
        %v934 = vpop.f32.mrb[0].mxu0
        %v935 = vadd.f32 0.0, %v934
        %936 = vdwg.mxu0
        %v937 = vlaneseq
        %v938 = vshrl.u32 %v937, 7
        %v939 = vadd.s32 %v938, 8
        %v940 = vadd.s32 %v938, 16
        %v941 = vadd.s32 %v938, 24
        %v942 = vadd.s32 %v938, 32
        %v943 = vadd.s32 %v938, 40
        %v944 = vadd.s32 %v938, 48
        %v945 = vadd.s32 %v938, 56
        %vm946 = vcmp.ge.s32.totalorder %v938, 32
        %vm947 = vcmp.ge.s32.totalorder %v939, 32
        %vm948 = vcmp.ge.s32.totalorder %v940, 32
        %vm949 = vcmp.ge.s32.totalorder %v941, 32
        %vm950 = vcmp.ge.s32.totalorder %v942, 32
        %vm951 = vcmp.ge.s32.totalorder %v943, 32
        %vm952 = vcmp.ge.s32.totalorder %v944, 32
        %vm953 = vcmp.ge.s32.totalorder %v945, 32
        %v954 = vsel %vm946, 32, 0
        %v955 = vsel %vm947, 32, 0
        %v956 = vsel %vm948, 32, 0
        %v957 = vsel %vm949, 32, 0
        %v958 = vsel %vm950, 32, 0
        %v959 = vsel %vm951, 32, 0
        %v960 = vsel %vm952, 32, 0
        %v961 = vsel %vm953, 32, 0
        %v962 = vsub.s32 %v938, %v954
        %v963 = vsub.s32 %v939, %v955
        %v964 = vsub.s32 %v940, %v956
        %v965 = vsub.s32 %v941, %v957
        %v966 = vsub.s32 %v942, %v958
        %v967 = vsub.s32 %v943, %v959
        %v968 = vsub.s32 %v944, %v960
        %v969 = vsub.s32 %v945, %v961
        %v970 = vld [vmem:[%s568] sm:$0xf]
        %v971 = vlaneseq
        %v972 = vshrl.u32 %v971, 7
        %v973 = vsub.s32 3, %v972
        %v974 = vrot.slane %v970, %v973
        %v975 = vmul.f32 %v899, %v974
        %v976 = vmul.f32 %v903, %v974
        %v977 = vmul.f32 %v909, %v974
        %v978 = vmul.f32 %v913, %v974
        %v979 = vmul.f32 %v919, %v974
        %v980 = vmul.f32 %v923, %v974
        %v981 = vmul.f32 %v929, %v974
        %v982 = vmul.f32 %v933, %v974
        %vm991 = vcmask 1042432
        %v992 = vrot.slane %v899, 5
        %v993 = vrot.slane %v903, 5
        %v994 = vsel %vm991, %v992, %v993
        %v995 = vrot.slane %v909, 5
        %v996 = vsel %vm991, %v993, %v995
        %v997 = vrot.slane %v913, 5
        %v998 = vsel %vm991, %v995, %v997
        %v999 = vrot.slane %v919, 5
        %v1000 = vsel %vm991, %v997, %v999
        %v1001 = vrot.slane %v923, 5
        %v1002 = vsel %vm991, %v999, %v1001
        %v1003 = vrot.slane %v929, 5
        %v1004 = vsel %vm991, %v1001, %v1003
        %v1005 = vrot.slane %v933, 5
        %v1006 = vsel %vm991, %v1003, %v1005
        %v1015 = vsel %vm991, 0.0, %v992
        %vm1016 = vcmp.ge.s32.totalorder %v962, 3
        %vm1017 = vcmp.ge.s32.totalorder %v963, 3
        %vm1018 = vcmp.ge.s32.totalorder %v964, 3
        %vm1019 = vcmp.ge.s32.totalorder %v965, 3
        %vm1020 = vcmp.ge.s32.totalorder %v966, 3
        %vm1021 = vcmp.ge.s32.totalorder %v967, 3
        %vm1022 = vcmp.ge.s32.totalorder %v968, 3
        %vm1023 = vcmp.ge.s32.totalorder %v969, 3
        %v1024 = vsel %vm1016, 1, 0
        %v1025 = vsel %vm1017, 1, 0
        %v1026 = vsel %vm1018, 1, 0
        %v1027 = vsel %vm1019, 1, 0
        %v1028 = vsel %vm1020, 1, 0
        %v1029 = vsel %vm1021, 1, 0
        %v1030 = vsel %vm1022, 1, 0
        %v1031 = vsel %vm1023, 1, 0
        %vm1032 = vcmp.eq.s32.totalorder %v1024, 1
        %vm1033 = vcmp.eq.s32.totalorder %v1025, 1
        %vm1034 = vcmp.eq.s32.totalorder %v1026, 1
        %vm1035 = vcmp.eq.s32.totalorder %v1027, 1
        %vm1036 = vcmp.eq.s32.totalorder %v1028, 1
        %vm1037 = vcmp.eq.s32.totalorder %v1029, 1
        %vm1038 = vcmp.eq.s32.totalorder %v1030, 1
        %vm1039 = vcmp.eq.s32.totalorder %v1031, 1
        %v1040 = vsel %vm1032, %v1015, 0.0
        %v1041 = vsel %vm1033, %v994, 0.0
        %v1042 = vsel %vm1034, %v996, 0.0
        %v1043 = vsel %vm1035, %v998, 0.0
        %v1044 = vsel %vm1036, %v1000, 0.0
        %v1045 = vsel %vm1037, %v1002, 0.0
        %v1046 = vsel %vm1038, %v1004, 0.0
        %v1047 = vsel %vm1039, %v1006, 0.0
        %v1048 = vlaneseq
        %v1049 = vshrl.u32 %v1048, 7
        %v1050 = vsub.s32 0, %v1049
        %v1051 = vrot.slane %v970, %v1050
        %v1052 = vmul.f32 %v1040, %v1051
        %v1053 = vmul.f32 %v1041, %v1051
        %v1054 = vmul.f32 %v1042, %v1051
        %v1055 = vmul.f32 %v1043, %v1051
        %v1056 = vmul.f32 %v1044, %v1051
        %v1057 = vmul.f32 %v1045, %v1051
        %v1058 = vmul.f32 %v1046, %v1051
        %v1059 = vmul.f32 %v1047, %v1051
        %v1060 = vadd.f32 %v975, %v1052
        %v1061 = vadd.f32 %v976, %v1053
        %v1062 = vadd.f32 %v977, %v1054
        %v1063 = vadd.f32 %v978, %v1055
        %v1064 = vadd.f32 %v979, %v1056
        %v1065 = vadd.f32 %v980, %v1057
        %v1066 = vadd.f32 %v981, %v1058
        %v1067 = vadd.f32 %v982, %v1059
        %vm1068 = vcmask 1041408
        %v1069 = vrot.slane %v899, 6
        %v1070 = vrot.slane %v903, 6
        %v1071 = vsel %vm1068, %v1069, %v1070
        %v1072 = vrot.slane %v909, 6
        %v1073 = vsel %vm1068, %v1070, %v1072
        %v1074 = vrot.slane %v913, 6
        %v1075 = vsel %vm1068, %v1072, %v1074
        %v1076 = vrot.slane %v919, 6
        %v1077 = vsel %vm1068, %v1074, %v1076
        %v1078 = vrot.slane %v923, 6
        %v1079 = vsel %vm1068, %v1076, %v1078
        %v1080 = vrot.slane %v929, 6
        %v1081 = vsel %vm1068, %v1078, %v1080
        %v1082 = vrot.slane %v933, 6
        %v1083 = vsel %vm1068, %v1080, %v1082
        %v1092 = vsel %vm1068, 0.0, %v1069
        %vm1093 = vcmp.ge.s32.totalorder %v962, 2
        %vm1094 = vcmp.ge.s32.totalorder %v963, 2
        %vm1095 = vcmp.ge.s32.totalorder %v964, 2
        %vm1096 = vcmp.ge.s32.totalorder %v965, 2
        %vm1097 = vcmp.ge.s32.totalorder %v966, 2
        %vm1098 = vcmp.ge.s32.totalorder %v967, 2
        %vm1099 = vcmp.ge.s32.totalorder %v968, 2
        %vm1100 = vcmp.ge.s32.totalorder %v969, 2
        %v1101 = vsel %vm1093, 1, 0
        %v1102 = vsel %vm1094, 1, 0
        %v1103 = vsel %vm1095, 1, 0
        %v1104 = vsel %vm1096, 1, 0
        %v1105 = vsel %vm1097, 1, 0
        %v1106 = vsel %vm1098, 1, 0
        %v1107 = vsel %vm1099, 1, 0
        %v1108 = vsel %vm1100, 1, 0
        %vm1109 = vcmp.eq.s32.totalorder %v1101, 1
        %vm1110 = vcmp.eq.s32.totalorder %v1102, 1
        %vm1111 = vcmp.eq.s32.totalorder %v1103, 1
        %vm1112 = vcmp.eq.s32.totalorder %v1104, 1
        %vm1113 = vcmp.eq.s32.totalorder %v1105, 1
        %vm1114 = vcmp.eq.s32.totalorder %v1106, 1
        %vm1115 = vcmp.eq.s32.totalorder %v1107, 1
        %vm1116 = vcmp.eq.s32.totalorder %v1108, 1
        %v1117 = vsel %vm1109, %v1092, 0.0
        %v1118 = vsel %vm1110, %v1071, 0.0
        %v1119 = vsel %vm1111, %v1073, 0.0
        %v1120 = vsel %vm1112, %v1075, 0.0
        %v1121 = vsel %vm1113, %v1077, 0.0
        %v1122 = vsel %vm1114, %v1079, 0.0
        %v1123 = vsel %vm1115, %v1081, 0.0
        %v1124 = vsel %vm1116, %v1083, 0.0
        %v1125 = vlaneseq
        %v1126 = vshrl.u32 %v1125, 7
        %v1127 = vsub.s32 1, %v1126
        %v1128 = vrot.slane %v970, %v1127
        %v1129 = vmul.f32 %v1117, %v1128
        %v1130 = vmul.f32 %v1118, %v1128
        %v1131 = vmul.f32 %v1119, %v1128
        %v1132 = vmul.f32 %v1120, %v1128
        %v1133 = vmul.f32 %v1121, %v1128
        %v1134 = vmul.f32 %v1122, %v1128
        %v1135 = vmul.f32 %v1123, %v1128
        %v1136 = vmul.f32 %v1124, %v1128
        %v1137 = vadd.f32 %v1060, %v1129
        %v1138 = vadd.f32 %v1061, %v1130
        %v1139 = vadd.f32 %v1062, %v1131
        %v1140 = vadd.f32 %v1063, %v1132
        %v1141 = vadd.f32 %v1064, %v1133
        %v1142 = vadd.f32 %v1065, %v1134
        %v1143 = vadd.f32 %v1066, %v1135
        %v1144 = vadd.f32 %v1067, %v1136
        %vm1145 = vcmask 1040384
        %v1146 = vrot.slane %v899, 7
        %v1147 = vrot.slane %v903, 7
        %v1148 = vsel %vm1145, %v1146, %v1147
        %v1149 = vrot.slane %v909, 7
        %v1150 = vsel %vm1145, %v1147, %v1149
        %v1151 = vrot.slane %v913, 7
        %v1152 = vsel %vm1145, %v1149, %v1151
        %v1153 = vrot.slane %v919, 7
        %v1154 = vsel %vm1145, %v1151, %v1153
        %v1155 = vrot.slane %v923, 7
        %v1156 = vsel %vm1145, %v1153, %v1155
        %v1157 = vrot.slane %v929, 7
        %v1158 = vsel %vm1145, %v1155, %v1157
        %v1159 = vrot.slane %v933, 7
        %v1160 = vsel %vm1145, %v1157, %v1159
        %v1169 = vsel %vm1145, 0.0, %v1146
        %vm1170 = vcmp.ge.s32.totalorder %v962, 1
        %vm1171 = vcmp.ge.s32.totalorder %v963, 1
        %vm1172 = vcmp.ge.s32.totalorder %v964, 1
        %vm1173 = vcmp.ge.s32.totalorder %v965, 1
        %vm1174 = vcmp.ge.s32.totalorder %v966, 1
        %vm1175 = vcmp.ge.s32.totalorder %v967, 1
        %vm1176 = vcmp.ge.s32.totalorder %v968, 1
        %vm1177 = vcmp.ge.s32.totalorder %v969, 1
        %v1178 = vsel %vm1170, 1, 0
        %v1179 = vsel %vm1171, 1, 0
        %v1180 = vsel %vm1172, 1, 0
        %v1181 = vsel %vm1173, 1, 0
        %v1182 = vsel %vm1174, 1, 0
        %v1183 = vsel %vm1175, 1, 0
        %v1184 = vsel %vm1176, 1, 0
        %v1185 = vsel %vm1177, 1, 0
        %vm1186 = vcmp.eq.s32.totalorder %v1178, 1
        %vm1187 = vcmp.eq.s32.totalorder %v1179, 1
        %vm1188 = vcmp.eq.s32.totalorder %v1180, 1
        %vm1189 = vcmp.eq.s32.totalorder %v1181, 1
        %vm1190 = vcmp.eq.s32.totalorder %v1182, 1
        %vm1191 = vcmp.eq.s32.totalorder %v1183, 1
        %vm1192 = vcmp.eq.s32.totalorder %v1184, 1
        %vm1193 = vcmp.eq.s32.totalorder %v1185, 1
        %v1194 = vsel %vm1186, %v1169, 0.0
        %v1195 = vsel %vm1187, %v1148, 0.0
        %v1196 = vsel %vm1188, %v1150, 0.0
        %v1197 = vsel %vm1189, %v1152, 0.0
        %v1198 = vsel %vm1190, %v1154, 0.0
        %v1199 = vsel %vm1191, %v1156, 0.0
        %v1200 = vsel %vm1192, %v1158, 0.0
        %v1201 = vsel %vm1193, %v1160, 0.0
        %v1202 = vlaneseq
        %v1203 = vshrl.u32 %v1202, 7
        %v1204 = vsub.s32 2, %v1203
        %v1205 = vrot.slane %v970, %v1204
        %v1206 = vmul.f32 %v1194, %v1205
        %v1207 = vmul.f32 %v1195, %v1205
        %v1208 = vmul.f32 %v1196, %v1205
        %v1209 = vmul.f32 %v1197, %v1205
        %v1210 = vmul.f32 %v1198, %v1205
        %v1211 = vmul.f32 %v1199, %v1205
        %v1212 = vmul.f32 %v1200, %v1205
        %v1213 = vmul.f32 %v1201, %v1205
        %v1214 = vadd.f32 %v1137, %v1206
        %v1215 = vadd.f32 %v1138, %v1207
        %v1216 = vadd.f32 %v1139, %v1208
        %v1217 = vadd.f32 %v1140, %v1209
        %v1218 = vadd.f32 %v1141, %v1210
        %v1219 = vadd.f32 %v1142, %v1211
        %v1220 = vadd.f32 %v1143, %v1212
        %v1221 = vadd.f32 %v1144, %v1213
        %v1222 = vld [vmem:[%s576] sm:$0x1]
        %v1224 = vlaneseq
        %v1225 = vshrl.u32 %v1224, 7
        %v1226 = vsub.s32 0, %v1225
        %v1227 = vrot.slane %v1222, %v1226
        %v1229 = vadd.f32 %v1214, %v1227
        %v1230 = vadd.f32 %v1215, %v1227
        %v1231 = vadd.f32 %v1216, %v1227
        %v1232 = vadd.f32 %v1217, %v1227
        %v1233 = vadd.f32 %v1218, %v1227
        %v1234 = vadd.f32 %v1219, %v1227
        %v1235 = vadd.f32 %v1220, %v1227
        %v1236 = vadd.f32 %v1221, %v1227
        %v1237 = vsub.f32 0.0, %v1229
        %v1238 = vsub.f32 0.0, %v1230
        %v1239 = vsub.f32 0.0, %v1231
        %v1240 = vsub.f32 0.0, %v1232
        %v1241 = vsub.f32 0.0, %v1233
        %v1242 = vsub.f32 0.0, %v1234
        %v1243 = vsub.f32 0.0, %v1235
        %v1244 = vsub.f32 0.0, %v1236
        %v1245 = vmul.f32 %v1237, 1.442695
        %v1246 = vpow.pop %v1245
        %v1247 = vmul.f32 %v1238, 1.442695
        %v1248 = vpow.pop %v1247
        %v1249 = vmul.f32 %v1239, 1.442695
        %v1250 = vpow.pop %v1249
        %v1251 = vmul.f32 %v1240, 1.442695
        %v1252 = vpow.pop %v1251
        %v1253 = vmul.f32 %v1241, 1.442695
        %v1254 = vpow.pop %v1253
        %v1255 = vmul.f32 %v1242, 1.442695
        %v1256 = vpow.pop %v1255
        %v1257 = vmul.f32 %v1243, 1.442695
        %v1258 = vpow.pop %v1257
        %v1259 = vmul.f32 %v1244, 1.442695
        %v1260 = vpow.pop %v1259
        %v1261 = vadd.f32 %v1246, 1.0
        %v1262 = vadd.f32 %v1248, 1.0
        %v1263 = vadd.f32 %v1250, 1.0
        %v1264 = vadd.f32 %v1252, 1.0
        %v1265 = vadd.f32 %v1254, 1.0
        %v1266 = vadd.f32 %v1256, 1.0
        %v1267 = vadd.f32 %v1258, 1.0
        %v1268 = vadd.f32 %v1260, 1.0
        %v1269 = vrcp.pop %v1261
        %v1270 = vmul.f32 %v1229, %v1269
        %v1271 = vrcp.pop %v1262
        %v1272 = vmul.f32 %v1230, %v1271
        %v1273 = vrcp.pop %v1263
        %v1274 = vmul.f32 %v1231, %v1273
        %v1275 = vrcp.pop %v1264
        %v1276 = vmul.f32 %v1232, %v1275
        %v1277 = vrcp.pop %v1265
        %v1278 = vmul.f32 %v1233, %v1277
        %v1279 = vrcp.pop %v1266
        %v1280 = vmul.f32 %v1234, %v1279
        %v1281 = vrcp.pop %v1267
        %v1282 = vmul.f32 %v1235, %v1281
        %v1283 = vrcp.pop %v1268
        %v1284 = vmul.f32 %v1236, %v1283
        %v1285 = vpack.c.bf16 %v1272, %v1270
        %v1286 = vpack.c.bf16 %v1276, %v1274
        %v1287 = vpack.c.bf16 %v1280, %v1278
        %v1288 = vpack.c.bf16 %v1284, %v1282
        %v1289 = vld [vmem:[%s585] sm:$0xff]
        %v1290 = vld [vmem:[%s585 + $0x8] sm:$0xff]
        %v1291 = vld [vmem:[%s585 + $0x10] sm:$0xff]
        %v1292 = vld [vmem:[%s585 + $0x18] sm:$0xff]
        %v1293 = vld [vmem:[%s585 + $0x20] sm:$0xff]
        %v1294 = vld [vmem:[%s585 + $0x28] sm:$0xff]
        %v1295 = vld [vmem:[%s585 + $0x30] sm:$0xff]
        %v1296 = vld [vmem:[%s585 + $0x38] sm:$0xff]
        %v1297 = vld [vmem:[%s585 + $0x40] sm:$0xff]
        %v1298 = vld [vmem:[%s585 + $0x48] sm:$0xff]
        %v1299 = vld [vmem:[%s585 + $0x50] sm:$0xff]
        %v1300 = vld [vmem:[%s585 + $0x58] sm:$0xff]
        %v1301 = vld [vmem:[%s585 + $0x60] sm:$0xff]
        %v1302 = vld [vmem:[%s585 + $0x68] sm:$0xff]
        %v1303 = vld [vmem:[%s585 + $0x70] sm:$0xff]
        %v1304 = vld [vmem:[%s585 + $0x78] sm:$0xff]
        %v1321 = vunpack.c.l.b16 %v1289
        %v1322 = vunpack.c.h.b16 %v1289
        %v1323 = vunpack.c.l.b16 %v1290
        %v1324 = vunpack.c.h.b16 %v1290
        %v1325 = vunpack.c.l.b16 %v1291
        %v1326 = vunpack.c.h.b16 %v1291
        %v1327 = vunpack.c.l.b16 %v1292
        %v1328 = vunpack.c.h.b16 %v1292
        %v1329 = vunpack.c.l.b16 %v1293
        %v1330 = vunpack.c.h.b16 %v1293
        %v1331 = vunpack.c.l.b16 %v1294
        %v1332 = vunpack.c.h.b16 %v1294
        %v1333 = vunpack.c.l.b16 %v1295
        %v1334 = vunpack.c.h.b16 %v1295
        %v1335 = vunpack.c.l.b16 %v1296
        %v1336 = vunpack.c.h.b16 %v1296
        %v1337 = vunpack.c.l.b16 %v1297
        %v1338 = vunpack.c.h.b16 %v1297
        %v1339 = vunpack.c.l.b16 %v1298
        %v1340 = vunpack.c.h.b16 %v1298
        %v1341 = vunpack.c.l.b16 %v1299
        %v1342 = vunpack.c.h.b16 %v1299
        %v1343 = vunpack.c.l.b16 %v1300
        %v1344 = vunpack.c.h.b16 %v1300
        %v1345 = vunpack.c.l.b16 %v1301
        %v1346 = vunpack.c.h.b16 %v1301
        %v1347 = vunpack.c.l.b16 %v1302
        %v1348 = vunpack.c.h.b16 %v1302
        %v1349 = vunpack.c.l.b16 %v1303
        %v1350 = vunpack.c.h.b16 %v1303
        %v1351 = vunpack.c.l.b16 %v1304
        %v1352 = vunpack.c.h.b16 %v1304
        %v1353 = vpack.c.b16 %v1323, %v1321
        %v1354 = vpack.c.b16 %v1324, %v1322
        %v1355 = vpack.c.b16 %v1327, %v1325
        %v1356 = vpack.c.b16 %v1328, %v1326
        %v1357 = vpack.c.b16 %v1331, %v1329
        %v1358 = vpack.c.b16 %v1332, %v1330
        %v1359 = vpack.c.b16 %v1335, %v1333
        %v1360 = vpack.c.b16 %v1336, %v1334
        %v1361 = vpack.c.b16 %v1339, %v1337
        %v1362 = vpack.c.b16 %v1340, %v1338
        %v1363 = vpack.c.b16 %v1343, %v1341
        %v1364 = vpack.c.b16 %v1344, %v1342
        %v1365 = vpack.c.b16 %v1347, %v1345
        %v1366 = vpack.c.b16 %v1348, %v1346
        %v1367 = vpack.c.b16 %v1351, %v1349
        %v1368 = vpack.c.b16 %v1352, %v1350
        %1385 = vmatprep.subr.bf16.mxu0 %v1354
        %1386 = vmatpush1.bf16.msra.mxu0 %v1353
        %1387 = vmatprep.subr.bf16.mxu0 %v1356
        %1388 = vmatpush1.bf16.msra.mxu0 %v1355
        %1389 = vmatprep.subr.bf16.mxu0 %v1358
        %1390 = vmatpush1.bf16.msra.mxu0 %v1357
        %1391 = vmatprep.subr.bf16.mxu0 %v1360
        %1392 = vmatpush1.bf16.msra.mxu0 %v1359
        %1393 = vmatprep.subr.bf16.mxu0 %v1362
        %1394 = vmatpush1.bf16.msra.mxu0 %v1361
        %1395 = vmatprep.subr.bf16.mxu0 %v1364
        %1396 = vmatpush1.bf16.msra.mxu0 %v1363
        %1397 = vmatprep.subr.bf16.mxu0 %v1366
        %1398 = vmatpush1.bf16.msra.mxu0 %v1365
        %1399 = vmatprep.subr.bf16.mxu0 %v1368
        %1400 = vmatpush1.bf16.msra.mxu0 %v1367
        %1401 = vmatprep.subr.bf16.mxu0 0
        %1402 = vmatpush1.bf16.msra.mxu0 0
        %1403 = vmatprep.subr.bf16.mxu0 0
        %1404 = vmatpush1.bf16.msra.mxu0 0
        %1405 = vmatprep.subr.bf16.mxu0 0
        %1406 = vmatpush1.bf16.msra.mxu0 0
        %1407 = vmatprep.subr.bf16.mxu0 0
        %1408 = vmatpush1.bf16.msra.mxu0 0
        %1409 = vmatprep.subr.bf16.mxu0 0
        %1410 = vmatpush1.bf16.msra.mxu0 0
        %1411 = vmatprep.subr.bf16.mxu0 0
        %1412 = vmatpush1.bf16.msra.mxu0 0
        %1413 = vmatprep.subr.bf16.mxu0 0
        %1414 = vmatpush1.bf16.msra.mxu0 0
        %1415 = vmatprep.subr.bf16.mxu0 0
        %1416 = vmatpush1.bf16.msra.mxu0 0
        %1417 = vmatprep.mubr.bf16.mxu0 0
        %1418 = vmatmul.mubr.bf16.gmra.mrb[0].mxu0 %v1285
        %v1419 = vpop.f32.mrb[0].mxu0
        %v1420 = vadd.f32 0.0, %v1419
        %v1421 = vpop.f32.mrb[0].mxu0
        %v1422 = vadd.f32 0.0, %v1421
        %v1423 = vpop.f32.mrb[0].mxu0
        %v1424 = vadd.f32 0.0, %v1423
        %v1425 = vpop.f32.mrb[0].mxu0
        %v1426 = vadd.f32 0.0, %v1425
        %1427 = vmatprep.mubr.bf16.mxu0 0
        %1428 = vmatmul.mubr.bf16.gmra.mrb[0].mxu0 %v1286
        %v1429 = vpop.f32.mrb[0].mxu0
        %v1430 = vadd.f32 0.0, %v1429
        %v1431 = vpop.f32.mrb[0].mxu0
        %v1432 = vadd.f32 0.0, %v1431
        %v1433 = vpop.f32.mrb[0].mxu0
        %v1434 = vadd.f32 0.0, %v1433
        %v1435 = vpop.f32.mrb[0].mxu0
        %v1436 = vadd.f32 0.0, %v1435
        %1437 = vmatprep.mubr.bf16.mxu0 0
        %1438 = vmatmul.mubr.bf16.gmra.mrb[0].mxu0 %v1287
        %v1439 = vpop.f32.mrb[0].mxu0
        %v1440 = vadd.f32 0.0, %v1439
        %v1441 = vpop.f32.mrb[0].mxu0
        %v1442 = vadd.f32 0.0, %v1441
        %v1443 = vpop.f32.mrb[0].mxu0
        %v1444 = vadd.f32 0.0, %v1443
        %v1445 = vpop.f32.mrb[0].mxu0
        %v1446 = vadd.f32 0.0, %v1445
        %1447 = vmatprep.mubr.bf16.mxu0 0
        %1448 = vmatmul.mubr.bf16.gmra.mrb[0].mxu0 %v1288
        %v1449 = vpop.f32.mrb[0].mxu0
        %v1450 = vadd.f32 0.0, %v1449
        %v1451 = vpop.f32.mrb[0].mxu0
        %v1452 = vadd.f32 0.0, %v1451
        %v1453 = vpop.f32.mrb[0].mxu0
        %v1454 = vadd.f32 0.0, %v1453
        %v1455 = vpop.f32.mrb[0].mxu0
        %v1456 = vadd.f32 0.0, %v1455
        %1457 = vdwg.mxu0
        %v1458 = vld [vmem:[%s593] sm:$0x1]
        %v1460 = vlaneseq
        %v1461 = vshrl.u32 %v1460, 7
        %v1462 = vsub.s32 0, %v1461
        %v1463 = vrot.slane %v1458, %v1462
        %v1465 = vadd.f32 %v1420, %v1463
        %v1466 = vadd.f32 %v1424, %v1463
        %v1467 = vadd.f32 %v1430, %v1463
        %v1468 = vadd.f32 %v1434, %v1463
        %v1469 = vadd.f32 %v1440, %v1463
        %v1470 = vadd.f32 %v1444, %v1463
        %v1471 = vadd.f32 %v1450, %v1463
        %v1472 = vadd.f32 %v1454, %v1463
        %v1473 = vmax.f32 %v1465, 0.0
        %v1474 = vmax.f32 %v1466, 0.0
        %v1475 = vmax.f32 %v1467, 0.0
        %v1476 = vmax.f32 %v1468, 0.0
        %v1477 = vmax.f32 %v1469, 0.0
        %v1478 = vmax.f32 %v1470, 0.0
        %v1479 = vmax.f32 %v1471, 0.0
        %v1480 = vmax.f32 %v1472, 0.0
        %v1481 = vand.u32 2147483647, %v1465
        %v1482 = vand.u32 2147483647, %v1466
        %v1483 = vand.u32 2147483647, %v1467
        %v1484 = vand.u32 2147483647, %v1468
        %v1485 = vand.u32 2147483647, %v1469
        %v1486 = vand.u32 2147483647, %v1470
        %v1487 = vand.u32 2147483647, %v1471
        %v1488 = vand.u32 2147483647, %v1472
        %v1489 = vsub.f32 0.0, %v1481
        %v1490 = vsub.f32 0.0, %v1482
        %v1491 = vsub.f32 0.0, %v1483
        %v1492 = vsub.f32 0.0, %v1484
        %v1493 = vsub.f32 0.0, %v1485
        %v1494 = vsub.f32 0.0, %v1486
        %v1495 = vsub.f32 0.0, %v1487
        %v1496 = vsub.f32 0.0, %v1488
        %v1497 = vmul.f32 %v1489, 1.442695
        %v1498 = vpow.pop %v1497
        %v1499 = vmul.f32 %v1490, 1.442695
        %v1500 = vpow.pop %v1499
        %v1501 = vmul.f32 %v1491, 1.442695
        %v1502 = vpow.pop %v1501
        %v1503 = vmul.f32 %v1492, 1.442695
        %v1504 = vpow.pop %v1503
        %v1505 = vmul.f32 %v1493, 1.442695
        %v1506 = vpow.pop %v1505
        %v1507 = vmul.f32 %v1494, 1.442695
        %v1508 = vpow.pop %v1507
        %v1509 = vmul.f32 %v1495, 1.442695
        %v1510 = vpow.pop %v1509
        %v1511 = vmul.f32 %v1496, 1.442695
        %v1512 = vpow.pop %v1511
        %v1513 = vadd.f32 %v1498, 1.0
        %v1514 = vadd.f32 %v1500, 1.0
        %v1515 = vadd.f32 %v1502, 1.0
        %v1516 = vadd.f32 %v1504, 1.0
        %v1517 = vadd.f32 %v1506, 1.0
        %v1518 = vadd.f32 %v1508, 1.0
        %v1519 = vadd.f32 %v1510, 1.0
        %v1520 = vadd.f32 %v1512, 1.0
        %v1521 = vlog2.pop %v1513
        %v1522 = vmul.f32 %v1521, 0.6931472
        %v1523 = vlog2.pop %v1514
        %v1524 = vmul.f32 %v1523, 0.6931472
        %v1525 = vlog2.pop %v1515
        %v1526 = vmul.f32 %v1525, 0.6931472
        %v1527 = vlog2.pop %v1516
        %v1528 = vmul.f32 %v1527, 0.6931472
        %v1529 = vlog2.pop %v1517
        %v1530 = vmul.f32 %v1529, 0.6931472
        %v1531 = vlog2.pop %v1518
        %v1532 = vmul.f32 %v1531, 0.6931472
        %v1533 = vlog2.pop %v1519
        %v1534 = vmul.f32 %v1533, 0.6931472
        %v1535 = vlog2.pop %v1520
        %v1536 = vmul.f32 %v1535, 0.6931472
        %v1537 = vadd.f32 %v1473, %v1522
        %v1538 = vadd.f32 %v1474, %v1524
        %v1539 = vadd.f32 %v1475, %v1526
        %v1540 = vadd.f32 %v1476, %v1528
        %v1541 = vadd.f32 %v1477, %v1530
        %v1542 = vadd.f32 %v1478, %v1532
        %v1543 = vadd.f32 %v1479, %v1534
        %v1544 = vadd.f32 %v1480, %v1536
        %1545 = vst [vmem:[#allocation3] sm:$0xff] %v1537
        %1546 = vst [vmem:[#allocation3 + $0x8] sm:$0xff] %v1538
        %1547 = vst [vmem:[#allocation3 + $0x10] sm:$0xff] %v1539
        %1548 = vst [vmem:[#allocation3 + $0x18] sm:$0xff] %v1540
        %1549 = vst [vmem:[#allocation3 + $0x20] sm:$0xff] %v1541
        %1550 = vst [vmem:[#allocation3 + $0x28] sm:$0xff] %v1542
        %1551 = vst [vmem:[#allocation3 + $0x30] sm:$0xff] %v1543
        %1552 = vst [vmem:[#allocation3 + $0x38] sm:$0xff] %v1544
        %v1553 = vmul.f32 %v1537, %v1270
        %v1554 = vmul.f32 %v1538, %v1272
        %v1555 = vmul.f32 %v1539, %v1274
        %v1556 = vmul.f32 %v1540, %v1276
        %v1557 = vmul.f32 %v1541, %v1278
        %v1558 = vmul.f32 %v1542, %v1280
        %v1559 = vmul.f32 %v1543, %v1282
        %v1560 = vmul.f32 %v1544, %v1284
        %1561 = vst [vmem:[#allocation4] sm:$0xff] %v1553
        %1562 = vst [vmem:[#allocation4 + $0x8] sm:$0xff] %v1554
        %1563 = vst [vmem:[#allocation4 + $0x10] sm:$0xff] %v1555
        %1564 = vst [vmem:[#allocation4 + $0x18] sm:$0xff] %v1556
        %1565 = vst [vmem:[#allocation4 + $0x20] sm:$0xff] %v1557
        %1566 = vst [vmem:[#allocation4 + $0x28] sm:$0xff] %v1558
        %1567 = vst [vmem:[#allocation4 + $0x30] sm:$0xff] %v1559
        %1568 = vst [vmem:[#allocation4 + $0x38] sm:$0xff] %v1560
        %vm1569 = vcmask 261120
        %1570 = vst.msk [vmem:[#allocation5] sm:$0xff] %vm1569, %v1422
        %1571 = vst.msk [vmem:[#allocation5 + $0x8] sm:$0xff] %vm1569, %v1426
        %1572 = vst.msk [vmem:[#allocation5 + $0x10] sm:$0xff] %vm1569, %v1432
        %1573 = vst.msk [vmem:[#allocation5 + $0x18] sm:$0xff] %vm1569, %v1436
        %1574 = vst.msk [vmem:[#allocation5 + $0x20] sm:$0xff] %vm1569, %v1442
        %1575 = vst.msk [vmem:[#allocation5 + $0x28] sm:$0xff] %vm1569, %v1446
        %1576 = vst.msk [vmem:[#allocation5 + $0x30] sm:$0xff] %vm1569, %v1452
        %1577 = vst.msk [vmem:[#allocation5 + $0x38] sm:$0xff] %vm1569, %v1456
        %v1578 = vld [vmem:[%s602] sm:$0xff]
        %v1579 = vld [vmem:[%s602 + $0x8] sm:$0xff]
        loop: start=0, step=1, limit=4
        $region105: #{fuse_block_mamba_forward.3} parent=59 // loop_pre_header
          _
        $region106: #{fuse_block_mamba_forward.3} parent=59 // loop_header
          %s1581 = sphi 0, %s1585
          %p1582 = scmp.ge.s32.totalorder %s1581, 4
          %v1586 = vphi 0.0, %v1957
          %v1587 = vphi 0.0, %v1958
        $region107: #{fuse_block_mamba_forward.3} parent=59 // loop_header_branch
          %1584 = sbr.rel (%p1582) target = $region111
        $region108: #{fuse_block_mamba_forward.3} parent=59 // loop_body
          %s1588 = smul.u32 %s1581, 8
          %s1589 = scalar_lea.vmem [#allocation3], %s1588
          %v1590 = vld [vmem:[%s1589] sm:$0xff]
          %s1591 = scalar_lea.vmem [#allocation4], %s1588
          %v1592 = vld [vmem:[%s1591] sm:$0xff]
          %s1593 = scalar_lea.vmem [#allocation5], %s1588
          %v1594 = vld [vmem:[%s1593] sm:$0xff]
          %v1596 = vcombine.high %v1590, %v1590
          %v1598 = vunpack.c.l.s4 1966171168
          %v1599 = vunpack.c.0.s8 %v1598
          %v1600 = vlaneseq
          %v1601 = vshrl.u32 %v1600, 7
          %v1602 = vsub.s32 %v1599, %v1601
          %v1603 = vrot.slane %v1590, %v1602
          %v1605 = vunpack.c.l.s4 1966171168
          %v1606 = vunpack.c.0.s8 %v1605
          %v1607 = vlaneseq
          %v1608 = vshrl.u32 %v1607, 7
          %v1609 = vsub.s32 %v1606, %v1608
          %v1610 = vrot.slane %v1596, %v1609
          %v1611 = vcombine.high %v1603, %v1603
          %v1612 = vcombine.high %v1610, %v1610
          %v1614 = vunpack.c.l.s4 1966171168
          %v1615 = vunpack.c.0.s8 %v1614
          %v1616 = vlaneseq
          %v1617 = vshrl.u32 %v1616, 7
          %v1618 = vsub.s32 %v1615, %v1617
          %v1619 = vrot.slane %v1603, %v1618
          %v1621 = vunpack.c.l.s4 1966171168
          %v1622 = vunpack.c.0.s8 %v1621
          %v1623 = vlaneseq
          %v1624 = vshrl.u32 %v1623, 7
          %v1625 = vsub.s32 %v1622, %v1624
          %v1626 = vrot.slane %v1610, %v1625
          %v1628 = vunpack.c.l.s4 1966171168
          %v1629 = vunpack.c.0.s8 %v1628
          %v1630 = vlaneseq
          %v1631 = vshrl.u32 %v1630, 7
          %v1632 = vsub.s32 %v1629, %v1631
          %v1633 = vrot.slane %v1611, %v1632
          %v1635 = vunpack.c.l.s4 1966171168
          %v1636 = vunpack.c.0.s8 %v1635
          %v1637 = vlaneseq
          %v1638 = vshrl.u32 %v1637, 7
          %v1639 = vsub.s32 %v1636, %v1638
          %v1640 = vrot.slane %v1612, %v1639
          %v1641 = vcombine.high %v1619, %v1619
          %v1642 = vcombine.high %v1626, %v1626
          %v1643 = vcombine.high %v1633, %v1633
          %v1644 = vcombine.high %v1640, %v1640
          %v1645 = vlaneseq
          %v1646 = vshrl.u32 %v1645, 7
          %v1647 = vsub.s32 0, %v1646
          %v1648 = vrot.slane %v1619, %v1647
          %v1649 = vlaneseq
          %v1650 = vshrl.u32 %v1649, 7
          %v1651 = vsub.s32 0, %v1650
          %v1652 = vrot.slane %v1633, %v1651
          %v1653 = vlaneseq
          %v1654 = vshrl.u32 %v1653, 7
          %v1655 = vsub.s32 0, %v1654
          %v1656 = vrot.slane %v1641, %v1655
          %v1657 = vlaneseq
          %v1658 = vshrl.u32 %v1657, 7
          %v1659 = vsub.s32 0, %v1658
          %v1660 = vrot.slane %v1643, %v1659
          %v1661 = vlaneseq
          %v1662 = vshrl.u32 %v1661, 7
          %v1663 = vsub.s32 0, %v1662
          %v1664 = vrot.slane %v1626, %v1663
          %v1665 = vlaneseq
          %v1666 = vshrl.u32 %v1665, 7
          %v1667 = vsub.s32 0, %v1666
          %v1668 = vrot.slane %v1640, %v1667
          %v1669 = vlaneseq
          %v1670 = vshrl.u32 %v1669, 7
          %v1671 = vsub.s32 0, %v1670
          %v1672 = vrot.slane %v1642, %v1671
          %v1673 = vlaneseq
          %v1674 = vshrl.u32 %v1673, 7
          %v1675 = vsub.s32 0, %v1674
          %v1676 = vrot.slane %v1644, %v1675
          %v1685 = vmul.f32 %v1648, %v1578
          %v1686 = vmul.f32 %v1648, %v1579
          %v1687 = vmul.f32 %v1652, %v1578
          %v1688 = vmul.f32 %v1652, %v1579
          %v1689 = vmul.f32 %v1656, %v1578
          %v1690 = vmul.f32 %v1656, %v1579
          %v1691 = vmul.f32 %v1660, %v1578
          %v1692 = vmul.f32 %v1660, %v1579
          %v1693 = vmul.f32 %v1664, %v1578
          %v1694 = vmul.f32 %v1664, %v1579
          %v1695 = vmul.f32 %v1668, %v1578
          %v1696 = vmul.f32 %v1668, %v1579
          %v1697 = vmul.f32 %v1672, %v1578
          %v1698 = vmul.f32 %v1672, %v1579
          %v1699 = vmul.f32 %v1676, %v1578
          %v1700 = vmul.f32 %v1676, %v1579
          %v1701 = vmul.f32 %v1685, 1.442695
          %v1702 = vpow.pop %v1701
          %v1703 = vmul.f32 %v1686, 1.442695
          %v1704 = vpow.pop %v1703
          %v1705 = vmul.f32 %v1687, 1.442695
          %v1706 = vpow.pop %v1705
          %v1707 = vmul.f32 %v1688, 1.442695
          %v1708 = vpow.pop %v1707
          %v1709 = vmul.f32 %v1689, 1.442695
          %v1710 = vpow.pop %v1709
          %v1711 = vmul.f32 %v1690, 1.442695
          %v1712 = vpow.pop %v1711
          %v1713 = vmul.f32 %v1691, 1.442695
          %v1714 = vpow.pop %v1713
          %v1715 = vmul.f32 %v1692, 1.442695
          %v1716 = vpow.pop %v1715
          %v1717 = vmul.f32 %v1693, 1.442695
          %v1718 = vpow.pop %v1717
          %v1719 = vmul.f32 %v1694, 1.442695
          %v1720 = vpow.pop %v1719
          %v1721 = vmul.f32 %v1695, 1.442695
          %v1722 = vpow.pop %v1721
          %v1723 = vmul.f32 %v1696, 1.442695
          %v1724 = vpow.pop %v1723
          %v1725 = vmul.f32 %v1697, 1.442695
          %v1726 = vpow.pop %v1725
          %v1727 = vmul.f32 %v1698, 1.442695
          %v1728 = vpow.pop %v1727
          %v1729 = vmul.f32 %v1699, 1.442695
          %v1730 = vpow.pop %v1729
          %v1731 = vmul.f32 %v1700, 1.442695
          %v1732 = vpow.pop %v1731
          %v1734 = vcombine.high %v1592, %v1592
          %v1736 = vunpack.c.l.s4 1966171168
          %v1737 = vunpack.c.0.s8 %v1736
          %v1738 = vlaneseq
          %v1739 = vshrl.u32 %v1738, 7
          %v1740 = vsub.s32 %v1737, %v1739
          %v1741 = vrot.slane %v1592, %v1740
          %v1743 = vunpack.c.l.s4 1966171168
          %v1744 = vunpack.c.0.s8 %v1743
          %v1745 = vlaneseq
          %v1746 = vshrl.u32 %v1745, 7
          %v1747 = vsub.s32 %v1744, %v1746
          %v1748 = vrot.slane %v1734, %v1747
          %v1749 = vcombine.high %v1741, %v1741
          %v1750 = vcombine.high %v1748, %v1748
          %v1752 = vunpack.c.l.s4 1966171168
          %v1753 = vunpack.c.0.s8 %v1752
          %v1754 = vlaneseq
          %v1755 = vshrl.u32 %v1754, 7
          %v1756 = vsub.s32 %v1753, %v1755
          %v1757 = vrot.slane %v1741, %v1756
          %v1759 = vunpack.c.l.s4 1966171168
          %v1760 = vunpack.c.0.s8 %v1759
          %v1761 = vlaneseq
          %v1762 = vshrl.u32 %v1761, 7
          %v1763 = vsub.s32 %v1760, %v1762
          %v1764 = vrot.slane %v1748, %v1763
          %v1766 = vunpack.c.l.s4 1966171168
          %v1767 = vunpack.c.0.s8 %v1766
          %v1768 = vlaneseq
          %v1769 = vshrl.u32 %v1768, 7
          %v1770 = vsub.s32 %v1767, %v1769
          %v1771 = vrot.slane %v1749, %v1770
          %v1773 = vunpack.c.l.s4 1966171168
          %v1774 = vunpack.c.0.s8 %v1773
          %v1775 = vlaneseq
          %v1776 = vshrl.u32 %v1775, 7
          %v1777 = vsub.s32 %v1774, %v1776
          %v1778 = vrot.slane %v1750, %v1777
          %v1779 = vcombine.high %v1757, %v1757
          %v1780 = vcombine.high %v1764, %v1764
          %v1781 = vcombine.high %v1771, %v1771
          %v1782 = vcombine.high %v1778, %v1778
          %v1783 = vlaneseq
          %v1784 = vshrl.u32 %v1783, 7
          %v1785 = vsub.s32 0, %v1784
          %v1786 = vrot.slane %v1594, %v1785
          %1788 = vbcast.lane.b32.xlu0 %v1786, 256
          %v1789 = vpop.permute.xlu0 %1788
          %s1791 = sor.u32 256, 8
          %1792 = vbcast.lane.b32.xlu0 %v1786, %s1791
          %v1793 = vpop.permute.xlu0 %1792
          %v1794 = vlaneseq
          %v1795 = vshrl.u32 %v1794, 7
          %v1796 = vsub.s32 1, %v1795
          %v1797 = vrot.slane %v1594, %v1796
          %1799 = vbcast.lane.b32.xlu0 %v1797, 256
          %v1800 = vpop.permute.xlu0 %1799
          %s1802 = sor.u32 256, 8
          %1803 = vbcast.lane.b32.xlu0 %v1797, %s1802
          %v1804 = vpop.permute.xlu0 %1803
          %v1805 = vlaneseq
          %v1806 = vshrl.u32 %v1805, 7
          %v1807 = vsub.s32 2, %v1806
          %v1808 = vrot.slane %v1594, %v1807
          %1810 = vbcast.lane.b32.xlu0 %v1808, 256
          %v1811 = vpop.permute.xlu0 %1810
          %s1813 = sor.u32 256, 8
          %1814 = vbcast.lane.b32.xlu0 %v1808, %s1813
          %v1815 = vpop.permute.xlu0 %1814
          %v1816 = vlaneseq
          %v1817 = vshrl.u32 %v1816, 7
          %v1818 = vsub.s32 3, %v1817
          %v1819 = vrot.slane %v1594, %v1818
          %1821 = vbcast.lane.b32.xlu0 %v1819, 256
          %v1822 = vpop.permute.xlu0 %1821
          %s1824 = sor.u32 256, 8
          %1825 = vbcast.lane.b32.xlu0 %v1819, %s1824
          %v1826 = vpop.permute.xlu0 %1825
          %v1827 = vlaneseq
          %v1828 = vshrl.u32 %v1827, 7
          %v1829 = vsub.s32 4, %v1828
          %v1830 = vrot.slane %v1594, %v1829
          %1832 = vbcast.lane.b32.xlu0 %v1830, 256
          %v1833 = vpop.permute.xlu0 %1832
          %s1835 = sor.u32 256, 8
          %1836 = vbcast.lane.b32.xlu0 %v1830, %s1835
          %v1837 = vpop.permute.xlu0 %1836
          %v1838 = vlaneseq
          %v1839 = vshrl.u32 %v1838, 7
          %v1840 = vsub.s32 5, %v1839
          %v1841 = vrot.slane %v1594, %v1840
          %1843 = vbcast.lane.b32.xlu0 %v1841, 256
          %v1844 = vpop.permute.xlu0 %1843
          %s1846 = sor.u32 256, 8
          %1847 = vbcast.lane.b32.xlu0 %v1841, %s1846
          %v1848 = vpop.permute.xlu0 %1847
          %v1849 = vlaneseq
          %v1850 = vshrl.u32 %v1849, 7
          %v1851 = vsub.s32 6, %v1850
          %v1852 = vrot.slane %v1594, %v1851
          %1854 = vbcast.lane.b32.xlu0 %v1852, 256
          %v1855 = vpop.permute.xlu0 %1854
          %s1857 = sor.u32 256, 8
          %1858 = vbcast.lane.b32.xlu0 %v1852, %s1857
          %v1859 = vpop.permute.xlu0 %1858
          %v1860 = vlaneseq
          %v1861 = vshrl.u32 %v1860, 7
          %v1862 = vsub.s32 7, %v1861
          %v1863 = vrot.slane %v1594, %v1862
          %1865 = vbcast.lane.b32.xlu0 %v1863, 256
          %v1866 = vpop.permute.xlu0 %1865
          %s1868 = sor.u32 256, 8
          %1869 = vbcast.lane.b32.xlu0 %v1863, %s1868
          %v1870 = vpop.permute.xlu0 %1869
          %v1871 = vlaneseq
          %v1872 = vshrl.u32 %v1871, 7
          %v1873 = vsub.s32 0, %v1872
          %v1874 = vrot.slane %v1757, %v1873
          %v1875 = vlaneseq
          %v1876 = vshrl.u32 %v1875, 7
          %v1877 = vsub.s32 0, %v1876
          %v1878 = vrot.slane %v1771, %v1877
          %v1879 = vlaneseq
          %v1880 = vshrl.u32 %v1879, 7
          %v1881 = vsub.s32 0, %v1880
          %v1882 = vrot.slane %v1779, %v1881
          %v1883 = vlaneseq
          %v1884 = vshrl.u32 %v1883, 7
          %v1885 = vsub.s32 0, %v1884
          %v1886 = vrot.slane %v1781, %v1885
          %v1887 = vlaneseq
          %v1888 = vshrl.u32 %v1887, 7
          %v1889 = vsub.s32 0, %v1888
          %v1890 = vrot.slane %v1764, %v1889
          %v1891 = vlaneseq
          %v1892 = vshrl.u32 %v1891, 7
          %v1893 = vsub.s32 0, %v1892
          %v1894 = vrot.slane %v1778, %v1893
          %v1895 = vlaneseq
          %v1896 = vshrl.u32 %v1895, 7
          %v1897 = vsub.s32 0, %v1896
          %v1898 = vrot.slane %v1780, %v1897
          %v1899 = vlaneseq
          %v1900 = vshrl.u32 %v1899, 7
          %v1901 = vsub.s32 0, %v1900
          %v1902 = vrot.slane %v1782, %v1901
          %v1911 = vmul.f32 %v1874, %v1789
          %v1912 = vmul.f32 %v1874, %v1793
          %v1913 = vmul.f32 %v1878, %v1800
          %v1914 = vmul.f32 %v1878, %v1804
          %v1915 = vmul.f32 %v1882, %v1811
          %v1916 = vmul.f32 %v1882, %v1815
          %v1917 = vmul.f32 %v1886, %v1822
          %v1918 = vmul.f32 %v1886, %v1826
          %v1919 = vmul.f32 %v1890, %v1833
          %v1920 = vmul.f32 %v1890, %v1837
          %v1921 = vmul.f32 %v1894, %v1844
          %v1922 = vmul.f32 %v1894, %v1848
          %v1923 = vmul.f32 %v1898, %v1855
          %v1924 = vmul.f32 %v1898, %v1859
          %v1925 = vmul.f32 %v1902, %v1866
          %v1926 = vmul.f32 %v1902, %v1870
          %v1927 = vmul.f32 %v1702, %v1586
          %v1928 = vmul.f32 %v1704, %v1587
          %v1929 = vadd.f32 %v1927, %v1911
          %v1930 = vadd.f32 %v1928, %v1912
          %v1931 = vmul.f32 %v1706, %v1929
          %v1932 = vmul.f32 %v1708, %v1930
          %v1933 = vadd.f32 %v1931, %v1913
          %v1934 = vadd.f32 %v1932, %v1914
          %v1935 = vmul.f32 %v1710, %v1933
          %v1936 = vmul.f32 %v1712, %v1934
          %v1937 = vadd.f32 %v1935, %v1915
          %v1938 = vadd.f32 %v1936, %v1916
          %v1939 = vmul.f32 %v1714, %v1937
          %v1940 = vmul.f32 %v1716, %v1938
          %v1941 = vadd.f32 %v1939, %v1917
          %v1942 = vadd.f32 %v1940, %v1918
          %v1943 = vmul.f32 %v1718, %v1941
          %v1944 = vmul.f32 %v1720, %v1942
          %v1945 = vadd.f32 %v1943, %v1919
          %v1946 = vadd.f32 %v1944, %v1920
          %v1947 = vmul.f32 %v1722, %v1945
          %v1948 = vmul.f32 %v1724, %v1946
          %v1949 = vadd.f32 %v1947, %v1921
          %v1950 = vadd.f32 %v1948, %v1922
          %v1951 = vmul.f32 %v1726, %v1949
          %v1952 = vmul.f32 %v1728, %v1950
          %v1953 = vadd.f32 %v1951, %v1923
          %v1954 = vadd.f32 %v1952, %v1924
          %v1955 = vmul.f32 %v1730, %v1953
          %v1956 = vmul.f32 %v1732, %v1954
          %v1957 = vadd.f32 %v1955, %v1925
          %v1958 = vadd.f32 %v1956, %v1926
          %s1960 = sor.u32 256, 16
          %1961 = vbcast.lane.b32.xlu0 %v1786, %s1960
          %v1962 = vpop.permute.xlu0 %1961
          %s1964 = sor.u32 256, 24
          %1965 = vbcast.lane.b32.xlu0 %v1786, %s1964
          %v1966 = vpop.permute.xlu0 %1965
          %s1968 = sor.u32 256, 16
          %1969 = vbcast.lane.b32.xlu0 %v1797, %s1968
          %v1970 = vpop.permute.xlu0 %1969
          %s1972 = sor.u32 256, 24
          %1973 = vbcast.lane.b32.xlu0 %v1797, %s1972
          %v1974 = vpop.permute.xlu0 %1973
          %s1976 = sor.u32 256, 16
          %1977 = vbcast.lane.b32.xlu0 %v1808, %s1976
          %v1978 = vpop.permute.xlu0 %1977
          %s1980 = sor.u32 256, 24
          %1981 = vbcast.lane.b32.xlu0 %v1808, %s1980
          %v1982 = vpop.permute.xlu0 %1981
          %s1984 = sor.u32 256, 16
          %1985 = vbcast.lane.b32.xlu0 %v1819, %s1984
          %v1986 = vpop.permute.xlu0 %1985
          %s1988 = sor.u32 256, 24
          %1989 = vbcast.lane.b32.xlu0 %v1819, %s1988
          %v1990 = vpop.permute.xlu0 %1989
          %s1992 = sor.u32 256, 16
          %1993 = vbcast.lane.b32.xlu0 %v1830, %s1992
          %v1994 = vpop.permute.xlu0 %1993
          %s1996 = sor.u32 256, 24
          %1997 = vbcast.lane.b32.xlu0 %v1830, %s1996
          %v1998 = vpop.permute.xlu0 %1997
          %s2000 = sor.u32 256, 16
          %2001 = vbcast.lane.b32.xlu0 %v1841, %s2000
          %v2002 = vpop.permute.xlu0 %2001
          %s2004 = sor.u32 256, 24
          %2005 = vbcast.lane.b32.xlu0 %v1841, %s2004
          %v2006 = vpop.permute.xlu0 %2005
          %s2008 = sor.u32 256, 16
          %2009 = vbcast.lane.b32.xlu0 %v1852, %s2008
          %v2010 = vpop.permute.xlu0 %2009
          %s2012 = sor.u32 256, 24
          %2013 = vbcast.lane.b32.xlu0 %v1852, %s2012
          %v2014 = vpop.permute.xlu0 %2013
          %s2016 = sor.u32 256, 16
          %2017 = vbcast.lane.b32.xlu0 %v1863, %s2016
          %v2018 = vpop.permute.xlu0 %2017
          %s2020 = sor.u32 256, 24
          %2021 = vbcast.lane.b32.xlu0 %v1863, %s2020
          %v2022 = vpop.permute.xlu0 %2021
          %v2023 = vmul.f32 %v1929, %v1962
          %v2024 = vmul.f32 %v1930, %v1966
          %v2025 = vmul.f32 %v1933, %v1970
          %v2026 = vmul.f32 %v1934, %v1974
          %v2027 = vmul.f32 %v1937, %v1978
          %v2028 = vmul.f32 %v1938, %v1982
          %v2029 = vmul.f32 %v1941, %v1986
          %v2030 = vmul.f32 %v1942, %v1990
          %v2031 = vmul.f32 %v1945, %v1994
          %v2032 = vmul.f32 %v1946, %v1998
          %v2033 = vmul.f32 %v1949, %v2002
          %v2034 = vmul.f32 %v1950, %v2006
          %v2035 = vmul.f32 %v1953, %v2010
          %v2036 = vmul.f32 %v1954, %v2014
          %v2037 = vmul.f32 %v1957, %v2018
          %v2038 = vmul.f32 %v1958, %v2022
          %v2039 = vadd.f32 %v2023, %v2024
          %v2040 = vrot.slane %v2039, 4
          %v2041 = vadd.f32 %v2039, %v2040
          %v2042 = vrot.slane %v2041, 2
          %v2043 = vadd.f32 %v2041, %v2042
          %v2044 = vrot.slane %v2043, 1
          %v2045 = vadd.f32 %v2043, %v2044
          %v2046 = vadd.f32 %v2025, %v2026
          %v2047 = vrot.slane %v2046, 4
          %v2048 = vadd.f32 %v2046, %v2047
          %v2049 = vrot.slane %v2048, 2
          %v2050 = vadd.f32 %v2048, %v2049
          %v2051 = vrot.slane %v2050, 1
          %v2052 = vadd.f32 %v2050, %v2051
          %v2053 = vadd.f32 %v2027, %v2028
          %v2054 = vrot.slane %v2053, 4
          %v2055 = vadd.f32 %v2053, %v2054
          %v2056 = vrot.slane %v2055, 2
          %v2057 = vadd.f32 %v2055, %v2056
          %v2058 = vrot.slane %v2057, 1
          %v2059 = vadd.f32 %v2057, %v2058
          %v2060 = vadd.f32 %v2029, %v2030
          %v2061 = vrot.slane %v2060, 4
          %v2062 = vadd.f32 %v2060, %v2061
          %v2063 = vrot.slane %v2062, 2
          %v2064 = vadd.f32 %v2062, %v2063
          %v2065 = vrot.slane %v2064, 1
          %v2066 = vadd.f32 %v2064, %v2065
          %v2067 = vadd.f32 %v2031, %v2032
          %v2068 = vrot.slane %v2067, 4
          %v2069 = vadd.f32 %v2067, %v2068
          %v2070 = vrot.slane %v2069, 2
          %v2071 = vadd.f32 %v2069, %v2070
          %v2072 = vrot.slane %v2071, 1
          %v2073 = vadd.f32 %v2071, %v2072
          %v2074 = vadd.f32 %v2033, %v2034
          %v2075 = vrot.slane %v2074, 4
          %v2076 = vadd.f32 %v2074, %v2075
          %v2077 = vrot.slane %v2076, 2
          %v2078 = vadd.f32 %v2076, %v2077
          %v2079 = vrot.slane %v2078, 1
          %v2080 = vadd.f32 %v2078, %v2079
          %v2081 = vadd.f32 %v2035, %v2036
          %v2082 = vrot.slane %v2081, 4
          %v2083 = vadd.f32 %v2081, %v2082
          %v2084 = vrot.slane %v2083, 2
          %v2085 = vadd.f32 %v2083, %v2084
          %v2086 = vrot.slane %v2085, 1
          %v2087 = vadd.f32 %v2085, %v2086
          %v2088 = vadd.f32 %v2037, %v2038
          %v2089 = vrot.slane %v2088, 4
          %v2090 = vadd.f32 %v2088, %v2089
          %v2091 = vrot.slane %v2090, 2
          %v2092 = vadd.f32 %v2090, %v2091
          %v2093 = vrot.slane %v2092, 1
          %v2094 = vadd.f32 %v2092, %v2093
          %vm2103 = vcmask 1041409
          %v2104 = vsel %vm2103, %v2052, %v2045
          %vm2105 = vcmask 1042434
          %v2106 = vsel %vm2105, %v2059, %v2104
          %vm2107 = vcmask 1043459
          %v2108 = vsel %vm2107, %v2066, %v2106
          %vm2109 = vcmask 1044484
          %v2110 = vsel %vm2109, %v2073, %v2108
          %vm2111 = vcmask 1045509
          %v2112 = vsel %vm2111, %v2080, %v2110
          %vm2113 = vcmask 1046534
          %v2114 = vsel %vm2113, %v2087, %v2112
          %vm2115 = vcmask 1047559
          %v2116 = vsel %vm2115, %v2094, %v2114
          %s2118 = scalar_lea.vmem [#allocation6], %s1588
          %2119 = vst [vmem:[%s2118] sm:$0xff] %v2116
        $region109: #{fuse_block_mamba_forward.3} parent=59 // loop_footer
          %s1585 = sadd.s32 1, %s1581
        $region110: #{fuse_block_mamba_forward.3} parent=59 // loop_footer_branch
          %1580 = sbr.rel target = $region106
        $region111: #{fuse_block_mamba_forward.3} parent=59 // loop_exit
          _
        loop: start=0, step=1, limit=4
        $region112: #{fuse_block_mamba_forward.3} parent=59 // loop_pre_header
          _
        $region113: #{fuse_block_mamba_forward.3} parent=59 // loop_header
          %s2121 = sphi 0, %s2125
          %p2122 = scmp.ge.s32.totalorder %s2121, 4
          %v2126 = vphi 0.0, %v2498
          %v2127 = vphi 0.0, %v2499
        $region114: #{fuse_block_mamba_forward.3} parent=59 // loop_header_branch
          %2124 = sbr.rel (%p2122) target = $region118
        $region115: #{fuse_block_mamba_forward.3} parent=59 // loop_body
          %s2128 = smul.u32 %s2121, 8
          %s2129 = sadd.s32 %s2128, 32
          %s2130 = scalar_lea.vmem [#allocation3], %s2129
          %v2131 = vld [vmem:[%s2130] sm:$0xff]
          %s2132 = scalar_lea.vmem [#allocation4], %s2129
          %v2133 = vld [vmem:[%s2132] sm:$0xff]
          %s2134 = scalar_lea.vmem [#allocation5], %s2129
          %v2135 = vld [vmem:[%s2134] sm:$0xff]
          %v2137 = vcombine.high %v2131, %v2131
          %v2139 = vunpack.c.l.s4 1966171168
          %v2140 = vunpack.c.0.s8 %v2139
          %v2141 = vlaneseq
          %v2142 = vshrl.u32 %v2141, 7
          %v2143 = vsub.s32 %v2140, %v2142
          %v2144 = vrot.slane %v2131, %v2143
          %v2146 = vunpack.c.l.s4 1966171168
          %v2147 = vunpack.c.0.s8 %v2146
          %v2148 = vlaneseq
          %v2149 = vshrl.u32 %v2148, 7
          %v2150 = vsub.s32 %v2147, %v2149
          %v2151 = vrot.slane %v2137, %v2150
          %v2152 = vcombine.high %v2144, %v2144
          %v2153 = vcombine.high %v2151, %v2151
          %v2155 = vunpack.c.l.s4 1966171168
          %v2156 = vunpack.c.0.s8 %v2155
          %v2157 = vlaneseq
          %v2158 = vshrl.u32 %v2157, 7
          %v2159 = vsub.s32 %v2156, %v2158
          %v2160 = vrot.slane %v2144, %v2159
          %v2162 = vunpack.c.l.s4 1966171168
          %v2163 = vunpack.c.0.s8 %v2162
          %v2164 = vlaneseq
          %v2165 = vshrl.u32 %v2164, 7
          %v2166 = vsub.s32 %v2163, %v2165
          %v2167 = vrot.slane %v2151, %v2166
          %v2169 = vunpack.c.l.s4 1966171168
          %v2170 = vunpack.c.0.s8 %v2169
          %v2171 = vlaneseq
          %v2172 = vshrl.u32 %v2171, 7
          %v2173 = vsub.s32 %v2170, %v2172
          %v2174 = vrot.slane %v2152, %v2173
          %v2176 = vunpack.c.l.s4 1966171168
          %v2177 = vunpack.c.0.s8 %v2176
          %v2178 = vlaneseq
          %v2179 = vshrl.u32 %v2178, 7
          %v2180 = vsub.s32 %v2177, %v2179
          %v2181 = vrot.slane %v2153, %v2180
          %v2182 = vcombine.high %v2160, %v2160
          %v2183 = vcombine.high %v2167, %v2167
          %v2184 = vcombine.high %v2174, %v2174
          %v2185 = vcombine.high %v2181, %v2181
          %v2186 = vlaneseq
          %v2187 = vshrl.u32 %v2186, 7
          %v2188 = vsub.s32 0, %v2187
          %v2189 = vrot.slane %v2160, %v2188
          %v2190 = vlaneseq
          %v2191 = vshrl.u32 %v2190, 7
          %v2192 = vsub.s32 0, %v2191
          %v2193 = vrot.slane %v2174, %v2192
          %v2194 = vlaneseq
          %v2195 = vshrl.u32 %v2194, 7
          %v2196 = vsub.s32 0, %v2195
          %v2197 = vrot.slane %v2182, %v2196
          %v2198 = vlaneseq
          %v2199 = vshrl.u32 %v2198, 7
          %v2200 = vsub.s32 0, %v2199
          %v2201 = vrot.slane %v2184, %v2200
          %v2202 = vlaneseq
          %v2203 = vshrl.u32 %v2202, 7
          %v2204 = vsub.s32 0, %v2203
          %v2205 = vrot.slane %v2167, %v2204
          %v2206 = vlaneseq
          %v2207 = vshrl.u32 %v2206, 7
          %v2208 = vsub.s32 0, %v2207
          %v2209 = vrot.slane %v2181, %v2208
          %v2210 = vlaneseq
          %v2211 = vshrl.u32 %v2210, 7
          %v2212 = vsub.s32 0, %v2211
          %v2213 = vrot.slane %v2183, %v2212
          %v2214 = vlaneseq
          %v2215 = vshrl.u32 %v2214, 7
          %v2216 = vsub.s32 0, %v2215
          %v2217 = vrot.slane %v2185, %v2216
          %v2226 = vmul.f32 %v2189, %v1578
          %v2227 = vmul.f32 %v2189, %v1579
          %v2228 = vmul.f32 %v2193, %v1578
          %v2229 = vmul.f32 %v2193, %v1579
          %v2230 = vmul.f32 %v2197, %v1578
          %v2231 = vmul.f32 %v2197, %v1579
          %v2232 = vmul.f32 %v2201, %v1578
          %v2233 = vmul.f32 %v2201, %v1579
          %v2234 = vmul.f32 %v2205, %v1578
          %v2235 = vmul.f32 %v2205, %v1579
          %v2236 = vmul.f32 %v2209, %v1578
          %v2237 = vmul.f32 %v2209, %v1579
          %v2238 = vmul.f32 %v2213, %v1578
          %v2239 = vmul.f32 %v2213, %v1579
          %v2240 = vmul.f32 %v2217, %v1578
          %v2241 = vmul.f32 %v2217, %v1579
          %v2242 = vmul.f32 %v2226, 1.442695
          %v2243 = vpow.pop %v2242
          %v2244 = vmul.f32 %v2227, 1.442695
          %v2245 = vpow.pop %v2244
          %v2246 = vmul.f32 %v2228, 1.442695
          %v2247 = vpow.pop %v2246
          %v2248 = vmul.f32 %v2229, 1.442695
          %v2249 = vpow.pop %v2248
          %v2250 = vmul.f32 %v2230, 1.442695
          %v2251 = vpow.pop %v2250
          %v2252 = vmul.f32 %v2231, 1.442695
          %v2253 = vpow.pop %v2252
          %v2254 = vmul.f32 %v2232, 1.442695
          %v2255 = vpow.pop %v2254
          %v2256 = vmul.f32 %v2233, 1.442695
          %v2257 = vpow.pop %v2256
          %v2258 = vmul.f32 %v2234, 1.442695
          %v2259 = vpow.pop %v2258
          %v2260 = vmul.f32 %v2235, 1.442695
          %v2261 = vpow.pop %v2260
          %v2262 = vmul.f32 %v2236, 1.442695
          %v2263 = vpow.pop %v2262
          %v2264 = vmul.f32 %v2237, 1.442695
          %v2265 = vpow.pop %v2264
          %v2266 = vmul.f32 %v2238, 1.442695
          %v2267 = vpow.pop %v2266
          %v2268 = vmul.f32 %v2239, 1.442695
          %v2269 = vpow.pop %v2268
          %v2270 = vmul.f32 %v2240, 1.442695
          %v2271 = vpow.pop %v2270
          %v2272 = vmul.f32 %v2241, 1.442695
          %v2273 = vpow.pop %v2272
          %v2275 = vcombine.high %v2133, %v2133
          %v2277 = vunpack.c.l.s4 1966171168
          %v2278 = vunpack.c.0.s8 %v2277
          %v2279 = vlaneseq
          %v2280 = vshrl.u32 %v2279, 7
          %v2281 = vsub.s32 %v2278, %v2280
          %v2282 = vrot.slane %v2133, %v2281
          %v2284 = vunpack.c.l.s4 1966171168
          %v2285 = vunpack.c.0.s8 %v2284
          %v2286 = vlaneseq
          %v2287 = vshrl.u32 %v2286, 7
          %v2288 = vsub.s32 %v2285, %v2287
          %v2289 = vrot.slane %v2275, %v2288
          %v2290 = vcombine.high %v2282, %v2282
          %v2291 = vcombine.high %v2289, %v2289
          %v2293 = vunpack.c.l.s4 1966171168
          %v2294 = vunpack.c.0.s8 %v2293
          %v2295 = vlaneseq
          %v2296 = vshrl.u32 %v2295, 7
          %v2297 = vsub.s32 %v2294, %v2296
          %v2298 = vrot.slane %v2282, %v2297
          %v2300 = vunpack.c.l.s4 1966171168
          %v2301 = vunpack.c.0.s8 %v2300
          %v2302 = vlaneseq
          %v2303 = vshrl.u32 %v2302, 7
          %v2304 = vsub.s32 %v2301, %v2303
          %v2305 = vrot.slane %v2289, %v2304
          %v2307 = vunpack.c.l.s4 1966171168
          %v2308 = vunpack.c.0.s8 %v2307
          %v2309 = vlaneseq
          %v2310 = vshrl.u32 %v2309, 7
          %v2311 = vsub.s32 %v2308, %v2310
          %v2312 = vrot.slane %v2290, %v2311
          %v2314 = vunpack.c.l.s4 1966171168
          %v2315 = vunpack.c.0.s8 %v2314
          %v2316 = vlaneseq
          %v2317 = vshrl.u32 %v2316, 7
          %v2318 = vsub.s32 %v2315, %v2317
          %v2319 = vrot.slane %v2291, %v2318
          %v2320 = vcombine.high %v2298, %v2298
          %v2321 = vcombine.high %v2305, %v2305
          %v2322 = vcombine.high %v2312, %v2312
          %v2323 = vcombine.high %v2319, %v2319
          %v2324 = vlaneseq
          %v2325 = vshrl.u32 %v2324, 7
          %v2326 = vsub.s32 0, %v2325
          %v2327 = vrot.slane %v2135, %v2326
          %2329 = vbcast.lane.b32.xlu0 %v2327, 256
          %v2330 = vpop.permute.xlu0 %2329
          %s2332 = sor.u32 256, 8
          %2333 = vbcast.lane.b32.xlu0 %v2327, %s2332
          %v2334 = vpop.permute.xlu0 %2333
          %v2335 = vlaneseq
          %v2336 = vshrl.u32 %v2335, 7
          %v2337 = vsub.s32 1, %v2336
          %v2338 = vrot.slane %v2135, %v2337
          %2340 = vbcast.lane.b32.xlu0 %v2338, 256
          %v2341 = vpop.permute.xlu0 %2340
          %s2343 = sor.u32 256, 8
          %2344 = vbcast.lane.b32.xlu0 %v2338, %s2343
          %v2345 = vpop.permute.xlu0 %2344
          %v2346 = vlaneseq
          %v2347 = vshrl.u32 %v2346, 7
          %v2348 = vsub.s32 2, %v2347
          %v2349 = vrot.slane %v2135, %v2348
          %2351 = vbcast.lane.b32.xlu0 %v2349, 256
          %v2352 = vpop.permute.xlu0 %2351
          %s2354 = sor.u32 256, 8
          %2355 = vbcast.lane.b32.xlu0 %v2349, %s2354
          %v2356 = vpop.permute.xlu0 %2355
          %v2357 = vlaneseq
          %v2358 = vshrl.u32 %v2357, 7
          %v2359 = vsub.s32 3, %v2358
          %v2360 = vrot.slane %v2135, %v2359
          %2362 = vbcast.lane.b32.xlu0 %v2360, 256
          %v2363 = vpop.permute.xlu0 %2362
          %s2365 = sor.u32 256, 8
          %2366 = vbcast.lane.b32.xlu0 %v2360, %s2365
          %v2367 = vpop.permute.xlu0 %2366
          %v2368 = vlaneseq
          %v2369 = vshrl.u32 %v2368, 7
          %v2370 = vsub.s32 4, %v2369
          %v2371 = vrot.slane %v2135, %v2370
          %2373 = vbcast.lane.b32.xlu0 %v2371, 256
          %v2374 = vpop.permute.xlu0 %2373
          %s2376 = sor.u32 256, 8
          %2377 = vbcast.lane.b32.xlu0 %v2371, %s2376
          %v2378 = vpop.permute.xlu0 %2377
          %v2379 = vlaneseq
          %v2380 = vshrl.u32 %v2379, 7
          %v2381 = vsub.s32 5, %v2380
          %v2382 = vrot.slane %v2135, %v2381
          %2384 = vbcast.lane.b32.xlu0 %v2382, 256
          %v2385 = vpop.permute.xlu0 %2384
          %s2387 = sor.u32 256, 8
          %2388 = vbcast.lane.b32.xlu0 %v2382, %s2387
          %v2389 = vpop.permute.xlu0 %2388
          %v2390 = vlaneseq
          %v2391 = vshrl.u32 %v2390, 7
          %v2392 = vsub.s32 6, %v2391
          %v2393 = vrot.slane %v2135, %v2392
          %2395 = vbcast.lane.b32.xlu0 %v2393, 256
          %v2396 = vpop.permute.xlu0 %2395
          %s2398 = sor.u32 256, 8
          %2399 = vbcast.lane.b32.xlu0 %v2393, %s2398
          %v2400 = vpop.permute.xlu0 %2399
          %v2401 = vlaneseq
          %v2402 = vshrl.u32 %v2401, 7
          %v2403 = vsub.s32 7, %v2402
          %v2404 = vrot.slane %v2135, %v2403
          %2406 = vbcast.lane.b32.xlu0 %v2404, 256
          %v2407 = vpop.permute.xlu0 %2406
          %s2409 = sor.u32 256, 8
          %2410 = vbcast.lane.b32.xlu0 %v2404, %s2409
          %v2411 = vpop.permute.xlu0 %2410
          %v2412 = vlaneseq
          %v2413 = vshrl.u32 %v2412, 7
          %v2414 = vsub.s32 0, %v2413
          %v2415 = vrot.slane %v2298, %v2414
          %v2416 = vlaneseq
          %v2417 = vshrl.u32 %v2416, 7
          %v2418 = vsub.s32 0, %v2417
          %v2419 = vrot.slane %v2312, %v2418
          %v2420 = vlaneseq
          %v2421 = vshrl.u32 %v2420, 7
          %v2422 = vsub.s32 0, %v2421
          %v2423 = vrot.slane %v2320, %v2422
          %v2424 = vlaneseq
          %v2425 = vshrl.u32 %v2424, 7
          %v2426 = vsub.s32 0, %v2425
          %v2427 = vrot.slane %v2322, %v2426
          %v2428 = vlaneseq
          %v2429 = vshrl.u32 %v2428, 7
          %v2430 = vsub.s32 0, %v2429
          %v2431 = vrot.slane %v2305, %v2430
          %v2432 = vlaneseq
          %v2433 = vshrl.u32 %v2432, 7
          %v2434 = vsub.s32 0, %v2433
          %v2435 = vrot.slane %v2319, %v2434
          %v2436 = vlaneseq
          %v2437 = vshrl.u32 %v2436, 7
          %v2438 = vsub.s32 0, %v2437
          %v2439 = vrot.slane %v2321, %v2438
          %v2440 = vlaneseq
          %v2441 = vshrl.u32 %v2440, 7
          %v2442 = vsub.s32 0, %v2441
          %v2443 = vrot.slane %v2323, %v2442
          %v2452 = vmul.f32 %v2415, %v2330
          %v2453 = vmul.f32 %v2415, %v2334
          %v2454 = vmul.f32 %v2419, %v2341
          %v2455 = vmul.f32 %v2419, %v2345
          %v2456 = vmul.f32 %v2423, %v2352
          %v2457 = vmul.f32 %v2423, %v2356
          %v2458 = vmul.f32 %v2427, %v2363
          %v2459 = vmul.f32 %v2427, %v2367
          %v2460 = vmul.f32 %v2431, %v2374
          %v2461 = vmul.f32 %v2431, %v2378
          %v2462 = vmul.f32 %v2435, %v2385
          %v2463 = vmul.f32 %v2435, %v2389
          %v2464 = vmul.f32 %v2439, %v2396
          %v2465 = vmul.f32 %v2439, %v2400
          %v2466 = vmul.f32 %v2443, %v2407
          %v2467 = vmul.f32 %v2443, %v2411
          %v2468 = vmul.f32 %v2243, %v2126
          %v2469 = vmul.f32 %v2245, %v2127
          %v2470 = vadd.f32 %v2468, %v2452
          %v2471 = vadd.f32 %v2469, %v2453
          %v2472 = vmul.f32 %v2247, %v2470
          %v2473 = vmul.f32 %v2249, %v2471
          %v2474 = vadd.f32 %v2472, %v2454
          %v2475 = vadd.f32 %v2473, %v2455
          %v2476 = vmul.f32 %v2251, %v2474
          %v2477 = vmul.f32 %v2253, %v2475
          %v2478 = vadd.f32 %v2476, %v2456
          %v2479 = vadd.f32 %v2477, %v2457
          %v2480 = vmul.f32 %v2255, %v2478
          %v2481 = vmul.f32 %v2257, %v2479
          %v2482 = vadd.f32 %v2480, %v2458
          %v2483 = vadd.f32 %v2481, %v2459
          %v2484 = vmul.f32 %v2259, %v2482
          %v2485 = vmul.f32 %v2261, %v2483
          %v2486 = vadd.f32 %v2484, %v2460
          %v2487 = vadd.f32 %v2485, %v2461
          %v2488 = vmul.f32 %v2263, %v2486
          %v2489 = vmul.f32 %v2265, %v2487
          %v2490 = vadd.f32 %v2488, %v2462
          %v2491 = vadd.f32 %v2489, %v2463
          %v2492 = vmul.f32 %v2267, %v2490
          %v2493 = vmul.f32 %v2269, %v2491
          %v2494 = vadd.f32 %v2492, %v2464
          %v2495 = vadd.f32 %v2493, %v2465
          %v2496 = vmul.f32 %v2271, %v2494
          %v2497 = vmul.f32 %v2273, %v2495
          %v2498 = vadd.f32 %v2496, %v2466
          %v2499 = vadd.f32 %v2497, %v2467
          %s2501 = sor.u32 256, 16
          %2502 = vbcast.lane.b32.xlu0 %v2327, %s2501
          %v2503 = vpop.permute.xlu0 %2502
          %s2505 = sor.u32 256, 24
          %2506 = vbcast.lane.b32.xlu0 %v2327, %s2505
          %v2507 = vpop.permute.xlu0 %2506
          %s2509 = sor.u32 256, 16
          %2510 = vbcast.lane.b32.xlu0 %v2338, %s2509
          %v2511 = vpop.permute.xlu0 %2510
          %s2513 = sor.u32 256, 24
          %2514 = vbcast.lane.b32.xlu0 %v2338, %s2513
          %v2515 = vpop.permute.xlu0 %2514
          %s2517 = sor.u32 256, 16
          %2518 = vbcast.lane.b32.xlu0 %v2349, %s2517
          %v2519 = vpop.permute.xlu0 %2518
          %s2521 = sor.u32 256, 24
          %2522 = vbcast.lane.b32.xlu0 %v2349, %s2521
          %v2523 = vpop.permute.xlu0 %2522
          %s2525 = sor.u32 256, 16
          %2526 = vbcast.lane.b32.xlu0 %v2360, %s2525
          %v2527 = vpop.permute.xlu0 %2526
          %s2529 = sor.u32 256, 24
          %2530 = vbcast.lane.b32.xlu0 %v2360, %s2529
          %v2531 = vpop.permute.xlu0 %2530
          %s2533 = sor.u32 256, 16
          %2534 = vbcast.lane.b32.xlu0 %v2371, %s2533
          %v2535 = vpop.permute.xlu0 %2534
          %s2537 = sor.u32 256, 24
          %2538 = vbcast.lane.b32.xlu0 %v2371, %s2537
          %v2539 = vpop.permute.xlu0 %2538
          %s2541 = sor.u32 256, 16
          %2542 = vbcast.lane.b32.xlu0 %v2382, %s2541
          %v2543 = vpop.permute.xlu0 %2542
          %s2545 = sor.u32 256, 24
          %2546 = vbcast.lane.b32.xlu0 %v2382, %s2545
          %v2547 = vpop.permute.xlu0 %2546
          %s2549 = sor.u32 256, 16
          %2550 = vbcast.lane.b32.xlu0 %v2393, %s2549
          %v2551 = vpop.permute.xlu0 %2550
          %s2553 = sor.u32 256, 24
          %2554 = vbcast.lane.b32.xlu0 %v2393, %s2553
          %v2555 = vpop.permute.xlu0 %2554
          %s2557 = sor.u32 256, 16
          %2558 = vbcast.lane.b32.xlu0 %v2404, %s2557
          %v2559 = vpop.permute.xlu0 %2558
          %s2561 = sor.u32 256, 24
          %2562 = vbcast.lane.b32.xlu0 %v2404, %s2561
          %v2563 = vpop.permute.xlu0 %2562
          %v2564 = vmul.f32 %v2470, %v2503
          %v2565 = vmul.f32 %v2471, %v2507
          %v2566 = vmul.f32 %v2474, %v2511
          %v2567 = vmul.f32 %v2475, %v2515
          %v2568 = vmul.f32 %v2478, %v2519
          %v2569 = vmul.f32 %v2479, %v2523
          %v2570 = vmul.f32 %v2482, %v2527
          %v2571 = vmul.f32 %v2483, %v2531
          %v2572 = vmul.f32 %v2486, %v2535
          %v2573 = vmul.f32 %v2487, %v2539
          %v2574 = vmul.f32 %v2490, %v2543
          %v2575 = vmul.f32 %v2491, %v2547
          %v2576 = vmul.f32 %v2494, %v2551
          %v2577 = vmul.f32 %v2495, %v2555
          %v2578 = vmul.f32 %v2498, %v2559
          %v2579 = vmul.f32 %v2499, %v2563
          %v2580 = vadd.f32 %v2564, %v2565
          %v2581 = vrot.slane %v2580, 4
          %v2582 = vadd.f32 %v2580, %v2581
          %v2583 = vrot.slane %v2582, 2
          %v2584 = vadd.f32 %v2582, %v2583
          %v2585 = vrot.slane %v2584, 1
          %v2586 = vadd.f32 %v2584, %v2585
          %v2587 = vadd.f32 %v2566, %v2567
          %v2588 = vrot.slane %v2587, 4
          %v2589 = vadd.f32 %v2587, %v2588
          %v2590 = vrot.slane %v2589, 2
          %v2591 = vadd.f32 %v2589, %v2590
          %v2592 = vrot.slane %v2591, 1
          %v2593 = vadd.f32 %v2591, %v2592
          %v2594 = vadd.f32 %v2568, %v2569
          %v2595 = vrot.slane %v2594, 4
          %v2596 = vadd.f32 %v2594, %v2595
          %v2597 = vrot.slane %v2596, 2
          %v2598 = vadd.f32 %v2596, %v2597
          %v2599 = vrot.slane %v2598, 1
          %v2600 = vadd.f32 %v2598, %v2599
          %v2601 = vadd.f32 %v2570, %v2571
          %v2602 = vrot.slane %v2601, 4
          %v2603 = vadd.f32 %v2601, %v2602
          %v2604 = vrot.slane %v2603, 2
          %v2605 = vadd.f32 %v2603, %v2604
          %v2606 = vrot.slane %v2605, 1
          %v2607 = vadd.f32 %v2605, %v2606
          %v2608 = vadd.f32 %v2572, %v2573
          %v2609 = vrot.slane %v2608, 4
          %v2610 = vadd.f32 %v2608, %v2609
          %v2611 = vrot.slane %v2610, 2
          %v2612 = vadd.f32 %v2610, %v2611
          %v2613 = vrot.slane %v2612, 1
          %v2614 = vadd.f32 %v2612, %v2613
          %v2615 = vadd.f32 %v2574, %v2575
          %v2616 = vrot.slane %v2615, 4
          %v2617 = vadd.f32 %v2615, %v2616
          %v2618 = vrot.slane %v2617, 2
          %v2619 = vadd.f32 %v2617, %v2618
          %v2620 = vrot.slane %v2619, 1
          %v2621 = vadd.f32 %v2619, %v2620
          %v2622 = vadd.f32 %v2576, %v2577
          %v2623 = vrot.slane %v2622, 4
          %v2624 = vadd.f32 %v2622, %v2623
          %v2625 = vrot.slane %v2624, 2
          %v2626 = vadd.f32 %v2624, %v2625
          %v2627 = vrot.slane %v2626, 1
          %v2628 = vadd.f32 %v2626, %v2627
          %v2629 = vadd.f32 %v2578, %v2579
          %v2630 = vrot.slane %v2629, 4
          %v2631 = vadd.f32 %v2629, %v2630
          %v2632 = vrot.slane %v2631, 2
          %v2633 = vadd.f32 %v2631, %v2632
          %v2634 = vrot.slane %v2633, 1
          %v2635 = vadd.f32 %v2633, %v2634
          %vm2644 = vcmask 1041409
          %v2645 = vsel %vm2644, %v2593, %v2586
          %vm2646 = vcmask 1042434
          %v2647 = vsel %vm2646, %v2600, %v2645
          %vm2648 = vcmask 1043459
          %v2649 = vsel %vm2648, %v2607, %v2647
          %vm2650 = vcmask 1044484
          %v2651 = vsel %vm2650, %v2614, %v2649
          %vm2652 = vcmask 1045509
          %v2653 = vsel %vm2652, %v2621, %v2651
          %vm2654 = vcmask 1046534
          %v2655 = vsel %vm2654, %v2628, %v2653
          %vm2656 = vcmask 1047559
          %v2657 = vsel %vm2656, %v2635, %v2655
          %s2659 = scalar_lea.vmem [#allocation6], %s2129
          %2660 = vst [vmem:[%s2659] sm:$0xff] %v2657
        $region116: #{fuse_block_mamba_forward.3} parent=59 // loop_footer
          %s2125 = sadd.s32 1, %s2121
        $region117: #{fuse_block_mamba_forward.3} parent=59 // loop_footer_branch
          %2120 = sbr.rel target = $region113
        $region118: #{fuse_block_mamba_forward.3} parent=59 // loop_exit
          _
        %v2661 = vld [vmem:[#allocation6] sm:$0xff]
        %v2662 = vld [vmem:[#allocation6 + $0x8] sm:$0xff]
        %v2663 = vld [vmem:[#allocation6 + $0x10] sm:$0xff]
        %v2664 = vld [vmem:[#allocation6 + $0x18] sm:$0xff]
        %v2665 = vld [vmem:[#allocation6 + $0x20] sm:$0xff]
        %v2666 = vld [vmem:[#allocation6 + $0x28] sm:$0xff]
        %v2667 = vld [vmem:[#allocation6 + $0x30] sm:$0xff]
        %v2668 = vld [vmem:[#allocation6 + $0x38] sm:$0xff]
        %v2669 = vld [vmem:[%s610] sm:$0x1]
        %v2671 = vlaneseq
        %v2672 = vshrl.u32 %v2671, 7
        %v2673 = vsub.s32 0, %v2672
        %v2674 = vrot.slane %v2669, %v2673
        %v2676 = vmul.f32 %v2674, %v1270
        %v2677 = vmul.f32 %v2674, %v1272
        %v2678 = vmul.f32 %v2674, %v1274
        %v2679 = vmul.f32 %v2674, %v1276
        %v2680 = vmul.f32 %v2674, %v1278
        %v2681 = vmul.f32 %v2674, %v1280
        %v2682 = vmul.f32 %v2674, %v1282
        %v2683 = vmul.f32 %v2674, %v1284
        %v2684 = vadd.f32 %v2661, %v2676
        %v2685 = vadd.f32 %v2662, %v2677
        %v2686 = vadd.f32 %v2663, %v2678
        %v2687 = vadd.f32 %v2664, %v2679
        %v2688 = vadd.f32 %v2665, %v2680
        %v2689 = vadd.f32 %v2666, %v2681
        %v2690 = vadd.f32 %v2667, %v2682
        %v2691 = vadd.f32 %v2668, %v2683
        %v2692 = vsub.f32 0.0, %v901
        %v2693 = vsub.f32 0.0, %v905
        %v2694 = vsub.f32 0.0, %v911
        %v2695 = vsub.f32 0.0, %v915
        %v2696 = vsub.f32 0.0, %v921
        %v2697 = vsub.f32 0.0, %v925
        %v2698 = vsub.f32 0.0, %v931
        %v2699 = vsub.f32 0.0, %v935
        %v2700 = vmul.f32 %v2692, 1.442695
        %v2701 = vpow.pop %v2700
        %v2702 = vmul.f32 %v2693, 1.442695
        %v2703 = vpow.pop %v2702
        %v2704 = vmul.f32 %v2694, 1.442695
        %v2705 = vpow.pop %v2704
        %v2706 = vmul.f32 %v2695, 1.442695
        %v2707 = vpow.pop %v2706
        %v2708 = vmul.f32 %v2696, 1.442695
        %v2709 = vpow.pop %v2708
        %v2710 = vmul.f32 %v2697, 1.442695
        %v2711 = vpow.pop %v2710
        %v2712 = vmul.f32 %v2698, 1.442695
        %v2713 = vpow.pop %v2712
        %v2714 = vmul.f32 %v2699, 1.442695
        %v2715 = vpow.pop %v2714
        %v2716 = vadd.f32 %v2701, 1.0
        %v2717 = vadd.f32 %v2703, 1.0
        %v2718 = vadd.f32 %v2705, 1.0
        %v2719 = vadd.f32 %v2707, 1.0
        %v2720 = vadd.f32 %v2709, 1.0
        %v2721 = vadd.f32 %v2711, 1.0
        %v2722 = vadd.f32 %v2713, 1.0
        %v2723 = vadd.f32 %v2715, 1.0
        %v2724 = vrcp.pop %v2716
        %v2725 = vmul.f32 %v901, %v2724
        %v2726 = vrcp.pop %v2717
        %v2727 = vmul.f32 %v905, %v2726
        %v2728 = vrcp.pop %v2718
        %v2729 = vmul.f32 %v911, %v2728
        %v2730 = vrcp.pop %v2719
        %v2731 = vmul.f32 %v915, %v2730
        %v2732 = vrcp.pop %v2720
        %v2733 = vmul.f32 %v921, %v2732
        %v2734 = vrcp.pop %v2721
        %v2735 = vmul.f32 %v925, %v2734
        %v2736 = vrcp.pop %v2722
        %v2737 = vmul.f32 %v931, %v2736
        %v2738 = vrcp.pop %v2723
        %v2739 = vmul.f32 %v935, %v2738
        %v2740 = vmul.f32 %v2684, %v2725
        %v2741 = vmul.f32 %v2685, %v2727
        %v2742 = vmul.f32 %v2686, %v2729
        %v2743 = vmul.f32 %v2687, %v2731
        %v2744 = vmul.f32 %v2688, %v2733
        %v2745 = vmul.f32 %v2689, %v2735
        %v2746 = vmul.f32 %v2690, %v2737
        %v2747 = vmul.f32 %v2691, %v2739
        %v2748 = vpack.c.bf16 %v2741, %v2740
        %v2749 = vpack.c.bf16 %v2743, %v2742
        %v2750 = vpack.c.bf16 %v2745, %v2744
        %v2751 = vpack.c.bf16 %v2747, %v2746
        %v2752 = vld [vmem:[%s619] sm:$0xf]
        %v2753 = vld [vmem:[%s619 + $0x4] sm:$0xf]
        %v2754 = vld [vmem:[%s619 + $0x8] sm:$0xf]
        %v2755 = vld [vmem:[%s619 + $0xc] sm:$0xf]
        %v2756 = vld [vmem:[%s619 + $0x10] sm:$0xf]
        %v2757 = vld [vmem:[%s619 + $0x14] sm:$0xf]
        %v2758 = vld [vmem:[%s619 + $0x18] sm:$0xf]
        %v2759 = vld [vmem:[%s619 + $0x1c] sm:$0xf]
        %v2760 = vld [vmem:[%s619 + $0x20] sm:$0xf]
        %v2761 = vld [vmem:[%s619 + $0x24] sm:$0xf]
        %v2762 = vld [vmem:[%s619 + $0x28] sm:$0xf]
        %v2763 = vld [vmem:[%s619 + $0x2c] sm:$0xf]
        %v2764 = vld [vmem:[%s619 + $0x30] sm:$0xf]
        %v2765 = vld [vmem:[%s619 + $0x34] sm:$0xf]
        %v2766 = vld [vmem:[%s619 + $0x38] sm:$0xf]
        %v2767 = vld [vmem:[%s619 + $0x3c] sm:$0xf]
        %v2784 = vunpack.c.l.b16 %v2752
        %v2785 = vunpack.c.l.b16 %v2753
        %v2786 = vunpack.c.l.b16 %v2754
        %v2787 = vunpack.c.l.b16 %v2755
        %v2788 = vunpack.c.l.b16 %v2756
        %v2789 = vunpack.c.l.b16 %v2757
        %v2790 = vunpack.c.l.b16 %v2758
        %v2791 = vunpack.c.l.b16 %v2759
        %v2792 = vunpack.c.l.b16 %v2760
        %v2793 = vunpack.c.l.b16 %v2761
        %v2794 = vunpack.c.l.b16 %v2762
        %v2795 = vunpack.c.l.b16 %v2763
        %v2796 = vunpack.c.l.b16 %v2764
        %v2797 = vunpack.c.l.b16 %v2765
        %v2798 = vunpack.c.l.b16 %v2766
        %v2799 = vunpack.c.l.b16 %v2767
        %v2800 = vpack.c.b16 %v2785, %v2784
        %v2801 = vpack.c.b16 %v2787, %v2786
        %v2802 = vpack.c.b16 %v2789, %v2788
        %v2803 = vpack.c.b16 %v2791, %v2790
        %v2804 = vpack.c.b16 %v2793, %v2792
        %v2805 = vpack.c.b16 %v2795, %v2794
        %v2806 = vpack.c.b16 %v2797, %v2796
        %v2807 = vpack.c.b16 %v2799, %v2798
        %2816 = vmatprep.subr.bf16.mxu0 0
        %2817 = vmatpush1.bf16.msra.mxu0 %v2800
        %2818 = vmatprep.subr.bf16.mxu0 0
        %2819 = vmatpush1.bf16.msra.mxu0 %v2801
        %2820 = vmatprep.subr.bf16.mxu0 0
        %2821 = vmatpush1.bf16.msra.mxu0 %v2802
        %2822 = vmatprep.subr.bf16.mxu0 0
        %2823 = vmatpush1.bf16.msra.mxu0 %v2803
        %2824 = vmatprep.subr.bf16.mxu0 0
        %2825 = vmatpush1.bf16.msra.mxu0 %v2804
        %2826 = vmatprep.subr.bf16.mxu0 0
        %2827 = vmatpush1.bf16.msra.mxu0 %v2805
        %2828 = vmatprep.subr.bf16.mxu0 0
        %2829 = vmatpush1.bf16.msra.mxu0 %v2806
        %2830 = vmatprep.subr.bf16.mxu0 0
        %2831 = vmatpush1.bf16.msra.mxu0 %v2807
        %2832 = vmatprep.subr.bf16.mxu0 0
        %2833 = vmatpush1.bf16.msra.mxu0 0
        %2834 = vmatprep.subr.bf16.mxu0 0
        %2835 = vmatpush1.bf16.msra.mxu0 0
        %2836 = vmatprep.subr.bf16.mxu0 0
        %2837 = vmatpush1.bf16.msra.mxu0 0
        %2838 = vmatprep.subr.bf16.mxu0 0
        %2839 = vmatpush1.bf16.msra.mxu0 0
        %2840 = vmatprep.subr.bf16.mxu0 0
        %2841 = vmatpush1.bf16.msra.mxu0 0
        %2842 = vmatprep.subr.bf16.mxu0 0
        %2843 = vmatpush1.bf16.msra.mxu0 0
        %2844 = vmatprep.subr.bf16.mxu0 0
        %2845 = vmatpush1.bf16.msra.mxu0 0
        %2846 = vmatprep.subr.bf16.mxu0 0
        %2847 = vmatpush1.bf16.msra.mxu0 0
        %2848 = vmatprep.mubr.bf16.mxu0 0
        %2849 = vmatmul.mubr.bf16.gmra.mrb[0].mxu0 %v2748
        %v2850 = vpop.f32.mrb[0].mxu0
        %v2851 = vadd.f32 0.0, %v2850
        %v2852 = vpop.f32.mrb[0].mxu0
        %v2853 = vpop.f32.mrb[0].mxu0
        %v2854 = vadd.f32 0.0, %v2853
        %v2855 = vpop.f32.mrb[0].mxu0
        %2856 = vmatprep.mubr.bf16.mxu0 0
        %2857 = vmatmul.mubr.bf16.gmra.mrb[0].mxu0 %v2749
        %v2858 = vpop.f32.mrb[0].mxu0
        %v2859 = vadd.f32 0.0, %v2858
        %v2860 = vpop.f32.mrb[0].mxu0
        %v2861 = vpop.f32.mrb[0].mxu0
        %v2862 = vadd.f32 0.0, %v2861
        %v2863 = vpop.f32.mrb[0].mxu0
        %2864 = vmatprep.mubr.bf16.mxu0 0
        %2865 = vmatmul.mubr.bf16.gmra.mrb[0].mxu0 %v2750
        %v2866 = vpop.f32.mrb[0].mxu0
        %v2867 = vadd.f32 0.0, %v2866
        %v2868 = vpop.f32.mrb[0].mxu0
        %v2869 = vpop.f32.mrb[0].mxu0
        %v2870 = vadd.f32 0.0, %v2869
        %v2871 = vpop.f32.mrb[0].mxu0
        %2872 = vmatprep.mubr.bf16.mxu0 0
        %2873 = vmatmul.mubr.bf16.gmra.mrb[0].mxu0 %v2751
        %v2874 = vpop.f32.mrb[0].mxu0
        %v2875 = vadd.f32 0.0, %v2874
        %v2876 = vpop.f32.mrb[0].mxu0
        %v2877 = vpop.f32.mrb[0].mxu0
        %v2878 = vadd.f32 0.0, %v2877
        %v2879 = vpop.f32.mrb[0].mxu0
        %2880 = vdwg.mxu0
        %v2881 = vld [vmem:[#allocation2] sm:$0xff]
        %v2882 = vld [vmem:[#allocation2 + $0x8] sm:$0xff]
        %v2883 = vld [vmem:[#allocation2 + $0x10] sm:$0xff]
        %v2884 = vld [vmem:[#allocation2 + $0x18] sm:$0xff]
        %v2885 = vld [vmem:[#allocation2 + $0x20] sm:$0xff]
        %v2886 = vld [vmem:[#allocation2 + $0x28] sm:$0xff]
        %v2887 = vld [vmem:[#allocation2 + $0x30] sm:$0xff]
        %v2888 = vld [vmem:[#allocation2 + $0x38] sm:$0xff]
        %v2889 = vadd.f32 %v2881, %v2851
        %v2890 = vadd.f32 %v2882, %v2854
        %v2891 = vadd.f32 %v2883, %v2859
        %v2892 = vadd.f32 %v2884, %v2862
        %v2893 = vadd.f32 %v2885, %v2867
        %v2894 = vadd.f32 %v2886, %v2870
        %v2895 = vadd.f32 %v2887, %v2875
        %v2896 = vadd.f32 %v2888, %v2878
        %2897 = vst.msk [vmem:[#allocation2] sm:$0xff] %vm727, %v2889
        %2898 = vst.msk [vmem:[#allocation2 + $0x8] sm:$0xff] %vm727, %v2890
        %2899 = vst.msk [vmem:[#allocation2 + $0x10] sm:$0xff] %vm727, %v2891
        %2900 = vst.msk [vmem:[#allocation2 + $0x18] sm:$0xff] %vm727, %v2892
        %2901 = vst.msk [vmem:[#allocation2 + $0x20] sm:$0xff] %vm727, %v2893
        %2902 = vst.msk [vmem:[#allocation2 + $0x28] sm:$0xff] %vm727, %v2894
        %2903 = vst.msk [vmem:[#allocation2 + $0x30] sm:$0xff] %vm727, %v2895
        %2904 = vst.msk [vmem:[#allocation2 + $0x38] sm:$0xff] %vm727, %v2896
        %p2905 = scmp.eq.s32.totalorder %s43, 1
        // Predicated region
        $region119: #{fuse_block_mamba_forward.3} parent=59 // pred_check
          %p2906 = pneg %p2905
        $region120: #{fuse_block_mamba_forward.3} parent=59 // pred_check_branch
          %2908 = sbr.rel (%p2906) target = $region122
        $region121: #{fuse_block_mamba_forward.3} parent=59 // pred_region
          %v2909 = vld [vmem:[#allocation2] sm:$0xff]
          %v2910 = vld [vmem:[#allocation2 + $0x8] sm:$0xff]
          %v2911 = vld [vmem:[#allocation2 + $0x10] sm:$0xff]
          %v2912 = vld [vmem:[#allocation2 + $0x18] sm:$0xff]
          %v2913 = vld [vmem:[#allocation2 + $0x20] sm:$0xff]
          %v2914 = vld [vmem:[#allocation2 + $0x28] sm:$0xff]
          %v2915 = vld [vmem:[#allocation2 + $0x30] sm:$0xff]
          %v2916 = vld [vmem:[#allocation2 + $0x38] sm:$0xff]
          %2917 = vst.msk [vmem:[#allocation24] sm:$0xff] %vm727, %v2909
          %2918 = vst.msk [vmem:[#allocation24 + $0x8] sm:$0xff] %vm727, %v2910
          %2919 = vst.msk [vmem:[#allocation24 + $0x10] sm:$0xff] %vm727, %v2911
          %2920 = vst.msk [vmem:[#allocation24 + $0x18] sm:$0xff] %vm727, %v2912
          %2921 = vst.msk [vmem:[#allocation24 + $0x20] sm:$0xff] %vm727, %v2913
          %2922 = vst.msk [vmem:[#allocation24 + $0x28] sm:$0xff] %vm727, %v2914
          %2923 = vst.msk [vmem:[#allocation24 + $0x30] sm:$0xff] %vm727, %v2915
          %2924 = vst.msk [vmem:[#allocation24 + $0x38] sm:$0xff] %vm727, %v2916
        $region122: #{fuse_block_mamba_forward.3} parent=59 // pred_fallthru
          _
        // Predicated region
        $region123: #{fuse_block_mamba_forward.3} parent=59 // pred_check
          %p2925 = pneg %p328
        $region124: #{fuse_block_mamba_forward.3} parent=59 // pred_check_branch
          %2927 = sbr.rel (%p2925) target = $region126
        $region125: #{fuse_block_mamba_forward.3} parent=59 // pred_region
          %s2928 = smul.u32 8, %s42
          %s2930 = ssub.s32 1024, 1024
          %2931 = vsyncadd [#allocation9], %s2930
          %s2932 = smul.addr %s2928, 128
          %s2933 = scalar_lea.hbm %s10, %s2932
          %s2934 = sshll.u32 [#allocation24], 4
          %s2935 = int_to_ptr.vmem [resolvable:$true] %s2934
          %2940 = dma.vmem_to_hbm [thread:$0]  %s2935, 1024, %s2933, [#allocation9], 128, 128, 8
        $region126: #{fuse_block_mamba_forward.3} parent=59 // pred_fallthru
          _
        // Predicated region
        $region127: #{fuse_block_mamba_forward.3} parent=59 // pred_check
          %p2941 = pneg %p328
        $region128: #{fuse_block_mamba_forward.3} parent=59 // pred_check_branch
          %2943 = sbr.rel (%p2941) target = $region130
        $region129: #{fuse_block_mamba_forward.3} parent=59 // pred_region
          %2944 = dma.done [#allocation9], 1024
        $region130: #{fuse_block_mamba_forward.3} parent=59 // pred_fallthru
          _
      $region60: #{fuse_block_mamba_forward.3} parent=5 // pred_fallthru
        _
      %p2945 = scmp.le.s32.totalorder 2, %s33
      // Predicated region
      $region131: #{fuse_block_mamba_forward.3} parent=5 // pred_check
        %p2946 = pneg %p2945
      $region132: #{fuse_block_mamba_forward.3} parent=5 // pred_check_branch
        %2948 = sbr.rel (%p2946) target = $region134
      $region133: #{fuse_block_mamba_forward.3} parent=5 // pred_region
        %s2949 = ssub.s32 %s33, 2
      $region134: #{fuse_block_mamba_forward.3} parent=5 // pred_fallthru
        _
    $region6: #{fuse_block_mamba_forward.3} parent=1 // loop_footer
      %s37 = sadd.s32 1, %s33
    $region7: #{fuse_block_mamba_forward.3} parent=1 // loop_footer_branch
      %32 = sbr.rel target = $region3
    $region8: #{fuse_block_mamba_forward.3} parent=1 // loop_exit
      _
    %2950 = vsyncpa [#allocation8], 1
    %s2951 = scalar_lea.sflag [#allocation8], 1
    %2952 = vsyncpa %s2951, 1
    %2953 = vsyncpa [#allocation11], 1
    %s2954 = scalar_lea.sflag [#allocation11], 1
    %2955 = vsyncpa %s2954, 1
    %2956 = vsyncpa [#allocation14], 1
    %s2957 = scalar_lea.sflag [#allocation14], 1
    %2958 = vsyncpa %s2957, 1
    %2959 = vsyncpa [#allocation17], 1
    %s2960 = scalar_lea.sflag [#allocation17], 1
    %2961 = vsyncpa %s2960, 1
    %2962 = vsyncpa [#allocation20], 1
    %s2963 = scalar_lea.sflag [#allocation20], 1
    %2964 = vsyncpa %s2963, 1
    %2965 = vsyncpa [#allocation23], 1
    %s2966 = scalar_lea.sflag [#allocation23], 1
    %2967 = vsyncpa %s2966, 1
    %2968 = vsyncpa [#allocation9], 1
    %s2969 = scalar_lea.sflag [#allocation9], 1
    %2970 = vsyncpa %s2969, 1

</llo_original>
